<compile_context>
chip_gen: v7x
topology: tpu7x:2x2x1
jax: 0.10.0
libtpu: 0.0.40
codegen_flags: <defaults>
</compile_context>

<pallas_src>
import jax
import jax.numpy as jnp
from jax import lax
from jax.experimental import pallas as pl
from jax.experimental.pallas import tpu as pltpu


def _round_up(x, m):
    return ((x + m - 1) // m) * m


def _vmem_capacity_bytes():
    try:
        return int(pltpu.get_tpu_info().vmem_capacity_bytes)
    except Exception:
        return 64 * 1024 * 1024  # conservative fallback (v7x per-TensorCore)


def _choose_tb(B, T, E_pad, H_pad, c_size, vmem_cap):
    """Largest batch tile keeping pipelined blocks + scratch inside VMEM."""
    # leave ~45% for weights, outputs, f32 projection intermediates and
    # compiler-internal scratch
    budget = int(vmem_cap * 0.55)
    per_bt = (2 * E_pad * c_size        # emb block (double-buffered)
              + 6 * H_pad * c_size      # gi_f + gi_b scratch (3H each)
              + 1 * H_pad * c_size      # fwd per-step outputs
              + 3 * H_pad * 4)          # f32 projection intermediate headroom
    tb = budget // max(T * per_bt, 1)
    tb = int(max(8, min(256, (tb // 8) * 8)))
    b8 = _round_up(B, 8)
    tb = min(tb, b8)
    # keep >= 2 tiles when the batch allows it so ("parallel",) can shard the
    # grid across the two TensorCores of a v7x chip
    if tb >= b8 and b8 >= 16:
        tb = _round_up(b8 // 2, 8)
    return tb


def _make_kernel(T, TB, E, H, F, O, cdtype):
    H3 = 3 * H
    unroll = True if T <= 16 else 4        # partial unroll for long sequences
    f32 = jnp.float32

    def kernel(emb_ref, lens_ref, inv_len_ref, feat_ref,
               wih_f_ref, whh_f_ref, bih_f_ref, bhhn_f_ref,
               wih_b_ref, whh_b_ref, bih_b_ref, bhhn_b_ref,
               wlin_ref, blin_ref,
               out_ref,
               gi_f_ref, gi_b_ref, fwd_out_ref, sum_ref, max_ref):
        # ---- hoisted input projections: 2 big MXU matmuls instead of 2T tiny
        emb_flat = emb_ref[...].reshape(T * TB, E)
        gi_f_ref[...] = (
            jnp.dot(emb_flat, wih_f_ref[...], preferred_element_type=f32)
            + bih_f_ref[...]).astype(cdtype).reshape(T, TB, H3)
        gi_b_ref[...] = (
            jnp.dot(emb_flat, wih_b_ref[...], preferred_element_type=f32)
            + bih_b_ref[...]).astype(cdtype).reshape(T, TB, H3)

        whh_f = whh_f_ref[...]
        whh_b = whh_b_ref[...]
        # hoisted broadcasts (JAX does not CSE broadcast_in_dim inside loops)
        bhhn_f = jnp.broadcast_to(bhhn_f_ref[...], (TB, H))
        bhhn_b = jnp.broadcast_to(bhhn_b_ref[...], (TB, H))
        lens = lens_ref[...]                                # (TB, 1) int32

        def gru_step(h, gi_c, whh, bhhn):
            # PyTorch GRU cell, gate order (r, z, n). bias_ih and bias_hh[r,z]
            # are folded into gi; bias_hh[n] stays separate (multiplied by r).
            gh = jnp.dot(h.astype(cdtype), whh, preferred_element_type=f32)
            gi = gi_c.astype(f32)
            rz = jax.nn.sigmoid(gi[:, 0:2 * H] + gh[:, 0:2 * H])  # one EUP stream
            r = rz[:, 0:H]
            z = rz[:, H:2 * H]
            n = jnp.tanh(gi[:, 2 * H:H3] + r * (gh[:, 2 * H:H3] + bhhn))
            return n + z * (h - n)              # == (1 - z) * n + z * h

        zeros = jnp.zeros((TB, H), f32)

        # ---- forward direction ----
        def fwd_body(t, h):
            m = (t < lens).astype(f32)                      # (TB, 1)
            h_new = gru_step(h, gi_f_ref[t], whh_f, bhhn_f)
            h = h + m * (h_new - h)                         # freeze past seq end
            fwd_out_ref[t] = (m * h).astype(cdtype)         # padded positions -> 0
            return h

        h_fwd = lax.fori_loop(0, T, fwd_body, zeros, unroll=unroll)

        # ---- backward direction + pooling fused (VMEM-resident accumulators)
        sum_ref[...] = zeros
        max_ref[...] = jnp.full((TB, H), -jnp.inf, f32)

        def bwd_body(i, h):
            t = T - 1 - i
            m = (t < lens).astype(f32)
            h_new = gru_step(h, gi_b_ref[t], whh_b, bhhn_b)
            h = h + m * (h_new - h)
            out_t = fwd_out_ref[t].astype(f32) + m * h      # gru_out[:, t] fwd+bwd
            sum_ref[...] += out_t
            max_ref[...] = jnp.maximum(max_ref[...], out_t)
            return h

        h_bwd = lax.fori_loop(0, T, bwd_body, zeros, unroll=unroll)

        # ---- heads: single fused linear over the lane-aligned padded concat
        last_hidden = h_fwd + h_bwd                         # sum over directions
        avg_pool = sum_ref[...] * inv_len_ref[...]          # multiply by 1/len
        concat = jnp.concatenate(
            [last_hidden, max_ref[...], avg_pool, feat_ref[...]],
            axis=-1).astype(cdtype)                         # (TB, 3H + F)
        out_ref[...] = (jnp.dot(concat, wlin_ref[...], preferred_element_type=f32)
                        + blin_ref[...])

    return kernel


def bigru_static_m_forward(input_seq, input_feat, input_lengths, params,
                           *, use_bf16=True, tb=None):
    B, T = input_seq.shape
    E = params["emb"].shape[1]
    H = params["whh_f"].shape[1]
    F = input_feat.shape[1]
    O = params["b_lin"].shape[0]

    f32 = jnp.float32
    cdtype = jnp.bfloat16 if use_bf16 else jnp.float32
    c_size = jnp.dtype(cdtype).itemsize

    E_pad = _round_up(E, 128)
    H_pad = _round_up(H, 128)
    F_pad = _round_up(F, 128)
    O_pad = _round_up(O, 128)

    vmem_cap = _vmem_capacity_bytes()
    TB = _round_up(tb, 8) if tb is not None else _choose_tb(
        B, T, E_pad, H_pad, c_size, vmem_cap)
    n_tiles = pl.cdiv(_round_up(B, 8), TB)
    B_pad = n_tiles * TB

    # Frozen pre-trained embedding lookup (JAX glue), produced time-major.
    emb = jnp.take(params["emb"].astype(cdtype),
                   input_seq.T.astype(jnp.int32), axis=0)       # (T, B, E)
    emb = jnp.pad(emb, ((0, 0), (0, B_pad - B), (0, E_pad - E)))

    lens_i = jnp.pad(input_lengths.astype(jnp.int32), (0, B_pad - B))[:, None]
    inv_len = 1.0 / jnp.maximum(lens_i, 1).astype(f32)          # (B_pad, 1)
    feat = jnp.pad(input_feat.astype(f32), ((0, B_pad - B), (0, F_pad - F)))

    def pad_gate_cols(w):        # (K, 3H) -> (K, 3*H_pad), per-gate zero pad
        K = w.shape[0]
        return jnp.pad(w.reshape(K, 3, H),
                       ((0, 0), (0, 0), (0, H_pad - H))).reshape(K, 3 * H_pad)

    def prep_dir(wih, whh, bih, bhh):
        wih_p = jnp.pad(pad_gate_cols(wih.T.astype(f32)),
                        ((0, E_pad - E), (0, 0))).astype(cdtype)
        whh_p = jnp.pad(pad_gate_cols(whh.T.astype(f32)),
                        ((0, H_pad - H), (0, 0))).astype(cdtype)
        # fold bias_hh[r,z] into the hoisted projection bias (kept in f32)
        bih_c = bih.astype(f32) + jnp.concatenate(
            [bhh[:2 * H].astype(f32), jnp.zeros((H,), f32)])
        bih_p = pad_gate_cols(bih_c[None, :])                   # (1, 3*H_pad) f32
        bhhn_p = jnp.pad(bhh[2 * H:].astype(f32), (0, H_pad - H))[None, :]
        return wih_p, whh_p, bih_p, bhhn_p

    wih_f, whh_f, bih_f, bhhn_f = prep_dir(params["wih_f"], params["whh_f"],
                                           params["bih_f"], params["bhh_f"])
    wih_b, whh_b, bih_b, bhhn_b = prep_dir(params["wih_b"], params["whh_b"],
                                           params["bih_b"], params["bhh_b"])

    # Final linear, rows ordered to match concat [last_hidden | max | avg | feat].
    wl = params["w_lin"].astype(f32).T                          # (3H + F, O)
    wl_h = jnp.pad(wl[:3 * H].reshape(3, H, O),
                   ((0, 0), (0, H_pad - H), (0, 0))).reshape(3 * H_pad, O)
    wl_f = jnp.pad(wl[3 * H:], ((0, F_pad - F), (0, 0)))
    wl_p = jnp.pad(jnp.concatenate([wl_h, wl_f], axis=0),
                   ((0, 0), (0, O_pad - O))).astype(cdtype)
    bl_p = jnp.pad(params["b_lin"].astype(f32), (0, O_pad - O))[None, :]

    args = (emb, lens_i, inv_len, feat,
            wih_f, whh_f, bih_f, bhhn_f,
            wih_b, whh_b, bih_b, bhhn_b,
            wl_p, bl_p)

    def const_spec(a):           # weights/biases: same block at every grid step
        return pl.BlockSpec(a.shape, lambda b: (0, 0))

    in_specs = [
        pl.BlockSpec((T, TB, E_pad), lambda b: (0, b, 0)),      # emb (batch tiled)
        pl.BlockSpec((TB, 1), lambda b: (b, 0)),                # lengths
        pl.BlockSpec((TB, 1), lambda b: (b, 0)),                # 1/length
        pl.BlockSpec((TB, F_pad), lambda b: (b, 0)),            # extra features
    ] + [const_spec(a) for a in args[4:]]

    kernel = _make_kernel(T, TB, E_pad, H_pad, F_pad, O_pad, cdtype)
    out_pad = pl.pallas_call(
        kernel,
        out_shape=jax.ShapeDtypeStruct((B_pad, O_pad), f32),
        grid=(n_tiles,),
        in_specs=in_specs,
        out_specs=pl.BlockSpec((TB, O_pad), lambda b: (b, 0)),
        scratch_shapes=[
            pltpu.VMEM((T, TB, 3 * H_pad), cdtype),   # hoisted gi (forward)
            pltpu.VMEM((T, TB, 3 * H_pad), cdtype),   # hoisted gi (backward)
            pltpu.VMEM((T, TB, H_pad), cdtype),       # forward per-step outputs
            pltpu.VMEM((TB, H_pad), f32),             # sum-pool accumulator
            pltpu.VMEM((TB, H_pad), f32),             # max-pool accumulator
        ],
        compiler_params=pltpu.CompilerParams(
            dimension_semantics=("parallel",),        # megacore over batch tiles
            vmem_limit_bytes=int(vmem_cap * 0.9)),
    )(*args)
    return out_pad[:B, :O]


def reference_forward(input_seq, input_feat, input_lengths, params):
    """Pure-JAX reference mirroring the PyTorch semantics (f32)."""
    B, T = input_seq.shape
    H = params["whh_f"].shape[1]
    emb = params["emb"][input_seq].astype(jnp.float32)          # (B, T, E)
    lens = input_lengths

    def cell(x, h, wih, whh, bih, bhh):
        gi = x @ wih.T + bih
        gh = h @ whh.T + bhh
        r = jax.nn.sigmoid(gi[:, :H] + gh[:, :H])
        z = jax.nn.sigmoid(gi[:, H:2 * H] + gh[:, H:2 * H])
        n = jnp.tanh(gi[:, 2 * H:] + r * gh[:, 2 * H:])
        return (1 - z) * n + z * h

    h_f = jnp.zeros((B, H), jnp.float32)
    fwd_outs = []
    for t in range(T):
        m = (t < lens).astype(jnp.float32)[:, None]
        h_new = cell(emb[:, t], h_f, params["wih_f"], params["whh_f"],
                     params["bih_f"], params["bhh_f"])
        h_f = m * h_new + (1 - m) * h_f
        fwd_outs.append(m * h_f)

    h_b = jnp.zeros((B, H), jnp.float32)
    bwd_outs = [None] * T
    for t in range(T - 1, -1, -1):
        m = (t < lens).astype(jnp.float32)[:, None]
        h_new = cell(emb[:, t], h_b, params["wih_b"], params["whh_b"],
                     params["bih_b"], params["bhh_b"])
        h_b = m * h_new + (1 - m) * h_b
        bwd_outs[t] = m * h_b

    gru_out = jnp.stack([f + b for f, b in zip(fwd_outs, bwd_outs)], axis=1)
    last_hidden = h_f + h_b
    max_pool = jnp.max(gru_out, axis=1)
    avg_pool = jnp.sum(gru_out, axis=1) / lens.astype(jnp.float32)[:, None]
    concat = jnp.concatenate(
        [last_hidden, max_pool, avg_pool, input_feat.astype(jnp.float32)], axis=1)
    return concat @ params["w_lin"].T + params["b_lin"]


if __name__ == "__main__":
    B, T, V, E, H, F, O = 4, 8, 50, 32, 32, 8, 4
    key = jax.random.PRNGKey(0)
    ks = jax.random.split(key, 16)
    s = 0.1
    params = {
        "emb":   jax.random.normal(ks[0], (V, E), jnp.float32) * s,
        "wih_f": jax.random.normal(ks[1], (3 * H, E), jnp.float32) * s,
        "whh_f": jax.random.normal(ks[2], (3 * H, H), jnp.float32) * s,
        "bih_f": jax.random.normal(ks[3], (3 * H,), jnp.float32) * s,
        "bhh_f": jax.random.normal(ks[4], (3 * H,), jnp.float32) * s,
        "wih_b": jax.random.normal(ks[5], (3 * H, E), jnp.float32) * s,
        "whh_b": jax.random.normal(ks[6], (3 * H, H), jnp.float32) * s,
        "bih_b": jax.random.normal(ks[7], (3 * H,), jnp.float32) * s,
        "bhh_b": jax.random.normal(ks[8], (3 * H,), jnp.float32) * s,
        "w_lin": jax.random.normal(ks[9], (O, 3 * H + F), jnp.float32) * s,
        "b_lin": jax.random.normal(ks[10], (O,), jnp.float32) * s,
    }
    input_seq = jax.random.randint(ks[11], (B, T), 0, V)
    input_feat = jax.random.normal(ks[12], (B, F), jnp.float32)
    # lengths sorted descending, max == T (pack_padded_sequence requirement)
    input_lengths = jnp.array([8, 7, 5, 3], dtype=jnp.int32)

    ref = reference_forward(input_seq, input_feat, input_lengths, params)

    # exact-semantics path (f32 everywhere)
    out_f32 = jax.block_until_ready(
        bigru_static_m_forward(input_seq, input_feat, input_lengths, params,
                               use_bf16=False))
    assert out_f32.shape == (B, O)
    assert jnp.allclose(out_f32, ref, rtol=1e-4, atol=1e-4)

    # fast path: bf16 MXU operands + bf16 scratch, f32 state/accumulation
    out_bf16 = jax.block_until_ready(
        bigru_static_m_forward(input_seq, input_feat, input_lengths, params,
                               use_bf16=True))
    assert out_bf16.shape == (B, O)
    assert jnp.allclose(out_bf16, ref, rtol=5e-2, atol=5e-2)

    print("KERNEL_OK")
</pallas_src>

<mosaic_0001>
module attributes {stable_mosaic.version = 11 : i64} {
  func.func @kernel(%arg0: i32, %arg1: memref<8x8x128xf32, #tpu.memory_space<vmem>>, %arg2: memref<8x1xi32, #tpu.memory_space<vmem>>, %arg3: memref<8x1xf32, #tpu.memory_space<vmem>>, %arg4: memref<8x128xf32, #tpu.memory_space<vmem>>, %arg5: memref<128x384xf32, #tpu.memory_space<vmem>>, %arg6: memref<128x384xf32, #tpu.memory_space<vmem>>, %arg7: memref<1x384xf32, #tpu.memory_space<vmem>>, %arg8: memref<1x128xf32, #tpu.memory_space<vmem>>, %arg9: memref<128x384xf32, #tpu.memory_space<vmem>>, %arg10: memref<128x384xf32, #tpu.memory_space<vmem>>, %arg11: memref<1x384xf32, #tpu.memory_space<vmem>>, %arg12: memref<1x128xf32, #tpu.memory_space<vmem>>, %arg13: memref<512x128xf32, #tpu.memory_space<vmem>>, %arg14: memref<1x128xf32, #tpu.memory_space<vmem>>, %arg15: memref<8x128xf32, #tpu.memory_space<vmem>>, %arg16: memref<8x8x384xf32, #tpu.memory_space<vmem>>, %arg17: memref<8x8x384xf32, #tpu.memory_space<vmem>>, %arg18: memref<8x8x128xf32, #tpu.memory_space<vmem>>, %arg19: memref<8x128xf32, #tpu.memory_space<vmem>>, %arg20: memref<8x128xf32, #tpu.memory_space<vmem>>) attributes {dimension_semantics = [#tpu.dimension_semantics<parallel>], iteration_bounds = array<i64: 1>, scalar_prefetch = 0 : i64, scratch_operands = 5 : i64, tpu.core_type = #tpu.core_type<tc>, window_params = [{transform_indices = @transform_0, window_bounds = array<i64: 8, 8, 128>}, {transform_indices = @transform_1, window_bounds = array<i64: 8, 1>}, {transform_indices = @transform_2, window_bounds = array<i64: 8, 1>}, {transform_indices = @transform_3, window_bounds = array<i64: 8, 128>}, {pipeline_mode = #tpu.pipeline_mode<synchronous>, transform_indices = @transform_4, window_bounds = array<i64: 128, 384>}, {pipeline_mode = #tpu.pipeline_mode<synchronous>, transform_indices = @transform_5, window_bounds = array<i64: 128, 384>}, {pipeline_mode = #tpu.pipeline_mode<synchronous>, transform_indices = @transform_6, window_bounds = array<i64: 1, 384>}, {pipeline_mode = #tpu.pipeline_mode<synchronous>, transform_indices = @transform_7, window_bounds = array<i64: 1, 128>}, {pipeline_mode = #tpu.pipeline_mode<synchronous>, transform_indices = @transform_8, window_bounds = array<i64: 128, 384>}, {pipeline_mode = #tpu.pipeline_mode<synchronous>, transform_indices = @transform_9, window_bounds = array<i64: 128, 384>}, {pipeline_mode = #tpu.pipeline_mode<synchronous>, transform_indices = @transform_10, window_bounds = array<i64: 1, 384>}, {pipeline_mode = #tpu.pipeline_mode<synchronous>, transform_indices = @transform_11, window_bounds = array<i64: 1, 128>}, {pipeline_mode = #tpu.pipeline_mode<synchronous>, transform_indices = @transform_12, window_bounds = array<i64: 512, 128>}, {pipeline_mode = #tpu.pipeline_mode<synchronous>, transform_indices = @transform_13, window_bounds = array<i64: 1, 128>}, {transform_indices = @transform_14, window_bounds = array<i64: 8, 128>}]} {
    %c0 = arith.constant 0 : index
    %c0_0 = arith.constant 0 : index
    %c0_1 = arith.constant 0 : index
    %0 = vector.load %arg1[%c0, %c0_0, %c0_1] : memref<8x8x128xf32, #tpu.memory_space<vmem>>, vector<8x8x128xf32>
    %1 = vector.shape_cast %0 : vector<8x8x128xf32> to vector<64x128xf32>
    %c0_2 = arith.constant 0 : index
    %c0_3 = arith.constant 0 : index
    %2 = vector.load %arg5[%c0_2, %c0_3] : memref<128x384xf32, #tpu.memory_space<vmem>>, vector<128x384xf32>
    %cst = arith.constant dense<0.000000e+00> : vector<64x384xf32>
    %3 = tpu.matmul %1, %2, %cst {dimension_numbers = #tpu.dot_dimension_numbers<[1], [0], [0], [1], [0, 0, 1, 1], [], []>} : vector<64x128xf32>, vector<128x384xf32>, vector<64x384xf32> -> vector<64x384xf32>
    %c0_4 = arith.constant 0 : index
    %c0_5 = arith.constant 0 : index
    %4 = vector.load %arg7[%c0_4, %c0_5] : memref<1x384xf32, #tpu.memory_space<vmem>>, vector<1x384xf32>
    %5 = vector.broadcast %4 : vector<1x384xf32> to vector<64x384xf32>
    %6 = arith.addf %3, %5 : vector<64x384xf32>
    %7 = vector.shape_cast %6 : vector<64x384xf32> to vector<8x8x384xf32>
    %c0_6 = arith.constant 0 : index
    %c0_7 = arith.constant 0 : index
    %c0_8 = arith.constant 0 : index
    %8 = vector.load %arg16[%c0_6, %c0_7, %c0_8] : memref<8x8x384xf32, #tpu.memory_space<vmem>>, vector<8x8x384xf32>
    tpu.vector_store %arg16[%c0_6, %c0_7, %c0_8], %7 {strides = array<i32>} : memref<8x8x384xf32, #tpu.memory_space<vmem>>, vector<8x8x384xf32>,
    %c0_9 = arith.constant 0 : index
    %c0_10 = arith.constant 0 : index
    %9 = vector.load %arg9[%c0_9, %c0_10] : memref<128x384xf32, #tpu.memory_space<vmem>>, vector<128x384xf32>
    %cst_11 = arith.constant dense<0.000000e+00> : vector<64x384xf32>
    %10 = tpu.matmul %1, %9, %cst_11 {dimension_numbers = #tpu.dot_dimension_numbers<[1], [0], [0], [1], [0, 0, 1, 1], [], []>} : vector<64x128xf32>, vector<128x384xf32>, vector<64x384xf32> -> vector<64x384xf32>
    %c0_12 = arith.constant 0 : index
    %c0_13 = arith.constant 0 : index
    %11 = vector.load %arg11[%c0_12, %c0_13] : memref<1x384xf32, #tpu.memory_space<vmem>>, vector<1x384xf32>
    %12 = vector.broadcast %11 : vector<1x384xf32> to vector<64x384xf32>
    %13 = arith.addf %10, %12 : vector<64x384xf32>
    %14 = vector.shape_cast %13 : vector<64x384xf32> to vector<8x8x384xf32>
    %c0_14 = arith.constant 0 : index
    %c0_15 = arith.constant 0 : index
    %c0_16 = arith.constant 0 : index
    %15 = vector.load %arg17[%c0_14, %c0_15, %c0_16] : memref<8x8x384xf32, #tpu.memory_space<vmem>>, vector<8x8x384xf32>
    tpu.vector_store %arg17[%c0_14, %c0_15, %c0_16], %14 {strides = array<i32>} : memref<8x8x384xf32, #tpu.memory_space<vmem>>, vector<8x8x384xf32>,
    %c0_17 = arith.constant 0 : index
    %c0_18 = arith.constant 0 : index
    %16 = vector.load %arg6[%c0_17, %c0_18] : memref<128x384xf32, #tpu.memory_space<vmem>>, vector<128x384xf32>
    %c0_19 = arith.constant 0 : index
    %c0_20 = arith.constant 0 : index
    %17 = vector.load %arg10[%c0_19, %c0_20] : memref<128x384xf32, #tpu.memory_space<vmem>>, vector<128x384xf32>
    %c0_21 = arith.constant 0 : index
    %c0_22 = arith.constant 0 : index
    %18 = vector.load %arg8[%c0_21, %c0_22] : memref<1x128xf32, #tpu.memory_space<vmem>>, vector<1x128xf32>
    %19 = vector.shape_cast %18 : vector<1x128xf32> to vector<1x128xf32>
    %20 = vector.broadcast %19 : vector<1x128xf32> to vector<8x128xf32>
    %c0_23 = arith.constant 0 : index
    %c0_24 = arith.constant 0 : index
    %21 = vector.load %arg12[%c0_23, %c0_24] : memref<1x128xf32, #tpu.memory_space<vmem>>, vector<1x128xf32>
    %22 = vector.shape_cast %21 : vector<1x128xf32> to vector<1x128xf32>
    %23 = vector.broadcast %22 : vector<1x128xf32> to vector<8x128xf32>
    %c0_25 = arith.constant 0 : index
    %c0_26 = arith.constant 0 : index
    %24 = vector.load %arg2[%c0_25, %c0_26] : memref<8x1xi32, #tpu.memory_space<vmem>>, vector<8x1xi32>
    %cst_27 = arith.constant 0.000000e+00 : f32
    %25 = vector.broadcast %cst_27 : f32 to vector<8x128xf32>
    %c0_i32 = arith.constant 0 : i32
    %26 = vector.broadcast %c0_i32 : i32 to vector<8x1xi32>
    %27 = arith.cmpi slt, %26, %24 : vector<8x1xi32>
    %28 = arith.extui %27 : vector<8x1xi1> to vector<8x1xi32>
    %29 = arith.sitofp %28 : vector<8x1xi32> to vector<8x1xf32>
    %30 = arith.index_cast %c0_i32 : i32 to index
    %c0_28 = arith.constant 0 : index
    %c0_29 = arith.constant 0 : index
    %31 = vector.load %arg16[%30, %c0_28, %c0_29] : memref<8x8x384xf32, #tpu.memory_space<vmem>>, vector<1x8x384xf32>
    %32 = vector.shape_cast %31 : vector<1x8x384xf32> to vector<8x384xf32>
    %cst_30 = arith.constant dense<0.000000e+00> : vector<8x384xf32>
    %33 = tpu.matmul %25, %16, %cst_30 {dimension_numbers = #tpu.dot_dimension_numbers<[1], [0], [0], [1], [0, 0, 1, 1], [], []>} : vector<8x128xf32>, vector<128x384xf32>, vector<8x384xf32> -> vector<8x384xf32>
    %34 = vector.extract_strided_slice %32 {offsets = [0, 0], sizes = [8, 256], strides = [1, 1]} : vector<8x384xf32> to vector<8x256xf32>
    %35 = vector.extract_strided_slice %33 {offsets = [0, 0], sizes = [8, 256], strides = [1, 1]} : vector<8x384xf32> to vector<8x256xf32>
    %36 = arith.addf %34, %35 : vector<8x256xf32>
    %37 = arith.negf %36 : vector<8x256xf32>
    %38 = math.exp %37 : vector<8x256xf32>
    %cst_31 = arith.constant 1.000000e+00 : f32
    %39 = vector.broadcast %cst_31 : f32 to vector<8x256xf32>
    %40 = arith.addf %39, %38 : vector<8x256xf32>
    %41 = arith.divf %39, %40 : vector<8x256xf32>
    %42 = vector.extract_strided_slice %41 {offsets = [0, 0], sizes = [8, 128], strides = [1, 1]} : vector<8x256xf32> to vector<8x128xf32>
    %43 = vector.extract_strided_slice %41 {offsets = [0, 128], sizes = [8, 128], strides = [1, 1]} : vector<8x256xf32> to vector<8x128xf32>
    %44 = vector.extract_strided_slice %32 {offsets = [0, 256], sizes = [8, 128], strides = [1, 1]} : vector<8x384xf32> to vector<8x128xf32>
    %45 = vector.extract_strided_slice %33 {offsets = [0, 256], sizes = [8, 128], strides = [1, 1]} : vector<8x384xf32> to vector<8x128xf32>
    %46 = arith.addf %45, %20 : vector<8x128xf32>
    %47 = arith.mulf %42, %46 : vector<8x128xf32>
    %48 = arith.addf %44, %47 : vector<8x128xf32>
    %49 = math.tanh %48 : vector<8x128xf32>
    %50 = arith.subf %25, %49 : vector<8x128xf32>
    %51 = arith.mulf %43, %50 : vector<8x128xf32>
    %52 = arith.addf %49, %51 : vector<8x128xf32>
    %53 = arith.subf %52, %25 : vector<8x128xf32>
    %54 = vector.broadcast %29 : vector<8x1xf32> to vector<8x128xf32>
    %55 = arith.mulf %54, %53 : vector<8x128xf32>
    %56 = arith.addf %25, %55 : vector<8x128xf32>
    %57 = vector.broadcast %29 : vector<8x1xf32> to vector<8x128xf32>
    %58 = arith.mulf %57, %56 : vector<8x128xf32>
    %59 = arith.index_cast %c0_i32 : i32 to index
    %c0_32 = arith.constant 0 : index
    %c0_33 = arith.constant 0 : index
    %60 = vector.load %arg18[%59, %c0_32, %c0_33] : memref<8x8x128xf32, #tpu.memory_space<vmem>>, vector<1x8x128xf32>
    %61 = vector.shape_cast %60 : vector<1x8x128xf32> to vector<8x128xf32>
    %62 = vector.shape_cast %58 : vector<8x128xf32> to vector<1x8x128xf32>
    tpu.vector_store %arg18[%59, %c0_32, %c0_33], %62 {strides = array<i32>} : memref<8x8x128xf32, #tpu.memory_space<vmem>>, vector<1x8x128xf32>,
    %c1_i32 = arith.constant 1 : i32
    %63 = vector.broadcast %c1_i32 : i32 to vector<8x1xi32>
    %64 = arith.cmpi slt, %63, %24 : vector<8x1xi32>
    %65 = arith.extui %64 : vector<8x1xi1> to vector<8x1xi32>
    %66 = arith.sitofp %65 : vector<8x1xi32> to vector<8x1xf32>
    %67 = arith.index_cast %c1_i32 : i32 to index
    %c0_34 = arith.constant 0 : index
    %c0_35 = arith.constant 0 : index
    %68 = vector.load %arg16[%67, %c0_34, %c0_35] : memref<8x8x384xf32, #tpu.memory_space<vmem>>, vector<1x8x384xf32>
    %69 = vector.shape_cast %68 : vector<1x8x384xf32> to vector<8x384xf32>
    %cst_36 = arith.constant dense<0.000000e+00> : vector<8x384xf32>
    %70 = tpu.matmul %56, %16, %cst_36 {dimension_numbers = #tpu.dot_dimension_numbers<[1], [0], [0], [1], [0, 0, 1, 1], [], []>} : vector<8x128xf32>, vector<128x384xf32>, vector<8x384xf32> -> vector<8x384xf32>
    %71 = vector.extract_strided_slice %69 {offsets = [0, 0], sizes = [8, 256], strides = [1, 1]} : vector<8x384xf32> to vector<8x256xf32>
    %72 = vector.extract_strided_slice %70 {offsets = [0, 0], sizes = [8, 256], strides = [1, 1]} : vector<8x384xf32> to vector<8x256xf32>
    %73 = arith.addf %71, %72 : vector<8x256xf32>
    %74 = arith.negf %73 : vector<8x256xf32>
    %75 = math.exp %74 : vector<8x256xf32>
    %cst_37 = arith.constant 1.000000e+00 : f32
    %76 = vector.broadcast %cst_37 : f32 to vector<8x256xf32>
    %77 = arith.addf %76, %75 : vector<8x256xf32>
    %78 = arith.divf %76, %77 : vector<8x256xf32>
    %79 = vector.extract_strided_slice %78 {offsets = [0, 0], sizes = [8, 128], strides = [1, 1]} : vector<8x256xf32> to vector<8x128xf32>
    %80 = vector.extract_strided_slice %78 {offsets = [0, 128], sizes = [8, 128], strides = [1, 1]} : vector<8x256xf32> to vector<8x128xf32>
    %81 = vector.extract_strided_slice %69 {offsets = [0, 256], sizes = [8, 128], strides = [1, 1]} : vector<8x384xf32> to vector<8x128xf32>
    %82 = vector.extract_strided_slice %70 {offsets = [0, 256], sizes = [8, 128], strides = [1, 1]} : vector<8x384xf32> to vector<8x128xf32>
    %83 = arith.addf %82, %20 : vector<8x128xf32>
    %84 = arith.mulf %79, %83 : vector<8x128xf32>
    %85 = arith.addf %81, %84 : vector<8x128xf32>
    %86 = math.tanh %85 : vector<8x128xf32>
    %87 = arith.subf %56, %86 : vector<8x128xf32>
    %88 = arith.mulf %80, %87 : vector<8x128xf32>
    %89 = arith.addf %86, %88 : vector<8x128xf32>
    %90 = arith.subf %89, %56 : vector<8x128xf32>
    %91 = vector.broadcast %66 : vector<8x1xf32> to vector<8x128xf32>
    %92 = arith.mulf %91, %90 : vector<8x128xf32>
    %93 = arith.addf %56, %92 : vector<8x128xf32>
    %94 = vector.broadcast %66 : vector<8x1xf32> to vector<8x128xf32>
    %95 = arith.mulf %94, %93 : vector<8x128xf32>
    %96 = arith.index_cast %c1_i32 : i32 to index
    %c0_38 = arith.constant 0 : index
    %c0_39 = arith.constant 0 : index
    %97 = vector.load %arg18[%96, %c0_38, %c0_39] : memref<8x8x128xf32, #tpu.memory_space<vmem>>, vector<1x8x128xf32>
    %98 = vector.shape_cast %97 : vector<1x8x128xf32> to vector<8x128xf32>
    %99 = vector.shape_cast %95 : vector<8x128xf32> to vector<1x8x128xf32>
    tpu.vector_store %arg18[%96, %c0_38, %c0_39], %99 {strides = array<i32>} : memref<8x8x128xf32, #tpu.memory_space<vmem>>, vector<1x8x128xf32>,
    %c2_i32 = arith.constant 2 : i32
    %100 = vector.broadcast %c2_i32 : i32 to vector<8x1xi32>
    %101 = arith.cmpi slt, %100, %24 : vector<8x1xi32>
    %102 = arith.extui %101 : vector<8x1xi1> to vector<8x1xi32>
    %103 = arith.sitofp %102 : vector<8x1xi32> to vector<8x1xf32>
    %104 = arith.index_cast %c2_i32 : i32 to index
    %c0_40 = arith.constant 0 : index
    %c0_41 = arith.constant 0 : index
    %105 = vector.load %arg16[%104, %c0_40, %c0_41] : memref<8x8x384xf32, #tpu.memory_space<vmem>>, vector<1x8x384xf32>
    %106 = vector.shape_cast %105 : vector<1x8x384xf32> to vector<8x384xf32>
    %cst_42 = arith.constant dense<0.000000e+00> : vector<8x384xf32>
    %107 = tpu.matmul %93, %16, %cst_42 {dimension_numbers = #tpu.dot_dimension_numbers<[1], [0], [0], [1], [0, 0, 1, 1], [], []>} : vector<8x128xf32>, vector<128x384xf32>, vector<8x384xf32> -> vector<8x384xf32>
    %108 = vector.extract_strided_slice %106 {offsets = [0, 0], sizes = [8, 256], strides = [1, 1]} : vector<8x384xf32> to vector<8x256xf32>
    %109 = vector.extract_strided_slice %107 {offsets = [0, 0], sizes = [8, 256], strides = [1, 1]} : vector<8x384xf32> to vector<8x256xf32>
    %110 = arith.addf %108, %109 : vector<8x256xf32>
    %111 = arith.negf %110 : vector<8x256xf32>
    %112 = math.exp %111 : vector<8x256xf32>
    %cst_43 = arith.constant 1.000000e+00 : f32
    %113 = vector.broadcast %cst_43 : f32 to vector<8x256xf32>
    %114 = arith.addf %113, %112 : vector<8x256xf32>
    %115 = arith.divf %113, %114 : vector<8x256xf32>
    %116 = vector.extract_strided_slice %115 {offsets = [0, 0], sizes = [8, 128], strides = [1, 1]} : vector<8x256xf32> to vector<8x128xf32>
    %117 = vector.extract_strided_slice %115 {offsets = [0, 128], sizes = [8, 128], strides = [1, 1]} : vector<8x256xf32> to vector<8x128xf32>
    %118 = vector.extract_strided_slice %106 {offsets = [0, 256], sizes = [8, 128], strides = [1, 1]} : vector<8x384xf32> to vector<8x128xf32>
    %119 = vector.extract_strided_slice %107 {offsets = [0, 256], sizes = [8, 128], strides = [1, 1]} : vector<8x384xf32> to vector<8x128xf32>
    %120 = arith.addf %119, %20 : vector<8x128xf32>
    %121 = arith.mulf %116, %120 : vector<8x128xf32>
    %122 = arith.addf %118, %121 : vector<8x128xf32>
    %123 = math.tanh %122 : vector<8x128xf32>
    %124 = arith.subf %93, %123 : vector<8x128xf32>
    %125 = arith.mulf %117, %124 : vector<8x128xf32>
    %126 = arith.addf %123, %125 : vector<8x128xf32>
    %127 = arith.subf %126, %93 : vector<8x128xf32>
    %128 = vector.broadcast %103 : vector<8x1xf32> to vector<8x128xf32>
    %129 = arith.mulf %128, %127 : vector<8x128xf32>
    %130 = arith.addf %93, %129 : vector<8x128xf32>
    %131 = vector.broadcast %103 : vector<8x1xf32> to vector<8x128xf32>
    %132 = arith.mulf %131, %130 : vector<8x128xf32>
    %133 = arith.index_cast %c2_i32 : i32 to index
    %c0_44 = arith.constant 0 : index
    %c0_45 = arith.constant 0 : index
    %134 = vector.load %arg18[%133, %c0_44, %c0_45] : memref<8x8x128xf32, #tpu.memory_space<vmem>>, vector<1x8x128xf32>
    %135 = vector.shape_cast %134 : vector<1x8x128xf32> to vector<8x128xf32>
    %136 = vector.shape_cast %132 : vector<8x128xf32> to vector<1x8x128xf32>
    tpu.vector_store %arg18[%133, %c0_44, %c0_45], %136 {strides = array<i32>} : memref<8x8x128xf32, #tpu.memory_space<vmem>>, vector<1x8x128xf32>,
    %c3_i32 = arith.constant 3 : i32
    %137 = vector.broadcast %c3_i32 : i32 to vector<8x1xi32>
    %138 = arith.cmpi slt, %137, %24 : vector<8x1xi32>
    %139 = arith.extui %138 : vector<8x1xi1> to vector<8x1xi32>
    %140 = arith.sitofp %139 : vector<8x1xi32> to vector<8x1xf32>
    %141 = arith.index_cast %c3_i32 : i32 to index
    %c0_46 = arith.constant 0 : index
    %c0_47 = arith.constant 0 : index
    %142 = vector.load %arg16[%141, %c0_46, %c0_47] : memref<8x8x384xf32, #tpu.memory_space<vmem>>, vector<1x8x384xf32>
    %143 = vector.shape_cast %142 : vector<1x8x384xf32> to vector<8x384xf32>
    %cst_48 = arith.constant dense<0.000000e+00> : vector<8x384xf32>
    %144 = tpu.matmul %130, %16, %cst_48 {dimension_numbers = #tpu.dot_dimension_numbers<[1], [0], [0], [1], [0, 0, 1, 1], [], []>} : vector<8x128xf32>, vector<128x384xf32>, vector<8x384xf32> -> vector<8x384xf32>
    %145 = vector.extract_strided_slice %143 {offsets = [0, 0], sizes = [8, 256], strides = [1, 1]} : vector<8x384xf32> to vector<8x256xf32>
    %146 = vector.extract_strided_slice %144 {offsets = [0, 0], sizes = [8, 256], strides = [1, 1]} : vector<8x384xf32> to vector<8x256xf32>
    %147 = arith.addf %145, %146 : vector<8x256xf32>
    %148 = arith.negf %147 : vector<8x256xf32>
    %149 = math.exp %148 : vector<8x256xf32>
    %cst_49 = arith.constant 1.000000e+00 : f32
    %150 = vector.broadcast %cst_49 : f32 to vector<8x256xf32>
    %151 = arith.addf %150, %149 : vector<8x256xf32>
    %152 = arith.divf %150, %151 : vector<8x256xf32>
    %153 = vector.extract_strided_slice %152 {offsets = [0, 0], sizes = [8, 128], strides = [1, 1]} : vector<8x256xf32> to vector<8x128xf32>
    %154 = vector.extract_strided_slice %152 {offsets = [0, 128], sizes = [8, 128], strides = [1, 1]} : vector<8x256xf32> to vector<8x128xf32>
    %155 = vector.extract_strided_slice %143 {offsets = [0, 256], sizes = [8, 128], strides = [1, 1]} : vector<8x384xf32> to vector<8x128xf32>
    %156 = vector.extract_strided_slice %144 {offsets = [0, 256], sizes = [8, 128], strides = [1, 1]} : vector<8x384xf32> to vector<8x128xf32>
    %157 = arith.addf %156, %20 : vector<8x128xf32>
    %158 = arith.mulf %153, %157 : vector<8x128xf32>
    %159 = arith.addf %155, %158 : vector<8x128xf32>
    %160 = math.tanh %159 : vector<8x128xf32>
    %161 = arith.subf %130, %160 : vector<8x128xf32>
    %162 = arith.mulf %154, %161 : vector<8x128xf32>
    %163 = arith.addf %160, %162 : vector<8x128xf32>
    %164 = arith.subf %163, %130 : vector<8x128xf32>
    %165 = vector.broadcast %140 : vector<8x1xf32> to vector<8x128xf32>
    %166 = arith.mulf %165, %164 : vector<8x128xf32>
    %167 = arith.addf %130, %166 : vector<8x128xf32>
    %168 = vector.broadcast %140 : vector<8x1xf32> to vector<8x128xf32>
    %169 = arith.mulf %168, %167 : vector<8x128xf32>
    %170 = arith.index_cast %c3_i32 : i32 to index
    %c0_50 = arith.constant 0 : index
    %c0_51 = arith.constant 0 : index
    %171 = vector.load %arg18[%170, %c0_50, %c0_51] : memref<8x8x128xf32, #tpu.memory_space<vmem>>, vector<1x8x128xf32>
    %172 = vector.shape_cast %171 : vector<1x8x128xf32> to vector<8x128xf32>
    %173 = vector.shape_cast %169 : vector<8x128xf32> to vector<1x8x128xf32>
    tpu.vector_store %arg18[%170, %c0_50, %c0_51], %173 {strides = array<i32>} : memref<8x8x128xf32, #tpu.memory_space<vmem>>, vector<1x8x128xf32>,
    %c4_i32 = arith.constant 4 : i32
    %174 = vector.broadcast %c4_i32 : i32 to vector<8x1xi32>
    %175 = arith.cmpi slt, %174, %24 : vector<8x1xi32>
    %176 = arith.extui %175 : vector<8x1xi1> to vector<8x1xi32>
    %177 = arith.sitofp %176 : vector<8x1xi32> to vector<8x1xf32>
    %178 = arith.index_cast %c4_i32 : i32 to index
    %c0_52 = arith.constant 0 : index
    %c0_53 = arith.constant 0 : index
    %179 = vector.load %arg16[%178, %c0_52, %c0_53] : memref<8x8x384xf32, #tpu.memory_space<vmem>>, vector<1x8x384xf32>
    %180 = vector.shape_cast %179 : vector<1x8x384xf32> to vector<8x384xf32>
    %cst_54 = arith.constant dense<0.000000e+00> : vector<8x384xf32>
    %181 = tpu.matmul %167, %16, %cst_54 {dimension_numbers = #tpu.dot_dimension_numbers<[1], [0], [0], [1], [0, 0, 1, 1], [], []>} : vector<8x128xf32>, vector<128x384xf32>, vector<8x384xf32> -> vector<8x384xf32>
    %182 = vector.extract_strided_slice %180 {offsets = [0, 0], sizes = [8, 256], strides = [1, 1]} : vector<8x384xf32> to vector<8x256xf32>
    %183 = vector.extract_strided_slice %181 {offsets = [0, 0], sizes = [8, 256], strides = [1, 1]} : vector<8x384xf32> to vector<8x256xf32>
    %184 = arith.addf %182, %183 : vector<8x256xf32>
    %185 = arith.negf %184 : vector<8x256xf32>
    %186 = math.exp %185 : vector<8x256xf32>
    %cst_55 = arith.constant 1.000000e+00 : f32
    %187 = vector.broadcast %cst_55 : f32 to vector<8x256xf32>
    %188 = arith.addf %187, %186 : vector<8x256xf32>
    %189 = arith.divf %187, %188 : vector<8x256xf32>
    %190 = vector.extract_strided_slice %189 {offsets = [0, 0], sizes = [8, 128], strides = [1, 1]} : vector<8x256xf32> to vector<8x128xf32>
    %191 = vector.extract_strided_slice %189 {offsets = [0, 128], sizes = [8, 128], strides = [1, 1]} : vector<8x256xf32> to vector<8x128xf32>
    %192 = vector.extract_strided_slice %180 {offsets = [0, 256], sizes = [8, 128], strides = [1, 1]} : vector<8x384xf32> to vector<8x128xf32>
    %193 = vector.extract_strided_slice %181 {offsets = [0, 256], sizes = [8, 128], strides = [1, 1]} : vector<8x384xf32> to vector<8x128xf32>
    %194 = arith.addf %193, %20 : vector<8x128xf32>
    %195 = arith.mulf %190, %194 : vector<8x128xf32>
    %196 = arith.addf %192, %195 : vector<8x128xf32>
    %197 = math.tanh %196 : vector<8x128xf32>
    %198 = arith.subf %167, %197 : vector<8x128xf32>
    %199 = arith.mulf %191, %198 : vector<8x128xf32>
    %200 = arith.addf %197, %199 : vector<8x128xf32>
    %201 = arith.subf %200, %167 : vector<8x128xf32>
    %202 = vector.broadcast %177 : vector<8x1xf32> to vector<8x128xf32>
    %203 = arith.mulf %202, %201 : vector<8x128xf32>
    %204 = arith.addf %167, %203 : vector<8x128xf32>
    %205 = vector.broadcast %177 : vector<8x1xf32> to vector<8x128xf32>
    %206 = arith.mulf %205, %204 : vector<8x128xf32>
    %207 = arith.index_cast %c4_i32 : i32 to index
    %c0_56 = arith.constant 0 : index
    %c0_57 = arith.constant 0 : index
    %208 = vector.load %arg18[%207, %c0_56, %c0_57] : memref<8x8x128xf32, #tpu.memory_space<vmem>>, vector<1x8x128xf32>
    %209 = vector.shape_cast %208 : vector<1x8x128xf32> to vector<8x128xf32>
    %210 = vector.shape_cast %206 : vector<8x128xf32> to vector<1x8x128xf32>
    tpu.vector_store %arg18[%207, %c0_56, %c0_57], %210 {strides = array<i32>} : memref<8x8x128xf32, #tpu.memory_space<vmem>>, vector<1x8x128xf32>,
    %c5_i32 = arith.constant 5 : i32
    %211 = vector.broadcast %c5_i32 : i32 to vector<8x1xi32>
    %212 = arith.cmpi slt, %211, %24 : vector<8x1xi32>
    %213 = arith.extui %212 : vector<8x1xi1> to vector<8x1xi32>
    %214 = arith.sitofp %213 : vector<8x1xi32> to vector<8x1xf32>
    %215 = arith.index_cast %c5_i32 : i32 to index
    %c0_58 = arith.constant 0 : index
    %c0_59 = arith.constant 0 : index
    %216 = vector.load %arg16[%215, %c0_58, %c0_59] : memref<8x8x384xf32, #tpu.memory_space<vmem>>, vector<1x8x384xf32>
    %217 = vector.shape_cast %216 : vector<1x8x384xf32> to vector<8x384xf32>
    %cst_60 = arith.constant dense<0.000000e+00> : vector<8x384xf32>
    %218 = tpu.matmul %204, %16, %cst_60 {dimension_numbers = #tpu.dot_dimension_numbers<[1], [0], [0], [1], [0, 0, 1, 1], [], []>} : vector<8x128xf32>, vector<128x384xf32>, vector<8x384xf32> -> vector<8x384xf32>
    %219 = vector.extract_strided_slice %217 {offsets = [0, 0], sizes = [8, 256], strides = [1, 1]} : vector<8x384xf32> to vector<8x256xf32>
    %220 = vector.extract_strided_slice %218 {offsets = [0, 0], sizes = [8, 256], strides = [1, 1]} : vector<8x384xf32> to vector<8x256xf32>
    %221 = arith.addf %219, %220 : vector<8x256xf32>
    %222 = arith.negf %221 : vector<8x256xf32>
    %223 = math.exp %222 : vector<8x256xf32>
    %cst_61 = arith.constant 1.000000e+00 : f32
    %224 = vector.broadcast %cst_61 : f32 to vector<8x256xf32>
    %225 = arith.addf %224, %223 : vector<8x256xf32>
    %226 = arith.divf %224, %225 : vector<8x256xf32>
    %227 = vector.extract_strided_slice %226 {offsets = [0, 0], sizes = [8, 128], strides = [1, 1]} : vector<8x256xf32> to vector<8x128xf32>
    %228 = vector.extract_strided_slice %226 {offsets = [0, 128], sizes = [8, 128], strides = [1, 1]} : vector<8x256xf32> to vector<8x128xf32>
    %229 = vector.extract_strided_slice %217 {offsets = [0, 256], sizes = [8, 128], strides = [1, 1]} : vector<8x384xf32> to vector<8x128xf32>
    %230 = vector.extract_strided_slice %218 {offsets = [0, 256], sizes = [8, 128], strides = [1, 1]} : vector<8x384xf32> to vector<8x128xf32>
    %231 = arith.addf %230, %20 : vector<8x128xf32>
    %232 = arith.mulf %227, %231 : vector<8x128xf32>
    %233 = arith.addf %229, %232 : vector<8x128xf32>
    %234 = math.tanh %233 : vector<8x128xf32>
    %235 = arith.subf %204, %234 : vector<8x128xf32>
    %236 = arith.mulf %228, %235 : vector<8x128xf32>
    %237 = arith.addf %234, %236 : vector<8x128xf32>
    %238 = arith.subf %237, %204 : vector<8x128xf32>
    %239 = vector.broadcast %214 : vector<8x1xf32> to vector<8x128xf32>
    %240 = arith.mulf %239, %238 : vector<8x128xf32>
    %241 = arith.addf %204, %240 : vector<8x128xf32>
    %242 = vector.broadcast %214 : vector<8x1xf32> to vector<8x128xf32>
    %243 = arith.mulf %242, %241 : vector<8x128xf32>
    %244 = arith.index_cast %c5_i32 : i32 to index
    %c0_62 = arith.constant 0 : index
    %c0_63 = arith.constant 0 : index
    %245 = vector.load %arg18[%244, %c0_62, %c0_63] : memref<8x8x128xf32, #tpu.memory_space<vmem>>, vector<1x8x128xf32>
    %246 = vector.shape_cast %245 : vector<1x8x128xf32> to vector<8x128xf32>
    %247 = vector.shape_cast %243 : vector<8x128xf32> to vector<1x8x128xf32>
    tpu.vector_store %arg18[%244, %c0_62, %c0_63], %247 {strides = array<i32>} : memref<8x8x128xf32, #tpu.memory_space<vmem>>, vector<1x8x128xf32>,
    %c6_i32 = arith.constant 6 : i32
    %248 = vector.broadcast %c6_i32 : i32 to vector<8x1xi32>
    %249 = arith.cmpi slt, %248, %24 : vector<8x1xi32>
    %250 = arith.extui %249 : vector<8x1xi1> to vector<8x1xi32>
    %251 = arith.sitofp %250 : vector<8x1xi32> to vector<8x1xf32>
    %252 = arith.index_cast %c6_i32 : i32 to index
    %c0_64 = arith.constant 0 : index
    %c0_65 = arith.constant 0 : index
    %253 = vector.load %arg16[%252, %c0_64, %c0_65] : memref<8x8x384xf32, #tpu.memory_space<vmem>>, vector<1x8x384xf32>
    %254 = vector.shape_cast %253 : vector<1x8x384xf32> to vector<8x384xf32>
    %cst_66 = arith.constant dense<0.000000e+00> : vector<8x384xf32>
    %255 = tpu.matmul %241, %16, %cst_66 {dimension_numbers = #tpu.dot_dimension_numbers<[1], [0], [0], [1], [0, 0, 1, 1], [], []>} : vector<8x128xf32>, vector<128x384xf32>, vector<8x384xf32> -> vector<8x384xf32>
    %256 = vector.extract_strided_slice %254 {offsets = [0, 0], sizes = [8, 256], strides = [1, 1]} : vector<8x384xf32> to vector<8x256xf32>
    %257 = vector.extract_strided_slice %255 {offsets = [0, 0], sizes = [8, 256], strides = [1, 1]} : vector<8x384xf32> to vector<8x256xf32>
    %258 = arith.addf %256, %257 : vector<8x256xf32>
    %259 = arith.negf %258 : vector<8x256xf32>
    %260 = math.exp %259 : vector<8x256xf32>
    %cst_67 = arith.constant 1.000000e+00 : f32
    %261 = vector.broadcast %cst_67 : f32 to vector<8x256xf32>
    %262 = arith.addf %261, %260 : vector<8x256xf32>
    %263 = arith.divf %261, %262 : vector<8x256xf32>
    %264 = vector.extract_strided_slice %263 {offsets = [0, 0], sizes = [8, 128], strides = [1, 1]} : vector<8x256xf32> to vector<8x128xf32>
    %265 = vector.extract_strided_slice %263 {offsets = [0, 128], sizes = [8, 128], strides = [1, 1]} : vector<8x256xf32> to vector<8x128xf32>
    %266 = vector.extract_strided_slice %254 {offsets = [0, 256], sizes = [8, 128], strides = [1, 1]} : vector<8x384xf32> to vector<8x128xf32>
    %267 = vector.extract_strided_slice %255 {offsets = [0, 256], sizes = [8, 128], strides = [1, 1]} : vector<8x384xf32> to vector<8x128xf32>
    %268 = arith.addf %267, %20 : vector<8x128xf32>
    %269 = arith.mulf %264, %268 : vector<8x128xf32>
    %270 = arith.addf %266, %269 : vector<8x128xf32>
    %271 = math.tanh %270 : vector<8x128xf32>
    %272 = arith.subf %241, %271 : vector<8x128xf32>
    %273 = arith.mulf %265, %272 : vector<8x128xf32>
    %274 = arith.addf %271, %273 : vector<8x128xf32>
    %275 = arith.subf %274, %241 : vector<8x128xf32>
    %276 = vector.broadcast %251 : vector<8x1xf32> to vector<8x128xf32>
    %277 = arith.mulf %276, %275 : vector<8x128xf32>
    %278 = arith.addf %241, %277 : vector<8x128xf32>
    %279 = vector.broadcast %251 : vector<8x1xf32> to vector<8x128xf32>
    %280 = arith.mulf %279, %278 : vector<8x128xf32>
    %281 = arith.index_cast %c6_i32 : i32 to index
    %c0_68 = arith.constant 0 : index
    %c0_69 = arith.constant 0 : index
    %282 = vector.load %arg18[%281, %c0_68, %c0_69] : memref<8x8x128xf32, #tpu.memory_space<vmem>>, vector<1x8x128xf32>
    %283 = vector.shape_cast %282 : vector<1x8x128xf32> to vector<8x128xf32>
    %284 = vector.shape_cast %280 : vector<8x128xf32> to vector<1x8x128xf32>
    tpu.vector_store %arg18[%281, %c0_68, %c0_69], %284 {strides = array<i32>} : memref<8x8x128xf32, #tpu.memory_space<vmem>>, vector<1x8x128xf32>,
    %c7_i32 = arith.constant 7 : i32
    %285 = vector.broadcast %c7_i32 : i32 to vector<8x1xi32>
    %286 = arith.cmpi slt, %285, %24 : vector<8x1xi32>
    %287 = arith.extui %286 : vector<8x1xi1> to vector<8x1xi32>
    %288 = arith.sitofp %287 : vector<8x1xi32> to vector<8x1xf32>
    %289 = arith.index_cast %c7_i32 : i32 to index
    %c0_70 = arith.constant 0 : index
    %c0_71 = arith.constant 0 : index
    %290 = vector.load %arg16[%289, %c0_70, %c0_71] : memref<8x8x384xf32, #tpu.memory_space<vmem>>, vector<1x8x384xf32>
    %291 = vector.shape_cast %290 : vector<1x8x384xf32> to vector<8x384xf32>
    %cst_72 = arith.constant dense<0.000000e+00> : vector<8x384xf32>
    %292 = tpu.matmul %278, %16, %cst_72 {dimension_numbers = #tpu.dot_dimension_numbers<[1], [0], [0], [1], [0, 0, 1, 1], [], []>} : vector<8x128xf32>, vector<128x384xf32>, vector<8x384xf32> -> vector<8x384xf32>
    %293 = vector.extract_strided_slice %291 {offsets = [0, 0], sizes = [8, 256], strides = [1, 1]} : vector<8x384xf32> to vector<8x256xf32>
    %294 = vector.extract_strided_slice %292 {offsets = [0, 0], sizes = [8, 256], strides = [1, 1]} : vector<8x384xf32> to vector<8x256xf32>
    %295 = arith.addf %293, %294 : vector<8x256xf32>
    %296 = arith.negf %295 : vector<8x256xf32>
    %297 = math.exp %296 : vector<8x256xf32>
    %cst_73 = arith.constant 1.000000e+00 : f32
    %298 = vector.broadcast %cst_73 : f32 to vector<8x256xf32>
    %299 = arith.addf %298, %297 : vector<8x256xf32>
    %300 = arith.divf %298, %299 : vector<8x256xf32>
    %301 = vector.extract_strided_slice %300 {offsets = [0, 0], sizes = [8, 128], strides = [1, 1]} : vector<8x256xf32> to vector<8x128xf32>
    %302 = vector.extract_strided_slice %300 {offsets = [0, 128], sizes = [8, 128], strides = [1, 1]} : vector<8x256xf32> to vector<8x128xf32>
    %303 = vector.extract_strided_slice %291 {offsets = [0, 256], sizes = [8, 128], strides = [1, 1]} : vector<8x384xf32> to vector<8x128xf32>
    %304 = vector.extract_strided_slice %292 {offsets = [0, 256], sizes = [8, 128], strides = [1, 1]} : vector<8x384xf32> to vector<8x128xf32>
    %305 = arith.addf %304, %20 : vector<8x128xf32>
    %306 = arith.mulf %301, %305 : vector<8x128xf32>
    %307 = arith.addf %303, %306 : vector<8x128xf32>
    %308 = math.tanh %307 : vector<8x128xf32>
    %309 = arith.subf %278, %308 : vector<8x128xf32>
    %310 = arith.mulf %302, %309 : vector<8x128xf32>
    %311 = arith.addf %308, %310 : vector<8x128xf32>
    %312 = arith.subf %311, %278 : vector<8x128xf32>
    %313 = vector.broadcast %288 : vector<8x1xf32> to vector<8x128xf32>
    %314 = arith.mulf %313, %312 : vector<8x128xf32>
    %315 = arith.addf %278, %314 : vector<8x128xf32>
    %316 = vector.broadcast %288 : vector<8x1xf32> to vector<8x128xf32>
    %317 = arith.mulf %316, %315 : vector<8x128xf32>
    %318 = arith.index_cast %c7_i32 : i32 to index
    %c0_74 = arith.constant 0 : index
    %c0_75 = arith.constant 0 : index
    %319 = vector.load %arg18[%318, %c0_74, %c0_75] : memref<8x8x128xf32, #tpu.memory_space<vmem>>, vector<1x8x128xf32>
    %320 = vector.shape_cast %319 : vector<1x8x128xf32> to vector<8x128xf32>
    %321 = vector.shape_cast %317 : vector<8x128xf32> to vector<1x8x128xf32>
    tpu.vector_store %arg18[%318, %c0_74, %c0_75], %321 {strides = array<i32>} : memref<8x8x128xf32, #tpu.memory_space<vmem>>, vector<1x8x128xf32>,
    %c8_i32 = arith.constant 8 : i32
    %c0_76 = arith.constant 0 : index
    %c0_77 = arith.constant 0 : index
    %322 = vector.load %arg19[%c0_76, %c0_77] : memref<8x128xf32, #tpu.memory_space<vmem>>, vector<8x128xf32>
    tpu.vector_store %arg19[%c0_76, %c0_77], %25 {strides = array<i32>} : memref<8x128xf32, #tpu.memory_space<vmem>>, vector<8x128xf32>,
    %cst_78 = arith.constant 0xFF800000 : f32
    %323 = vector.broadcast %cst_78 : f32 to vector<8x128xf32>
    %c0_79 = arith.constant 0 : index
    %c0_80 = arith.constant 0 : index
    %324 = vector.load %arg20[%c0_79, %c0_80] : memref<8x128xf32, #tpu.memory_space<vmem>>, vector<8x128xf32>
    tpu.vector_store %arg20[%c0_79, %c0_80], %323 {strides = array<i32>} : memref<8x128xf32, #tpu.memory_space<vmem>>, vector<8x128xf32>,
    %c0_i32_81 = arith.constant 0 : i32
    %c7_i32_82 = arith.constant 7 : i32
    %325 = arith.subi %c7_i32_82, %c0_i32_81 : i32
    %326 = vector.broadcast %325 : i32 to vector<8x1xi32>
    %327 = arith.cmpi slt, %326, %24 : vector<8x1xi32>
    %328 = arith.extui %327 : vector<8x1xi1> to vector<8x1xi32>
    %329 = arith.sitofp %328 : vector<8x1xi32> to vector<8x1xf32>
    %330 = arith.index_cast %325 : i32 to index
    %c0_83 = arith.constant 0 : index
    %c0_84 = arith.constant 0 : index
    %331 = vector.load %arg17[%330, %c0_83, %c0_84] : memref<8x8x384xf32, #tpu.memory_space<vmem>>, vector<1x8x384xf32>
    %332 = vector.shape_cast %331 : vector<1x8x384xf32> to vector<8x384xf32>
    %cst_85 = arith.constant dense<0.000000e+00> : vector<8x384xf32>
    %333 = tpu.matmul %25, %17, %cst_85 {dimension_numbers = #tpu.dot_dimension_numbers<[1], [0], [0], [1], [0, 0, 1, 1], [], []>} : vector<8x128xf32>, vector<128x384xf32>, vector<8x384xf32> -> vector<8x384xf32>
    %334 = vector.extract_strided_slice %332 {offsets = [0, 0], sizes = [8, 256], strides = [1, 1]} : vector<8x384xf32> to vector<8x256xf32>
    %335 = vector.extract_strided_slice %333 {offsets = [0, 0], sizes = [8, 256], strides = [1, 1]} : vector<8x384xf32> to vector<8x256xf32>
    %336 = arith.addf %334, %335 : vector<8x256xf32>
    %337 = arith.negf %336 : vector<8x256xf32>
    %338 = math.exp %337 : vector<8x256xf32>
    %cst_86 = arith.constant 1.000000e+00 : f32
    %339 = vector.broadcast %cst_86 : f32 to vector<8x256xf32>
    %340 = arith.addf %339, %338 : vector<8x256xf32>
    %341 = arith.divf %339, %340 : vector<8x256xf32>
    %342 = vector.extract_strided_slice %341 {offsets = [0, 0], sizes = [8, 128], strides = [1, 1]} : vector<8x256xf32> to vector<8x128xf32>
    %343 = vector.extract_strided_slice %341 {offsets = [0, 128], sizes = [8, 128], strides = [1, 1]} : vector<8x256xf32> to vector<8x128xf32>
    %344 = vector.extract_strided_slice %332 {offsets = [0, 256], sizes = [8, 128], strides = [1, 1]} : vector<8x384xf32> to vector<8x128xf32>
    %345 = vector.extract_strided_slice %333 {offsets = [0, 256], sizes = [8, 128], strides = [1, 1]} : vector<8x384xf32> to vector<8x128xf32>
    %346 = arith.addf %345, %23 : vector<8x128xf32>
    %347 = arith.mulf %342, %346 : vector<8x128xf32>
    %348 = arith.addf %344, %347 : vector<8x128xf32>
    %349 = math.tanh %348 : vector<8x128xf32>
    %350 = arith.subf %25, %349 : vector<8x128xf32>
    %351 = arith.mulf %343, %350 : vector<8x128xf32>
    %352 = arith.addf %349, %351 : vector<8x128xf32>
    %353 = arith.subf %352, %25 : vector<8x128xf32>
    %354 = vector.broadcast %329 : vector<8x1xf32> to vector<8x128xf32>
    %355 = arith.mulf %354, %353 : vector<8x128xf32>
    %356 = arith.addf %25, %355 : vector<8x128xf32>
    %357 = arith.index_cast %325 : i32 to index
    %c0_87 = arith.constant 0 : index
    %c0_88 = arith.constant 0 : index
    %358 = vector.load %arg18[%357, %c0_87, %c0_88] : memref<8x8x128xf32, #tpu.memory_space<vmem>>, vector<1x8x128xf32>
    %359 = vector.shape_cast %358 : vector<1x8x128xf32> to vector<8x128xf32>
    %360 = vector.broadcast %329 : vector<8x1xf32> to vector<8x128xf32>
    %361 = arith.mulf %360, %356 : vector<8x128xf32>
    %362 = arith.addf %359, %361 : vector<8x128xf32>
    %c0_89 = arith.constant 0 : index
    %c0_90 = arith.constant 0 : index
    %363 = vector.load %arg19[%c0_89, %c0_90] : memref<8x128xf32, #tpu.memory_space<vmem>>, vector<8x128xf32>
    %364 = arith.addf %363, %362 : vector<8x128xf32>
    %c0_91 = arith.constant 0 : index
    %c0_92 = arith.constant 0 : index
    %365 = vector.load %arg19[%c0_91, %c0_92] : memref<8x128xf32, #tpu.memory_space<vmem>>, vector<8x128xf32>
    tpu.vector_store %arg19[%c0_91, %c0_92], %364 {strides = array<i32>} : memref<8x128xf32, #tpu.memory_space<vmem>>, vector<8x128xf32>,
    %c0_93 = arith.constant 0 : index
    %c0_94 = arith.constant 0 : index
    %366 = vector.load %arg20[%c0_93, %c0_94] : memref<8x128xf32, #tpu.memory_space<vmem>>, vector<8x128xf32>
    %367 = arith.maximumf %366, %362 : vector<8x128xf32>
    %c0_95 = arith.constant 0 : index
    %c0_96 = arith.constant 0 : index
    %368 = vector.load %arg20[%c0_95, %c0_96] : memref<8x128xf32, #tpu.memory_space<vmem>>, vector<8x128xf32>
    tpu.vector_store %arg20[%c0_95, %c0_96], %367 {strides = array<i32>} : memref<8x128xf32, #tpu.memory_space<vmem>>, vector<8x128xf32>,
    %c1_i32_97 = arith.constant 1 : i32
    %c7_i32_98 = arith.constant 7 : i32
    %369 = arith.subi %c7_i32_98, %c1_i32_97 : i32
    %370 = vector.broadcast %369 : i32 to vector<8x1xi32>
    %371 = arith.cmpi slt, %370, %24 : vector<8x1xi32>
    %372 = arith.extui %371 : vector<8x1xi1> to vector<8x1xi32>
    %373 = arith.sitofp %372 : vector<8x1xi32> to vector<8x1xf32>
    %374 = arith.index_cast %369 : i32 to index
    %c0_99 = arith.constant 0 : index
    %c0_100 = arith.constant 0 : index
    %375 = vector.load %arg17[%374, %c0_99, %c0_100] : memref<8x8x384xf32, #tpu.memory_space<vmem>>, vector<1x8x384xf32>
    %376 = vector.shape_cast %375 : vector<1x8x384xf32> to vector<8x384xf32>
    %cst_101 = arith.constant dense<0.000000e+00> : vector<8x384xf32>
    %377 = tpu.matmul %356, %17, %cst_101 {dimension_numbers = #tpu.dot_dimension_numbers<[1], [0], [0], [1], [0, 0, 1, 1], [], []>} : vector<8x128xf32>, vector<128x384xf32>, vector<8x384xf32> -> vector<8x384xf32>
    %378 = vector.extract_strided_slice %376 {offsets = [0, 0], sizes = [8, 256], strides = [1, 1]} : vector<8x384xf32> to vector<8x256xf32>
    %379 = vector.extract_strided_slice %377 {offsets = [0, 0], sizes = [8, 256], strides = [1, 1]} : vector<8x384xf32> to vector<8x256xf32>
    %380 = arith.addf %378, %379 : vector<8x256xf32>
    %381 = arith.negf %380 : vector<8x256xf32>
    %382 = math.exp %381 : vector<8x256xf32>
    %cst_102 = arith.constant 1.000000e+00 : f32
    %383 = vector.broadcast %cst_102 : f32 to vector<8x256xf32>
    %384 = arith.addf %383, %382 : vector<8x256xf32>
    %385 = arith.divf %383, %384 : vector<8x256xf32>
    %386 = vector.extract_strided_slice %385 {offsets = [0, 0], sizes = [8, 128], strides = [1, 1]} : vector<8x256xf32> to vector<8x128xf32>
    %387 = vector.extract_strided_slice %385 {offsets = [0, 128], sizes = [8, 128], strides = [1, 1]} : vector<8x256xf32> to vector<8x128xf32>
    %388 = vector.extract_strided_slice %376 {offsets = [0, 256], sizes = [8, 128], strides = [1, 1]} : vector<8x384xf32> to vector<8x128xf32>
    %389 = vector.extract_strided_slice %377 {offsets = [0, 256], sizes = [8, 128], strides = [1, 1]} : vector<8x384xf32> to vector<8x128xf32>
    %390 = arith.addf %389, %23 : vector<8x128xf32>
    %391 = arith.mulf %386, %390 : vector<8x128xf32>
    %392 = arith.addf %388, %391 : vector<8x128xf32>
    %393 = math.tanh %392 : vector<8x128xf32>
    %394 = arith.subf %356, %393 : vector<8x128xf32>
    %395 = arith.mulf %387, %394 : vector<8x128xf32>
    %396 = arith.addf %393, %395 : vector<8x128xf32>
    %397 = arith.subf %396, %356 : vector<8x128xf32>
    %398 = vector.broadcast %373 : vector<8x1xf32> to vector<8x128xf32>
    %399 = arith.mulf %398, %397 : vector<8x128xf32>
    %400 = arith.addf %356, %399 : vector<8x128xf32>
    %401 = arith.index_cast %369 : i32 to index
    %c0_103 = arith.constant 0 : index
    %c0_104 = arith.constant 0 : index
    %402 = vector.load %arg18[%401, %c0_103, %c0_104] : memref<8x8x128xf32, #tpu.memory_space<vmem>>, vector<1x8x128xf32>
    %403 = vector.shape_cast %402 : vector<1x8x128xf32> to vector<8x128xf32>
    %404 = vector.broadcast %373 : vector<8x1xf32> to vector<8x128xf32>
    %405 = arith.mulf %404, %400 : vector<8x128xf32>
    %406 = arith.addf %403, %405 : vector<8x128xf32>
    %c0_105 = arith.constant 0 : index
    %c0_106 = arith.constant 0 : index
    %407 = vector.load %arg19[%c0_105, %c0_106] : memref<8x128xf32, #tpu.memory_space<vmem>>, vector<8x128xf32>
    %408 = arith.addf %407, %406 : vector<8x128xf32>
    %c0_107 = arith.constant 0 : index
    %c0_108 = arith.constant 0 : index
    %409 = vector.load %arg19[%c0_107, %c0_108] : memref<8x128xf32, #tpu.memory_space<vmem>>, vector<8x128xf32>
    tpu.vector_store %arg19[%c0_107, %c0_108], %408 {strides = array<i32>} : memref<8x128xf32, #tpu.memory_space<vmem>>, vector<8x128xf32>,
    %c0_109 = arith.constant 0 : index
    %c0_110 = arith.constant 0 : index
    %410 = vector.load %arg20[%c0_109, %c0_110] : memref<8x128xf32, #tpu.memory_space<vmem>>, vector<8x128xf32>
    %411 = arith.maximumf %410, %406 : vector<8x128xf32>
    %c0_111 = arith.constant 0 : index
    %c0_112 = arith.constant 0 : index
    %412 = vector.load %arg20[%c0_111, %c0_112] : memref<8x128xf32, #tpu.memory_space<vmem>>, vector<8x128xf32>
    tpu.vector_store %arg20[%c0_111, %c0_112], %411 {strides = array<i32>} : memref<8x128xf32, #tpu.memory_space<vmem>>, vector<8x128xf32>,
    %c2_i32_113 = arith.constant 2 : i32
    %c7_i32_114 = arith.constant 7 : i32
    %413 = arith.subi %c7_i32_114, %c2_i32_113 : i32
    %414 = vector.broadcast %413 : i32 to vector<8x1xi32>
    %415 = arith.cmpi slt, %414, %24 : vector<8x1xi32>
    %416 = arith.extui %415 : vector<8x1xi1> to vector<8x1xi32>
    %417 = arith.sitofp %416 : vector<8x1xi32> to vector<8x1xf32>
    %418 = arith.index_cast %413 : i32 to index
    %c0_115 = arith.constant 0 : index
    %c0_116 = arith.constant 0 : index
    %419 = vector.load %arg17[%418, %c0_115, %c0_116] : memref<8x8x384xf32, #tpu.memory_space<vmem>>, vector<1x8x384xf32>
    %420 = vector.shape_cast %419 : vector<1x8x384xf32> to vector<8x384xf32>
    %cst_117 = arith.constant dense<0.000000e+00> : vector<8x384xf32>
    %421 = tpu.matmul %400, %17, %cst_117 {dimension_numbers = #tpu.dot_dimension_numbers<[1], [0], [0], [1], [0, 0, 1, 1], [], []>} : vector<8x128xf32>, vector<128x384xf32>, vector<8x384xf32> -> vector<8x384xf32>
    %422 = vector.extract_strided_slice %420 {offsets = [0, 0], sizes = [8, 256], strides = [1, 1]} : vector<8x384xf32> to vector<8x256xf32>
    %423 = vector.extract_strided_slice %421 {offsets = [0, 0], sizes = [8, 256], strides = [1, 1]} : vector<8x384xf32> to vector<8x256xf32>
    %424 = arith.addf %422, %423 : vector<8x256xf32>
    %425 = arith.negf %424 : vector<8x256xf32>
    %426 = math.exp %425 : vector<8x256xf32>
    %cst_118 = arith.constant 1.000000e+00 : f32
    %427 = vector.broadcast %cst_118 : f32 to vector<8x256xf32>
    %428 = arith.addf %427, %426 : vector<8x256xf32>
    %429 = arith.divf %427, %428 : vector<8x256xf32>
    %430 = vector.extract_strided_slice %429 {offsets = [0, 0], sizes = [8, 128], strides = [1, 1]} : vector<8x256xf32> to vector<8x128xf32>
    %431 = vector.extract_strided_slice %429 {offsets = [0, 128], sizes = [8, 128], strides = [1, 1]} : vector<8x256xf32> to vector<8x128xf32>
    %432 = vector.extract_strided_slice %420 {offsets = [0, 256], sizes = [8, 128], strides = [1, 1]} : vector<8x384xf32> to vector<8x128xf32>
    %433 = vector.extract_strided_slice %421 {offsets = [0, 256], sizes = [8, 128], strides = [1, 1]} : vector<8x384xf32> to vector<8x128xf32>
    %434 = arith.addf %433, %23 : vector<8x128xf32>
    %435 = arith.mulf %430, %434 : vector<8x128xf32>
    %436 = arith.addf %432, %435 : vector<8x128xf32>
    %437 = math.tanh %436 : vector<8x128xf32>
    %438 = arith.subf %400, %437 : vector<8x128xf32>
    %439 = arith.mulf %431, %438 : vector<8x128xf32>
    %440 = arith.addf %437, %439 : vector<8x128xf32>
    %441 = arith.subf %440, %400 : vector<8x128xf32>
    %442 = vector.broadcast %417 : vector<8x1xf32> to vector<8x128xf32>
    %443 = arith.mulf %442, %441 : vector<8x128xf32>
    %444 = arith.addf %400, %443 : vector<8x128xf32>
    %445 = arith.index_cast %413 : i32 to index
    %c0_119 = arith.constant 0 : index
    %c0_120 = arith.constant 0 : index
    %446 = vector.load %arg18[%445, %c0_119, %c0_120] : memref<8x8x128xf32, #tpu.memory_space<vmem>>, vector<1x8x128xf32>
    %447 = vector.shape_cast %446 : vector<1x8x128xf32> to vector<8x128xf32>
    %448 = vector.broadcast %417 : vector<8x1xf32> to vector<8x128xf32>
    %449 = arith.mulf %448, %444 : vector<8x128xf32>
    %450 = arith.addf %447, %449 : vector<8x128xf32>
    %c0_121 = arith.constant 0 : index
    %c0_122 = arith.constant 0 : index
    %451 = vector.load %arg19[%c0_121, %c0_122] : memref<8x128xf32, #tpu.memory_space<vmem>>, vector<8x128xf32>
    %452 = arith.addf %451, %450 : vector<8x128xf32>
    %c0_123 = arith.constant 0 : index
    %c0_124 = arith.constant 0 : index
    %453 = vector.load %arg19[%c0_123, %c0_124] : memref<8x128xf32, #tpu.memory_space<vmem>>, vector<8x128xf32>
    tpu.vector_store %arg19[%c0_123, %c0_124], %452 {strides = array<i32>} : memref<8x128xf32, #tpu.memory_space<vmem>>, vector<8x128xf32>,
    %c0_125 = arith.constant 0 : index
    %c0_126 = arith.constant 0 : index
    %454 = vector.load %arg20[%c0_125, %c0_126] : memref<8x128xf32, #tpu.memory_space<vmem>>, vector<8x128xf32>
    %455 = arith.maximumf %454, %450 : vector<8x128xf32>
    %c0_127 = arith.constant 0 : index
    %c0_128 = arith.constant 0 : index
    %456 = vector.load %arg20[%c0_127, %c0_128] : memref<8x128xf32, #tpu.memory_space<vmem>>, vector<8x128xf32>
    tpu.vector_store %arg20[%c0_127, %c0_128], %455 {strides = array<i32>} : memref<8x128xf32, #tpu.memory_space<vmem>>, vector<8x128xf32>,
    %c3_i32_129 = arith.constant 3 : i32
    %c7_i32_130 = arith.constant 7 : i32
    %457 = arith.subi %c7_i32_130, %c3_i32_129 : i32
    %458 = vector.broadcast %457 : i32 to vector<8x1xi32>
    %459 = arith.cmpi slt, %458, %24 : vector<8x1xi32>
    %460 = arith.extui %459 : vector<8x1xi1> to vector<8x1xi32>
    %461 = arith.sitofp %460 : vector<8x1xi32> to vector<8x1xf32>
    %462 = arith.index_cast %457 : i32 to index
    %c0_131 = arith.constant 0 : index
    %c0_132 = arith.constant 0 : index
    %463 = vector.load %arg17[%462, %c0_131, %c0_132] : memref<8x8x384xf32, #tpu.memory_space<vmem>>, vector<1x8x384xf32>
    %464 = vector.shape_cast %463 : vector<1x8x384xf32> to vector<8x384xf32>
    %cst_133 = arith.constant dense<0.000000e+00> : vector<8x384xf32>
    %465 = tpu.matmul %444, %17, %cst_133 {dimension_numbers = #tpu.dot_dimension_numbers<[1], [0], [0], [1], [0, 0, 1, 1], [], []>} : vector<8x128xf32>, vector<128x384xf32>, vector<8x384xf32> -> vector<8x384xf32>
    %466 = vector.extract_strided_slice %464 {offsets = [0, 0], sizes = [8, 256], strides = [1, 1]} : vector<8x384xf32> to vector<8x256xf32>
    %467 = vector.extract_strided_slice %465 {offsets = [0, 0], sizes = [8, 256], strides = [1, 1]} : vector<8x384xf32> to vector<8x256xf32>
    %468 = arith.addf %466, %467 : vector<8x256xf32>
    %469 = arith.negf %468 : vector<8x256xf32>
    %470 = math.exp %469 : vector<8x256xf32>
    %cst_134 = arith.constant 1.000000e+00 : f32
    %471 = vector.broadcast %cst_134 : f32 to vector<8x256xf32>
    %472 = arith.addf %471, %470 : vector<8x256xf32>
    %473 = arith.divf %471, %472 : vector<8x256xf32>
    %474 = vector.extract_strided_slice %473 {offsets = [0, 0], sizes = [8, 128], strides = [1, 1]} : vector<8x256xf32> to vector<8x128xf32>
    %475 = vector.extract_strided_slice %473 {offsets = [0, 128], sizes = [8, 128], strides = [1, 1]} : vector<8x256xf32> to vector<8x128xf32>
    %476 = vector.extract_strided_slice %464 {offsets = [0, 256], sizes = [8, 128], strides = [1, 1]} : vector<8x384xf32> to vector<8x128xf32>
    %477 = vector.extract_strided_slice %465 {offsets = [0, 256], sizes = [8, 128], strides = [1, 1]} : vector<8x384xf32> to vector<8x128xf32>
    %478 = arith.addf %477, %23 : vector<8x128xf32>
    %479 = arith.mulf %474, %478 : vector<8x128xf32>
    %480 = arith.addf %476, %479 : vector<8x128xf32>
    %481 = math.tanh %480 : vector<8x128xf32>
    %482 = arith.subf %444, %481 : vector<8x128xf32>
    %483 = arith.mulf %475, %482 : vector<8x128xf32>
    %484 = arith.addf %481, %483 : vector<8x128xf32>
    %485 = arith.subf %484, %444 : vector<8x128xf32>
    %486 = vector.broadcast %461 : vector<8x1xf32> to vector<8x128xf32>
    %487 = arith.mulf %486, %485 : vector<8x128xf32>
    %488 = arith.addf %444, %487 : vector<8x128xf32>
    %489 = arith.index_cast %457 : i32 to index
    %c0_135 = arith.constant 0 : index
    %c0_136 = arith.constant 0 : index
    %490 = vector.load %arg18[%489, %c0_135, %c0_136] : memref<8x8x128xf32, #tpu.memory_space<vmem>>, vector<1x8x128xf32>
    %491 = vector.shape_cast %490 : vector<1x8x128xf32> to vector<8x128xf32>
    %492 = vector.broadcast %461 : vector<8x1xf32> to vector<8x128xf32>
    %493 = arith.mulf %492, %488 : vector<8x128xf32>
    %494 = arith.addf %491, %493 : vector<8x128xf32>
    %c0_137 = arith.constant 0 : index
    %c0_138 = arith.constant 0 : index
    %495 = vector.load %arg19[%c0_137, %c0_138] : memref<8x128xf32, #tpu.memory_space<vmem>>, vector<8x128xf32>
    %496 = arith.addf %495, %494 : vector<8x128xf32>
    %c0_139 = arith.constant 0 : index
    %c0_140 = arith.constant 0 : index
    %497 = vector.load %arg19[%c0_139, %c0_140] : memref<8x128xf32, #tpu.memory_space<vmem>>, vector<8x128xf32>
    tpu.vector_store %arg19[%c0_139, %c0_140], %496 {strides = array<i32>} : memref<8x128xf32, #tpu.memory_space<vmem>>, vector<8x128xf32>,
    %c0_141 = arith.constant 0 : index
    %c0_142 = arith.constant 0 : index
    %498 = vector.load %arg20[%c0_141, %c0_142] : memref<8x128xf32, #tpu.memory_space<vmem>>, vector<8x128xf32>
    %499 = arith.maximumf %498, %494 : vector<8x128xf32>
    %c0_143 = arith.constant 0 : index
    %c0_144 = arith.constant 0 : index
    %500 = vector.load %arg20[%c0_143, %c0_144] : memref<8x128xf32, #tpu.memory_space<vmem>>, vector<8x128xf32>
    tpu.vector_store %arg20[%c0_143, %c0_144], %499 {strides = array<i32>} : memref<8x128xf32, #tpu.memory_space<vmem>>, vector<8x128xf32>,
    %c4_i32_145 = arith.constant 4 : i32
    %c7_i32_146 = arith.constant 7 : i32
    %501 = arith.subi %c7_i32_146, %c4_i32_145 : i32
    %502 = vector.broadcast %501 : i32 to vector<8x1xi32>
    %503 = arith.cmpi slt, %502, %24 : vector<8x1xi32>
    %504 = arith.extui %503 : vector<8x1xi1> to vector<8x1xi32>
    %505 = arith.sitofp %504 : vector<8x1xi32> to vector<8x1xf32>
    %506 = arith.index_cast %501 : i32 to index
    %c0_147 = arith.constant 0 : index
    %c0_148 = arith.constant 0 : index
    %507 = vector.load %arg17[%506, %c0_147, %c0_148] : memref<8x8x384xf32, #tpu.memory_space<vmem>>, vector<1x8x384xf32>
    %508 = vector.shape_cast %507 : vector<1x8x384xf32> to vector<8x384xf32>
    %cst_149 = arith.constant dense<0.000000e+00> : vector<8x384xf32>
    %509 = tpu.matmul %488, %17, %cst_149 {dimension_numbers = #tpu.dot_dimension_numbers<[1], [0], [0], [1], [0, 0, 1, 1], [], []>} : vector<8x128xf32>, vector<128x384xf32>, vector<8x384xf32> -> vector<8x384xf32>
    %510 = vector.extract_strided_slice %508 {offsets = [0, 0], sizes = [8, 256], strides = [1, 1]} : vector<8x384xf32> to vector<8x256xf32>
    %511 = vector.extract_strided_slice %509 {offsets = [0, 0], sizes = [8, 256], strides = [1, 1]} : vector<8x384xf32> to vector<8x256xf32>
    %512 = arith.addf %510, %511 : vector<8x256xf32>
    %513 = arith.negf %512 : vector<8x256xf32>
    %514 = math.exp %513 : vector<8x256xf32>
    %cst_150 = arith.constant 1.000000e+00 : f32
    %515 = vector.broadcast %cst_150 : f32 to vector<8x256xf32>
    %516 = arith.addf %515, %514 : vector<8x256xf32>
    %517 = arith.divf %515, %516 : vector<8x256xf32>
    %518 = vector.extract_strided_slice %517 {offsets = [0, 0], sizes = [8, 128], strides = [1, 1]} : vector<8x256xf32> to vector<8x128xf32>
    %519 = vector.extract_strided_slice %517 {offsets = [0, 128], sizes = [8, 128], strides = [1, 1]} : vector<8x256xf32> to vector<8x128xf32>
    %520 = vector.extract_strided_slice %508 {offsets = [0, 256], sizes = [8, 128], strides = [1, 1]} : vector<8x384xf32> to vector<8x128xf32>
    %521 = vector.extract_strided_slice %509 {offsets = [0, 256], sizes = [8, 128], strides = [1, 1]} : vector<8x384xf32> to vector<8x128xf32>
    %522 = arith.addf %521, %23 : vector<8x128xf32>
    %523 = arith.mulf %518, %522 : vector<8x128xf32>
    %524 = arith.addf %520, %523 : vector<8x128xf32>
    %525 = math.tanh %524 : vector<8x128xf32>
    %526 = arith.subf %488, %525 : vector<8x128xf32>
    %527 = arith.mulf %519, %526 : vector<8x128xf32>
    %528 = arith.addf %525, %527 : vector<8x128xf32>
    %529 = arith.subf %528, %488 : vector<8x128xf32>
    %530 = vector.broadcast %505 : vector<8x1xf32> to vector<8x128xf32>
    %531 = arith.mulf %530, %529 : vector<8x128xf32>
    %532 = arith.addf %488, %531 : vector<8x128xf32>
    %533 = arith.index_cast %501 : i32 to index
    %c0_151 = arith.constant 0 : index
    %c0_152 = arith.constant 0 : index
    %534 = vector.load %arg18[%533, %c0_151, %c0_152] : memref<8x8x128xf32, #tpu.memory_space<vmem>>, vector<1x8x128xf32>
    %535 = vector.shape_cast %534 : vector<1x8x128xf32> to vector<8x128xf32>
    %536 = vector.broadcast %505 : vector<8x1xf32> to vector<8x128xf32>
    %537 = arith.mulf %536, %532 : vector<8x128xf32>
    %538 = arith.addf %535, %537 : vector<8x128xf32>
    %c0_153 = arith.constant 0 : index
    %c0_154 = arith.constant 0 : index
    %539 = vector.load %arg19[%c0_153, %c0_154] : memref<8x128xf32, #tpu.memory_space<vmem>>, vector<8x128xf32>
    %540 = arith.addf %539, %538 : vector<8x128xf32>
    %c0_155 = arith.constant 0 : index
    %c0_156 = arith.constant 0 : index
    %541 = vector.load %arg19[%c0_155, %c0_156] : memref<8x128xf32, #tpu.memory_space<vmem>>, vector<8x128xf32>
    tpu.vector_store %arg19[%c0_155, %c0_156], %540 {strides = array<i32>} : memref<8x128xf32, #tpu.memory_space<vmem>>, vector<8x128xf32>,
    %c0_157 = arith.constant 0 : index
    %c0_158 = arith.constant 0 : index
    %542 = vector.load %arg20[%c0_157, %c0_158] : memref<8x128xf32, #tpu.memory_space<vmem>>, vector<8x128xf32>
    %543 = arith.maximumf %542, %538 : vector<8x128xf32>
    %c0_159 = arith.constant 0 : index
    %c0_160 = arith.constant 0 : index
    %544 = vector.load %arg20[%c0_159, %c0_160] : memref<8x128xf32, #tpu.memory_space<vmem>>, vector<8x128xf32>
    tpu.vector_store %arg20[%c0_159, %c0_160], %543 {strides = array<i32>} : memref<8x128xf32, #tpu.memory_space<vmem>>, vector<8x128xf32>,
    %c5_i32_161 = arith.constant 5 : i32
    %c7_i32_162 = arith.constant 7 : i32
    %545 = arith.subi %c7_i32_162, %c5_i32_161 : i32
    %546 = vector.broadcast %545 : i32 to vector<8x1xi32>
    %547 = arith.cmpi slt, %546, %24 : vector<8x1xi32>
    %548 = arith.extui %547 : vector<8x1xi1> to vector<8x1xi32>
    %549 = arith.sitofp %548 : vector<8x1xi32> to vector<8x1xf32>
    %550 = arith.index_cast %545 : i32 to index
    %c0_163 = arith.constant 0 : index
    %c0_164 = arith.constant 0 : index
    %551 = vector.load %arg17[%550, %c0_163, %c0_164] : memref<8x8x384xf32, #tpu.memory_space<vmem>>, vector<1x8x384xf32>
    %552 = vector.shape_cast %551 : vector<1x8x384xf32> to vector<8x384xf32>
    %cst_165 = arith.constant dense<0.000000e+00> : vector<8x384xf32>
    %553 = tpu.matmul %532, %17, %cst_165 {dimension_numbers = #tpu.dot_dimension_numbers<[1], [0], [0], [1], [0, 0, 1, 1], [], []>} : vector<8x128xf32>, vector<128x384xf32>, vector<8x384xf32> -> vector<8x384xf32>
    %554 = vector.extract_strided_slice %552 {offsets = [0, 0], sizes = [8, 256], strides = [1, 1]} : vector<8x384xf32> to vector<8x256xf32>
    %555 = vector.extract_strided_slice %553 {offsets = [0, 0], sizes = [8, 256], strides = [1, 1]} : vector<8x384xf32> to vector<8x256xf32>
    %556 = arith.addf %554, %555 : vector<8x256xf32>
    %557 = arith.negf %556 : vector<8x256xf32>
    %558 = math.exp %557 : vector<8x256xf32>
    %cst_166 = arith.constant 1.000000e+00 : f32
    %559 = vector.broadcast %cst_166 : f32 to vector<8x256xf32>
    %560 = arith.addf %559, %558 : vector<8x256xf32>
    %561 = arith.divf %559, %560 : vector<8x256xf32>
    %562 = vector.extract_strided_slice %561 {offsets = [0, 0], sizes = [8, 128], strides = [1, 1]} : vector<8x256xf32> to vector<8x128xf32>
    %563 = vector.extract_strided_slice %561 {offsets = [0, 128], sizes = [8, 128], strides = [1, 1]} : vector<8x256xf32> to vector<8x128xf32>
    %564 = vector.extract_strided_slice %552 {offsets = [0, 256], sizes = [8, 128], strides = [1, 1]} : vector<8x384xf32> to vector<8x128xf32>
    %565 = vector.extract_strided_slice %553 {offsets = [0, 256], sizes = [8, 128], strides = [1, 1]} : vector<8x384xf32> to vector<8x128xf32>
    %566 = arith.addf %565, %23 : vector<8x128xf32>
    %567 = arith.mulf %562, %566 : vector<8x128xf32>
    %568 = arith.addf %564, %567 : vector<8x128xf32>
    %569 = math.tanh %568 : vector<8x128xf32>
    %570 = arith.subf %532, %569 : vector<8x128xf32>
    %571 = arith.mulf %563, %570 : vector<8x128xf32>
    %572 = arith.addf %569, %571 : vector<8x128xf32>
    %573 = arith.subf %572, %532 : vector<8x128xf32>
    %574 = vector.broadcast %549 : vector<8x1xf32> to vector<8x128xf32>
    %575 = arith.mulf %574, %573 : vector<8x128xf32>
    %576 = arith.addf %532, %575 : vector<8x128xf32>
    %577 = arith.index_cast %545 : i32 to index
    %c0_167 = arith.constant 0 : index
    %c0_168 = arith.constant 0 : index
    %578 = vector.load %arg18[%577, %c0_167, %c0_168] : memref<8x8x128xf32, #tpu.memory_space<vmem>>, vector<1x8x128xf32>
    %579 = vector.shape_cast %578 : vector<1x8x128xf32> to vector<8x128xf32>
    %580 = vector.broadcast %549 : vector<8x1xf32> to vector<8x128xf32>
    %581 = arith.mulf %580, %576 : vector<8x128xf32>
    %582 = arith.addf %579, %581 : vector<8x128xf32>
    %c0_169 = arith.constant 0 : index
    %c0_170 = arith.constant 0 : index
    %583 = vector.load %arg19[%c0_169, %c0_170] : memref<8x128xf32, #tpu.memory_space<vmem>>, vector<8x128xf32>
    %584 = arith.addf %583, %582 : vector<8x128xf32>
    %c0_171 = arith.constant 0 : index
    %c0_172 = arith.constant 0 : index
    %585 = vector.load %arg19[%c0_171, %c0_172] : memref<8x128xf32, #tpu.memory_space<vmem>>, vector<8x128xf32>
    tpu.vector_store %arg19[%c0_171, %c0_172], %584 {strides = array<i32>} : memref<8x128xf32, #tpu.memory_space<vmem>>, vector<8x128xf32>,
    %c0_173 = arith.constant 0 : index
    %c0_174 = arith.constant 0 : index
    %586 = vector.load %arg20[%c0_173, %c0_174] : memref<8x128xf32, #tpu.memory_space<vmem>>, vector<8x128xf32>
    %587 = arith.maximumf %586, %582 : vector<8x128xf32>
    %c0_175 = arith.constant 0 : index
    %c0_176 = arith.constant 0 : index
    %588 = vector.load %arg20[%c0_175, %c0_176] : memref<8x128xf32, #tpu.memory_space<vmem>>, vector<8x128xf32>
    tpu.vector_store %arg20[%c0_175, %c0_176], %587 {strides = array<i32>} : memref<8x128xf32, #tpu.memory_space<vmem>>, vector<8x128xf32>,
    %c6_i32_177 = arith.constant 6 : i32
    %c7_i32_178 = arith.constant 7 : i32
    %589 = arith.subi %c7_i32_178, %c6_i32_177 : i32
    %590 = vector.broadcast %589 : i32 to vector<8x1xi32>
    %591 = arith.cmpi slt, %590, %24 : vector<8x1xi32>
    %592 = arith.extui %591 : vector<8x1xi1> to vector<8x1xi32>
    %593 = arith.sitofp %592 : vector<8x1xi32> to vector<8x1xf32>
    %594 = arith.index_cast %589 : i32 to index
    %c0_179 = arith.constant 0 : index
    %c0_180 = arith.constant 0 : index
    %595 = vector.load %arg17[%594, %c0_179, %c0_180] : memref<8x8x384xf32, #tpu.memory_space<vmem>>, vector<1x8x384xf32>
    %596 = vector.shape_cast %595 : vector<1x8x384xf32> to vector<8x384xf32>
    %cst_181 = arith.constant dense<0.000000e+00> : vector<8x384xf32>
    %597 = tpu.matmul %576, %17, %cst_181 {dimension_numbers = #tpu.dot_dimension_numbers<[1], [0], [0], [1], [0, 0, 1, 1], [], []>} : vector<8x128xf32>, vector<128x384xf32>, vector<8x384xf32> -> vector<8x384xf32>
    %598 = vector.extract_strided_slice %596 {offsets = [0, 0], sizes = [8, 256], strides = [1, 1]} : vector<8x384xf32> to vector<8x256xf32>
    %599 = vector.extract_strided_slice %597 {offsets = [0, 0], sizes = [8, 256], strides = [1, 1]} : vector<8x384xf32> to vector<8x256xf32>
    %600 = arith.addf %598, %599 : vector<8x256xf32>
    %601 = arith.negf %600 : vector<8x256xf32>
    %602 = math.exp %601 : vector<8x256xf32>
    %cst_182 = arith.constant 1.000000e+00 : f32
    %603 = vector.broadcast %cst_182 : f32 to vector<8x256xf32>
    %604 = arith.addf %603, %602 : vector<8x256xf32>
    %605 = arith.divf %603, %604 : vector<8x256xf32>
    %606 = vector.extract_strided_slice %605 {offsets = [0, 0], sizes = [8, 128], strides = [1, 1]} : vector<8x256xf32> to vector<8x128xf32>
    %607 = vector.extract_strided_slice %605 {offsets = [0, 128], sizes = [8, 128], strides = [1, 1]} : vector<8x256xf32> to vector<8x128xf32>
    %608 = vector.extract_strided_slice %596 {offsets = [0, 256], sizes = [8, 128], strides = [1, 1]} : vector<8x384xf32> to vector<8x128xf32>
    %609 = vector.extract_strided_slice %597 {offsets = [0, 256], sizes = [8, 128], strides = [1, 1]} : vector<8x384xf32> to vector<8x128xf32>
    %610 = arith.addf %609, %23 : vector<8x128xf32>
    %611 = arith.mulf %606, %610 : vector<8x128xf32>
    %612 = arith.addf %608, %611 : vector<8x128xf32>
    %613 = math.tanh %612 : vector<8x128xf32>
    %614 = arith.subf %576, %613 : vector<8x128xf32>
    %615 = arith.mulf %607, %614 : vector<8x128xf32>
    %616 = arith.addf %613, %615 : vector<8x128xf32>
    %617 = arith.subf %616, %576 : vector<8x128xf32>
    %618 = vector.broadcast %593 : vector<8x1xf32> to vector<8x128xf32>
    %619 = arith.mulf %618, %617 : vector<8x128xf32>
    %620 = arith.addf %576, %619 : vector<8x128xf32>
    %621 = arith.index_cast %589 : i32 to index
    %c0_183 = arith.constant 0 : index
    %c0_184 = arith.constant 0 : index
    %622 = vector.load %arg18[%621, %c0_183, %c0_184] : memref<8x8x128xf32, #tpu.memory_space<vmem>>, vector<1x8x128xf32>
    %623 = vector.shape_cast %622 : vector<1x8x128xf32> to vector<8x128xf32>
    %624 = vector.broadcast %593 : vector<8x1xf32> to vector<8x128xf32>
    %625 = arith.mulf %624, %620 : vector<8x128xf32>
    %626 = arith.addf %623, %625 : vector<8x128xf32>
    %c0_185 = arith.constant 0 : index
    %c0_186 = arith.constant 0 : index
    %627 = vector.load %arg19[%c0_185, %c0_186] : memref<8x128xf32, #tpu.memory_space<vmem>>, vector<8x128xf32>
    %628 = arith.addf %627, %626 : vector<8x128xf32>
    %c0_187 = arith.constant 0 : index
    %c0_188 = arith.constant 0 : index
    %629 = vector.load %arg19[%c0_187, %c0_188] : memref<8x128xf32, #tpu.memory_space<vmem>>, vector<8x128xf32>
    tpu.vector_store %arg19[%c0_187, %c0_188], %628 {strides = array<i32>} : memref<8x128xf32, #tpu.memory_space<vmem>>, vector<8x128xf32>,
    %c0_189 = arith.constant 0 : index
    %c0_190 = arith.constant 0 : index
    %630 = vector.load %arg20[%c0_189, %c0_190] : memref<8x128xf32, #tpu.memory_space<vmem>>, vector<8x128xf32>
    %631 = arith.maximumf %630, %626 : vector<8x128xf32>
    %c0_191 = arith.constant 0 : index
    %c0_192 = arith.constant 0 : index
    %632 = vector.load %arg20[%c0_191, %c0_192] : memref<8x128xf32, #tpu.memory_space<vmem>>, vector<8x128xf32>
    tpu.vector_store %arg20[%c0_191, %c0_192], %631 {strides = array<i32>} : memref<8x128xf32, #tpu.memory_space<vmem>>, vector<8x128xf32>,
    %c7_i32_193 = arith.constant 7 : i32
    %c7_i32_194 = arith.constant 7 : i32
    %633 = arith.subi %c7_i32_194, %c7_i32_193 : i32
    %634 = vector.broadcast %633 : i32 to vector<8x1xi32>
    %635 = arith.cmpi slt, %634, %24 : vector<8x1xi32>
    %636 = arith.extui %635 : vector<8x1xi1> to vector<8x1xi32>
    %637 = arith.sitofp %636 : vector<8x1xi32> to vector<8x1xf32>
    %638 = arith.index_cast %633 : i32 to index
    %c0_195 = arith.constant 0 : index
    %c0_196 = arith.constant 0 : index
    %639 = vector.load %arg17[%638, %c0_195, %c0_196] : memref<8x8x384xf32, #tpu.memory_space<vmem>>, vector<1x8x384xf32>
    %640 = vector.shape_cast %639 : vector<1x8x384xf32> to vector<8x384xf32>
    %cst_197 = arith.constant dense<0.000000e+00> : vector<8x384xf32>
    %641 = tpu.matmul %620, %17, %cst_197 {dimension_numbers = #tpu.dot_dimension_numbers<[1], [0], [0], [1], [0, 0, 1, 1], [], []>} : vector<8x128xf32>, vector<128x384xf32>, vector<8x384xf32> -> vector<8x384xf32>
    %642 = vector.extract_strided_slice %640 {offsets = [0, 0], sizes = [8, 256], strides = [1, 1]} : vector<8x384xf32> to vector<8x256xf32>
    %643 = vector.extract_strided_slice %641 {offsets = [0, 0], sizes = [8, 256], strides = [1, 1]} : vector<8x384xf32> to vector<8x256xf32>
    %644 = arith.addf %642, %643 : vector<8x256xf32>
    %645 = arith.negf %644 : vector<8x256xf32>
    %646 = math.exp %645 : vector<8x256xf32>
    %cst_198 = arith.constant 1.000000e+00 : f32
    %647 = vector.broadcast %cst_198 : f32 to vector<8x256xf32>
    %648 = arith.addf %647, %646 : vector<8x256xf32>
    %649 = arith.divf %647, %648 : vector<8x256xf32>
    %650 = vector.extract_strided_slice %649 {offsets = [0, 0], sizes = [8, 128], strides = [1, 1]} : vector<8x256xf32> to vector<8x128xf32>
    %651 = vector.extract_strided_slice %649 {offsets = [0, 128], sizes = [8, 128], strides = [1, 1]} : vector<8x256xf32> to vector<8x128xf32>
    %652 = vector.extract_strided_slice %640 {offsets = [0, 256], sizes = [8, 128], strides = [1, 1]} : vector<8x384xf32> to vector<8x128xf32>
    %653 = vector.extract_strided_slice %641 {offsets = [0, 256], sizes = [8, 128], strides = [1, 1]} : vector<8x384xf32> to vector<8x128xf32>
    %654 = arith.addf %653, %23 : vector<8x128xf32>
    %655 = arith.mulf %650, %654 : vector<8x128xf32>
    %656 = arith.addf %652, %655 : vector<8x128xf32>
    %657 = math.tanh %656 : vector<8x128xf32>
    %658 = arith.subf %620, %657 : vector<8x128xf32>
    %659 = arith.mulf %651, %658 : vector<8x128xf32>
    %660 = arith.addf %657, %659 : vector<8x128xf32>
    %661 = arith.subf %660, %620 : vector<8x128xf32>
    %662 = vector.broadcast %637 : vector<8x1xf32> to vector<8x128xf32>
    %663 = arith.mulf %662, %661 : vector<8x128xf32>
    %664 = arith.addf %620, %663 : vector<8x128xf32>
    %665 = arith.index_cast %633 : i32 to index
    %c0_199 = arith.constant 0 : index
    %c0_200 = arith.constant 0 : index
    %666 = vector.load %arg18[%665, %c0_199, %c0_200] : memref<8x8x128xf32, #tpu.memory_space<vmem>>, vector<1x8x128xf32>
    %667 = vector.shape_cast %666 : vector<1x8x128xf32> to vector<8x128xf32>
    %668 = vector.broadcast %637 : vector<8x1xf32> to vector<8x128xf32>
    %669 = arith.mulf %668, %664 : vector<8x128xf32>
    %670 = arith.addf %667, %669 : vector<8x128xf32>
    %c0_201 = arith.constant 0 : index
    %c0_202 = arith.constant 0 : index
    %671 = vector.load %arg19[%c0_201, %c0_202] : memref<8x128xf32, #tpu.memory_space<vmem>>, vector<8x128xf32>
    %672 = arith.addf %671, %670 : vector<8x128xf32>
    %c0_203 = arith.constant 0 : index
    %c0_204 = arith.constant 0 : index
    %673 = vector.load %arg19[%c0_203, %c0_204] : memref<8x128xf32, #tpu.memory_space<vmem>>, vector<8x128xf32>
    tpu.vector_store %arg19[%c0_203, %c0_204], %672 {strides = array<i32>} : memref<8x128xf32, #tpu.memory_space<vmem>>, vector<8x128xf32>,
    %c0_205 = arith.constant 0 : index
    %c0_206 = arith.constant 0 : index
    %674 = vector.load %arg20[%c0_205, %c0_206] : memref<8x128xf32, #tpu.memory_space<vmem>>, vector<8x128xf32>
    %675 = arith.maximumf %674, %670 : vector<8x128xf32>
    %c0_207 = arith.constant 0 : index
    %c0_208 = arith.constant 0 : index
    %676 = vector.load %arg20[%c0_207, %c0_208] : memref<8x128xf32, #tpu.memory_space<vmem>>, vector<8x128xf32>
    tpu.vector_store %arg20[%c0_207, %c0_208], %675 {strides = array<i32>} : memref<8x128xf32, #tpu.memory_space<vmem>>, vector<8x128xf32>,
    %c8_i32_209 = arith.constant 8 : i32
    %677 = arith.addf %315, %664 : vector<8x128xf32>
    %c0_210 = arith.constant 0 : index
    %c0_211 = arith.constant 0 : index
    %678 = vector.load %arg19[%c0_210, %c0_211] : memref<8x128xf32, #tpu.memory_space<vmem>>, vector<8x128xf32>
    %c0_212 = arith.constant 0 : index
    %c0_213 = arith.constant 0 : index
    %679 = vector.load %arg3[%c0_212, %c0_213] : memref<8x1xf32, #tpu.memory_space<vmem>>, vector<8x1xf32>
    %680 = vector.broadcast %679 : vector<8x1xf32> to vector<8x128xf32>
    %681 = arith.mulf %678, %680 : vector<8x128xf32>
    %c0_214 = arith.constant 0 : index
    %c0_215 = arith.constant 0 : index
    %682 = vector.load %arg20[%c0_214, %c0_215] : memref<8x128xf32, #tpu.memory_space<vmem>>, vector<8x128xf32>
    %c0_216 = arith.constant 0 : index
    %c0_217 = arith.constant 0 : index
    %683 = vector.load %arg4[%c0_216, %c0_217] : memref<8x128xf32, #tpu.memory_space<vmem>>, vector<8x128xf32>
    %684 = tpu.concatenate %677, %682, %681, %683 in 1 : vector<8x128xf32>, vector<8x128xf32>, vector<8x128xf32>, vector<8x128xf32> -> vector<8x512xf32>
    %c0_218 = arith.constant 0 : index
    %c0_219 = arith.constant 0 : index
    %685 = vector.load %arg13[%c0_218, %c0_219] : memref<512x128xf32, #tpu.memory_space<vmem>>, vector<512x128xf32>
    %cst_220 = arith.constant dense<0.000000e+00> : vector<8x128xf32>
    %686 = tpu.matmul %684, %685, %cst_220 {dimension_numbers = #tpu.dot_dimension_numbers<[1], [0], [0], [1], [0, 0, 1, 1], [], []>} : vector<8x512xf32>, vector<512x128xf32>, vector<8x128xf32> -> vector<8x128xf32>
    %c0_221 = arith.constant 0 : index
    %c0_222 = arith.constant 0 : index
    %687 = vector.load %arg14[%c0_221, %c0_222] : memref<1x128xf32, #tpu.memory_space<vmem>>, vector<1x128xf32>
    %688 = vector.broadcast %687 : vector<1x128xf32> to vector<8x128xf32>
    %689 = arith.addf %686, %688 : vector<8x128xf32>
    %c0_223 = arith.constant 0 : index
    %c0_224 = arith.constant 0 : index
    %690 = vector.load %arg15[%c0_223, %c0_224] : memref<8x128xf32, #tpu.memory_space<vmem>>, vector<8x128xf32>
    tpu.vector_store %arg15[%c0_223, %c0_224], %689 {strides = array<i32>} : memref<8x128xf32, #tpu.memory_space<vmem>>, vector<8x128xf32>,
    return
  }
  func.func @transform_0(%arg0: i32) -> (i32, i32, i32) {
    %c0_i32 = arith.constant 0 : i32
    %c0_i32_0 = arith.constant 0 : i32
    %c0_i32_1 = arith.constant 0 : i32
    return %c0_i32, %arg0, %c0_i32_0 : i32, i32, i32
  }
  func.func @transform_1(%arg0: i32) -> (i32, i32) {
    %c0_i32 = arith.constant 0 : i32
    %c0_i32_0 = arith.constant 0 : i32
    return %arg0, %c0_i32 : i32, i32
  }
  func.func @transform_2(%arg0: i32) -> (i32, i32) {
    %c0_i32 = arith.constant 0 : i32
    %c0_i32_0 = arith.constant 0 : i32
    return %arg0, %c0_i32 : i32, i32
  }
  func.func @transform_3(%arg0: i32) -> (i32, i32) {
    %c0_i32 = arith.constant 0 : i32
    %c0_i32_0 = arith.constant 0 : i32
    return %arg0, %c0_i32 : i32, i32
  }
  func.func @transform_4(%arg0: i32) -> (i32, i32) {
    %c0_i32 = arith.constant 0 : i32
    %c0_i32_0 = arith.constant 0 : i32
    %c0_i32_1 = arith.constant 0 : i32
    return %c0_i32, %c0_i32_0 : i32, i32
  }
  func.func @transform_5(%arg0: i32) -> (i32, i32) {
    %c0_i32 = arith.constant 0 : i32
    %c0_i32_0 = arith.constant 0 : i32
    %c0_i32_1 = arith.constant 0 : i32
    return %c0_i32, %c0_i32_0 : i32, i32
  }
  func.func @transform_6(%arg0: i32) -> (i32, i32) {
    %c0_i32 = arith.constant 0 : i32
    %c0_i32_0 = arith.constant 0 : i32
    %c0_i32_1 = arith.constant 0 : i32
    return %c0_i32, %c0_i32_0 : i32, i32
  }
  func.func @transform_7(%arg0: i32) -> (i32, i32) {
    %c0_i32 = arith.constant 0 : i32
    %c0_i32_0 = arith.constant 0 : i32
    %c0_i32_1 = arith.constant 0 : i32
    return %c0_i32, %c0_i32_0 : i32, i32
  }
  func.func @transform_8(%arg0: i32) -> (i32, i32) {
    %c0_i32 = arith.constant 0 : i32
    %c0_i32_0 = arith.constant 0 : i32
    %c0_i32_1 = arith.constant 0 : i32
    return %c0_i32, %c0_i32_0 : i32, i32
  }
  func.func @transform_9(%arg0: i32) -> (i32, i32) {
    %c0_i32 = arith.constant 0 : i32
    %c0_i32_0 = arith.constant 0 : i32
    %c0_i32_1 = arith.constant 0 : i32
    return %c0_i32, %c0_i32_0 : i32, i32
  }
  func.func @transform_10(%arg0: i32) -> (i32, i32) {
    %c0_i32 = arith.constant 0 : i32
    %c0_i32_0 = arith.constant 0 : i32
    %c0_i32_1 = arith.constant 0 : i32
    return %c0_i32, %c0_i32_0 : i32, i32
  }
  func.func @transform_11(%arg0: i32) -> (i32, i32) {
    %c0_i32 = arith.constant 0 : i32
    %c0_i32_0 = arith.constant 0 : i32
    %c0_i32_1 = arith.constant 0 : i32
    return %c0_i32, %c0_i32_0 : i32, i32
  }
  func.func @transform_12(%arg0: i32) -> (i32, i32) {
    %c0_i32 = arith.constant 0 : i32
    %c0_i32_0 = arith.constant 0 : i32
    %c0_i32_1 = arith.constant 0 : i32
    return %c0_i32, %c0_i32_0 : i32, i32
  }
  func.func @transform_13(%arg0: i32) -> (i32, i32) {
    %c0_i32 = arith.constant 0 : i32
    %c0_i32_0 = arith.constant 0 : i32
    %c0_i32_1 = arith.constant 0 : i32
    return %c0_i32, %c0_i32_0 : i32, i32
  }
  func.func @transform_14(%arg0: i32) -> (i32, i32) {
    %c0_i32 = arith.constant 0 : i32
    %c0_i32_0 = arith.constant 0 : i32
    return %arg0, %c0_i32 : i32, i32
  }
}

</mosaic_0001>

<llo_original>
// kernel: tpu_custom_call.1
$region0: #{tpu_custom_call.1}
  #allocation0 [shape = 'u32[]', space=smem, size = 0x4, offset = 0x4, fixed_abs, tag = 'smem constant byte address 0x4 - core index']
  #allocation1 [shape = 'u32[144,128]{1,0:T(1,128)}', space=vmem, size = 0x12000, scoped, tag = 'internal scratch']
  #allocation2 [shape = 'f32[8,8,384]{2,1,0:T(8,128)}', space=vmem, size = 0x18000, scoped, tag = 'scratch operand']
  #allocation3 [shape = 'f32[8,8,384]{2,1,0:T(8,128)}', space=vmem, size = 0x18000, scoped, tag = 'scratch operand']
  #allocation4 [shape = 'f32[8,8,128]{2,1,0:T(8,128)}', space=vmem, size = 0x8000, scoped, tag = 'scratch operand']
  #allocation5 [shape = 'f32[8,128]{1,0:T(8,128)}', space=vmem, size = 0x1000, scoped, tag = 'scratch operand']
  #allocation6 [shape = 'f32[8,128]{1,0:T(8,128)}', space=vmem, size = 0x1000, scoped, tag = 'scratch operand']
  %s0 = inlined_call_operand.hbm [shape: f32[8,8,128], index: 0, kind: input, shape index: {}]
  %s1 = inlined_call_operand.vmem [shape: s32[8,1], index: 1, kind: input, shape index: {}]
  %s2 = inlined_call_operand.vmem [shape: f32[8,1], index: 2, kind: input, shape index: {}]
  %s3 = inlined_call_operand.vmem [shape: f32[8,128], index: 3, kind: input, shape index: {}]
  %s4 = inlined_call_operand.hbm [shape: f32[128,384], index: 4, kind: input, shape index: {}]
  %s5 = inlined_call_operand.hbm [shape: f32[128,384], index: 5, kind: input, shape index: {}]
  %s6 = inlined_call_operand.vmem [shape: f32[1,384], index: 6, kind: input, shape index: {}]
  %s7 = inlined_call_operand.vmem [shape: f32[1,128], index: 7, kind: input, shape index: {}]
  %s8 = inlined_call_operand.hbm [shape: f32[128,384], index: 8, kind: input, shape index: {}]
  %s9 = inlined_call_operand.hbm [shape: f32[128,384], index: 9, kind: input, shape index: {}]
  %s10 = inlined_call_operand.vmem [shape: f32[1,384], index: 10, kind: input, shape index: {}]
  %s11 = inlined_call_operand.vmem [shape: f32[1,128], index: 11, kind: input, shape index: {}]
  %s12 = inlined_call_operand.hbm [shape: f32[512,128], index: 12, kind: input, shape index: {}]
  %s13 = inlined_call_operand.vmem [shape: f32[1,128], index: 13, kind: input, shape index: {}]
  %s14 = inlined_call_operand.hbm [shape: f32[8,128], index: 14, kind: output, shape index: {}]
  %s15 = sld [smem:[#allocation0]]
  $region90: #{tpu_custom_call.1} parent=0
    _
  %s17 = ssub.s32 1, %s15
  %s18 = scalar_select 0, %s17, %s15
  $region1: #{tpu_custom_call.1} parent=0
    #allocation7 [shape = 'u8[32768]{0}', space=vmem, size = 0x8000, scoped, tag = 'input window, operand 0, single buffered']
    #allocation8 [shape = 's32[1]{0}', space=sflag, size = 0x4, scoped, tag = 'scoped memory for tpu_custom_call.1']
    #allocation9 [shape = 's32[1]{0}', space=sflag, size = 0x4, scoped, tag = 'scoped memory for tpu_custom_call.1']
    #allocation10 [shape = 'u8[196608]{0}', space=vmem, size = 0x30000, scoped, tag = 'input window, operand 4, single buffered']
    #allocation11 [shape = 's32[1]{0}', space=sflag, size = 0x4, scoped, tag = 'scoped memory for tpu_custom_call.1']
    #allocation12 [shape = 'u8[196608]{0}', space=vmem, size = 0x30000, scoped, tag = 'input window, operand 5, single buffered']
    #allocation13 [shape = 'u8[196608]{0}', space=vmem, size = 0x30000, scoped, tag = 'input window, operand 8, single buffered']
    #allocation14 [shape = 's32[1]{0}', space=sflag, size = 0x4, scoped, tag = 'scoped memory for tpu_custom_call.1']
    #allocation15 [shape = 'u8[196608]{0}', space=vmem, size = 0x30000, scoped, tag = 'input window, operand 9, single buffered']
    #allocation16 [shape = 'u8[262144]{0}', space=vmem, size = 0x40000, scoped, tag = 'input window, operand 12, single buffered']
    #allocation17 [shape = 's32[1]{0}', space=sflag, size = 0x4, scoped, tag = 'scoped memory for tpu_custom_call.1']
    #allocation18 [shape = 'u8[4096]{0}', space=vmem, size = 0x1000, scoped, tag = 'output window, operand 0, single buffered']
    %19 = vsyncpa [#allocation8], 0
    %20 = vsyncpa [#allocation11], 0
    %21 = vsyncpa [#allocation14], 0
    %22 = vsyncpa [#allocation17], 0
    %23 = vsyncpa [#allocation9], 0
    // Predicated region
    $region2: #{tpu_custom_call.1} parent=1 // pred_check
      _
    $region3: #{tpu_custom_call.1} parent=1 // pred_check_branch
      %25 = sbr.rel (0) target = $region5
    $region4: #{tpu_custom_call.1} parent=1 // pred_region
      %s27 = ssub.s32 1024, 1024
      %28 = vsyncadd [#allocation8], %s27
      %s29 = sshll.u32 [#allocation7], 4
      %s30 = int_to_ptr.vmem [resolvable:$true] %s29
      %35 = dma.hbm_to_vmem [thread:$0]  %s0, 1024, %s30, [#allocation8], 128, 128, 8
    $region5: #{tpu_custom_call.1} parent=1 // pred_fallthru
      _
    // Predicated region
    $region6: #{tpu_custom_call.1} parent=1 // pred_check
      _
    $region7: #{tpu_custom_call.1} parent=1 // pred_check_branch
      %37 = sbr.rel (0) target = $region9
    $region8: #{tpu_custom_call.1} parent=1 // pred_region
      _
    $region9: #{tpu_custom_call.1} parent=1 // pred_fallthru
      _
    // Predicated region
    $region10: #{tpu_custom_call.1} parent=1 // pred_check
      _
    $region11: #{tpu_custom_call.1} parent=1 // pred_check_branch
      %39 = sbr.rel (0) target = $region13
    $region12: #{tpu_custom_call.1} parent=1 // pred_region
      _
    $region13: #{tpu_custom_call.1} parent=1 // pred_fallthru
      _
    // Predicated region
    $region14: #{tpu_custom_call.1} parent=1 // pred_check
      _
    $region15: #{tpu_custom_call.1} parent=1 // pred_check_branch
      %41 = sbr.rel (0) target = $region17
    $region16: #{tpu_custom_call.1} parent=1 // pred_region
      _
    $region17: #{tpu_custom_call.1} parent=1 // pred_fallthru
      _
    // Predicated region
    $region18: #{tpu_custom_call.1} parent=1 // pred_check
      _
    $region19: #{tpu_custom_call.1} parent=1 // pred_check_branch
      %43 = sbr.rel (0) target = $region21
    $region20: #{tpu_custom_call.1} parent=1 // pred_region
      %s45 = ssub.s32 6144, 6144
      %46 = vsyncadd [#allocation11], %s45
      %s47 = sshll.u32 [#allocation10], 4
      %s48 = int_to_ptr.vmem [resolvable:$true] %s47
      %53 = dma.hbm_to_vmem [thread:$0]  %s4, 6144, %s48, [#allocation11], 384, 384, 24
    $region21: #{tpu_custom_call.1} parent=1 // pred_fallthru
      _
    // Predicated region
    $region22: #{tpu_custom_call.1} parent=1 // pred_check
      _
    $region23: #{tpu_custom_call.1} parent=1 // pred_check_branch
      %55 = sbr.rel (0) target = $region25
    $region24: #{tpu_custom_call.1} parent=1 // pred_region
      %s57 = ssub.s32 6144, 6144
      %58 = vsyncadd [#allocation11], %s57
      %s59 = sshll.u32 [#allocation12], 4
      %s60 = int_to_ptr.vmem [resolvable:$true] %s59
      %65 = dma.hbm_to_vmem [thread:$0]  %s5, 6144, %s60, [#allocation11], 384, 384, 24
    $region25: #{tpu_custom_call.1} parent=1 // pred_fallthru
      _
    // Predicated region
    $region26: #{tpu_custom_call.1} parent=1 // pred_check
      _
    $region27: #{tpu_custom_call.1} parent=1 // pred_check_branch
      %67 = sbr.rel (0) target = $region29
    $region28: #{tpu_custom_call.1} parent=1 // pred_region
      _
    $region29: #{tpu_custom_call.1} parent=1 // pred_fallthru
      _
    // Predicated region
    $region30: #{tpu_custom_call.1} parent=1 // pred_check
      _
    $region31: #{tpu_custom_call.1} parent=1 // pred_check_branch
      %69 = sbr.rel (0) target = $region33
    $region32: #{tpu_custom_call.1} parent=1 // pred_region
      _
    $region33: #{tpu_custom_call.1} parent=1 // pred_fallthru
      _
    // Predicated region
    $region34: #{tpu_custom_call.1} parent=1 // pred_check
      _
    $region35: #{tpu_custom_call.1} parent=1 // pred_check_branch
      %71 = sbr.rel (0) target = $region37
    $region36: #{tpu_custom_call.1} parent=1 // pred_region
      %s73 = ssub.s32 6144, 6144
      %74 = vsyncadd [#allocation14], %s73
      %s75 = sshll.u32 [#allocation13], 4
      %s76 = int_to_ptr.vmem [resolvable:$true] %s75
      %81 = dma.hbm_to_vmem [thread:$0]  %s8, 6144, %s76, [#allocation14], 384, 384, 24
    $region37: #{tpu_custom_call.1} parent=1 // pred_fallthru
      _
    // Predicated region
    $region38: #{tpu_custom_call.1} parent=1 // pred_check
      _
    $region39: #{tpu_custom_call.1} parent=1 // pred_check_branch
      %83 = sbr.rel (0) target = $region41
    $region40: #{tpu_custom_call.1} parent=1 // pred_region
      %s85 = ssub.s32 6144, 6144
      %86 = vsyncadd [#allocation14], %s85
      %s87 = sshll.u32 [#allocation15], 4
      %s88 = int_to_ptr.vmem [resolvable:$true] %s87
      %93 = dma.hbm_to_vmem [thread:$0]  %s9, 6144, %s88, [#allocation14], 384, 384, 24
    $region41: #{tpu_custom_call.1} parent=1 // pred_fallthru
      _
    // Predicated region
    $region42: #{tpu_custom_call.1} parent=1 // pred_check
      _
    $region43: #{tpu_custom_call.1} parent=1 // pred_check_branch
      %95 = sbr.rel (0) target = $region45
    $region44: #{tpu_custom_call.1} parent=1 // pred_region
      _
    $region45: #{tpu_custom_call.1} parent=1 // pred_fallthru
      _
    // Predicated region
    $region46: #{tpu_custom_call.1} parent=1 // pred_check
      _
    $region47: #{tpu_custom_call.1} parent=1 // pred_check_branch
      %97 = sbr.rel (0) target = $region49
    $region48: #{tpu_custom_call.1} parent=1 // pred_region
      _
    $region49: #{tpu_custom_call.1} parent=1 // pred_fallthru
      _
    // Predicated region
    $region50: #{tpu_custom_call.1} parent=1 // pred_check
      _
    $region51: #{tpu_custom_call.1} parent=1 // pred_check_branch
      %99 = sbr.rel (0) target = $region53
    $region52: #{tpu_custom_call.1} parent=1 // pred_region
      %s101 = ssub.s32 8192, 8192
      %102 = vsyncadd [#allocation17], %s101
      %s103 = sshll.u32 [#allocation16], 4
      %s104 = int_to_ptr.vmem [resolvable:$true] %s103
      %109 = dma.hbm_to_vmem [thread:$0]  %s12, 8192, %s104, [#allocation17], 128, 128, 8
    $region53: #{tpu_custom_call.1} parent=1 // pred_fallthru
      _
    // Predicated region
    $region54: #{tpu_custom_call.1} parent=1 // pred_check
      _
    $region55: #{tpu_custom_call.1} parent=1 // pred_check_branch
      %111 = sbr.rel (0) target = $region57
    $region56: #{tpu_custom_call.1} parent=1 // pred_region
      _
    $region57: #{tpu_custom_call.1} parent=1 // pred_fallthru
      _
    // Predicated region
    $region58: #{tpu_custom_call.1} parent=1 // pred_check
      _
    $region59: #{tpu_custom_call.1} parent=1 // pred_check_branch
      %113 = sbr.rel (0) target = $region61
    $region60: #{tpu_custom_call.1} parent=1 // pred_region
      %114 = dma.done [#allocation8], 1024
    $region61: #{tpu_custom_call.1} parent=1 // pred_fallthru
      _
    // Predicated region
    $region62: #{tpu_custom_call.1} parent=1 // pred_check
      _
    $region63: #{tpu_custom_call.1} parent=1 // pred_check_branch
      %116 = sbr.rel (0) target = $region65
    $region64: #{tpu_custom_call.1} parent=1 // pred_region
      %117 = dma.done [#allocation11], 6144
    $region65: #{tpu_custom_call.1} parent=1 // pred_fallthru
      _
    // Predicated region
    $region66: #{tpu_custom_call.1} parent=1 // pred_check
      _
    $region67: #{tpu_custom_call.1} parent=1 // pred_check_branch
      %119 = sbr.rel (0) target = $region69
    $region68: #{tpu_custom_call.1} parent=1 // pred_region
      %120 = dma.done [#allocation11], 6144
    $region69: #{tpu_custom_call.1} parent=1 // pred_fallthru
      _
    // Predicated region
    $region70: #{tpu_custom_call.1} parent=1 // pred_check
      _
    $region71: #{tpu_custom_call.1} parent=1 // pred_check_branch
      %122 = sbr.rel (0) target = $region73
    $region72: #{tpu_custom_call.1} parent=1 // pred_region
      %123 = dma.done [#allocation14], 6144
    $region73: #{tpu_custom_call.1} parent=1 // pred_fallthru
      _
    // Predicated region
    $region74: #{tpu_custom_call.1} parent=1 // pred_check
      _
    $region75: #{tpu_custom_call.1} parent=1 // pred_check_branch
      %125 = sbr.rel (0) target = $region77
    $region76: #{tpu_custom_call.1} parent=1 // pred_region
      %126 = dma.done [#allocation14], 6144
    $region77: #{tpu_custom_call.1} parent=1 // pred_fallthru
      _
    // Predicated region
    $region78: #{tpu_custom_call.1} parent=1 // pred_check
      _
    $region79: #{tpu_custom_call.1} parent=1 // pred_check_branch
      %128 = sbr.rel (0) target = $region81
    $region80: #{tpu_custom_call.1} parent=1 // pred_region
      %129 = dma.done [#allocation17], 8192
    $region81: #{tpu_custom_call.1} parent=1 // pred_fallthru
      _
    %v130 = vld [vmem:[#allocation7] sm:$0xff]
    %v131 = vld [vmem:[#allocation7 + $0x8] sm:$0xff]
    %v132 = vld [vmem:[#allocation7 + $0x10] sm:$0xff]
    %v133 = vld [vmem:[#allocation7 + $0x18] sm:$0xff]
    %v134 = vld [vmem:[#allocation7 + $0x20] sm:$0xff]
    %v135 = vld [vmem:[#allocation7 + $0x28] sm:$0xff]
    %v136 = vld [vmem:[#allocation7 + $0x30] sm:$0xff]
    %v137 = vld [vmem:[#allocation7 + $0x38] sm:$0xff]
    %v138 = vld [vmem:[#allocation10] sm:$0xff]
    %v139 = vld [vmem:[#allocation10 + $0x8] sm:$0xff]
    %v140 = vld [vmem:[#allocation10 + $0x10] sm:$0xff]
    %v141 = vld [vmem:[#allocation10 + $0x18] sm:$0xff]
    %v142 = vld [vmem:[#allocation10 + $0x20] sm:$0xff]
    %v143 = vld [vmem:[#allocation10 + $0x28] sm:$0xff]
    %v144 = vld [vmem:[#allocation10 + $0x30] sm:$0xff]
    %v145 = vld [vmem:[#allocation10 + $0x38] sm:$0xff]
    %v146 = vld [vmem:[#allocation10 + $0x40] sm:$0xff]
    %v147 = vld [vmem:[#allocation10 + $0x48] sm:$0xff]
    %v148 = vld [vmem:[#allocation10 + $0x50] sm:$0xff]
    %v149 = vld [vmem:[#allocation10 + $0x58] sm:$0xff]
    %v150 = vld [vmem:[#allocation10 + $0x60] sm:$0xff]
    %v151 = vld [vmem:[#allocation10 + $0x68] sm:$0xff]
    %v152 = vld [vmem:[#allocation10 + $0x70] sm:$0xff]
    %v153 = vld [vmem:[#allocation10 + $0x78] sm:$0xff]
    %v154 = vld [vmem:[#allocation10 + $0x80] sm:$0xff]
    %v155 = vld [vmem:[#allocation10 + $0x88] sm:$0xff]
    %v156 = vld [vmem:[#allocation10 + $0x90] sm:$0xff]
    %v157 = vld [vmem:[#allocation10 + $0x98] sm:$0xff]
    %v158 = vld [vmem:[#allocation10 + $0xa0] sm:$0xff]
    %v159 = vld [vmem:[#allocation10 + $0xa8] sm:$0xff]
    %v160 = vld [vmem:[#allocation10 + $0xb0] sm:$0xff]
    %v161 = vld [vmem:[#allocation10 + $0xb8] sm:$0xff]
    %v162 = vld [vmem:[#allocation10 + $0xc0] sm:$0xff]
    %v163 = vld [vmem:[#allocation10 + $0xc8] sm:$0xff]
    %v164 = vld [vmem:[#allocation10 + $0xd0] sm:$0xff]
    %v165 = vld [vmem:[#allocation10 + $0xd8] sm:$0xff]
    %v166 = vld [vmem:[#allocation10 + $0xe0] sm:$0xff]
    %v167 = vld [vmem:[#allocation10 + $0xe8] sm:$0xff]
    %v168 = vld [vmem:[#allocation10 + $0xf0] sm:$0xff]
    %v169 = vld [vmem:[#allocation10 + $0xf8] sm:$0xff]
    %v170 = vld [vmem:[#allocation10 + $0x100] sm:$0xff]
    %v171 = vld [vmem:[#allocation10 + $0x108] sm:$0xff]
    %v172 = vld [vmem:[#allocation10 + $0x110] sm:$0xff]
    %v173 = vld [vmem:[#allocation10 + $0x118] sm:$0xff]
    %v174 = vld [vmem:[#allocation10 + $0x120] sm:$0xff]
    %v175 = vld [vmem:[#allocation10 + $0x128] sm:$0xff]
    %v176 = vld [vmem:[#allocation10 + $0x130] sm:$0xff]
    %v177 = vld [vmem:[#allocation10 + $0x138] sm:$0xff]
    %v178 = vld [vmem:[#allocation10 + $0x140] sm:$0xff]
    %v179 = vld [vmem:[#allocation10 + $0x148] sm:$0xff]
    %v180 = vld [vmem:[#allocation10 + $0x150] sm:$0xff]
    %v181 = vld [vmem:[#allocation10 + $0x158] sm:$0xff]
    %v182 = vld [vmem:[#allocation10 + $0x160] sm:$0xff]
    %v183 = vld [vmem:[#allocation10 + $0x168] sm:$0xff]
    %v184 = vld [vmem:[#allocation10 + $0x170] sm:$0xff]
    %v185 = vld [vmem:[#allocation10 + $0x178] sm:$0xff]
    %v186 = vld [vmem:[%s6] sm:$0x7]
    %v188 = vlaneseq
    %v189 = vshrl.u32 %v188, 7
    %v190 = vsub.s32 0, %v189
    %v191 = vrot.slane %v186, %v190
    %v192 = vlaneseq
    %v193 = vshrl.u32 %v192, 7
    %v194 = vsub.s32 1, %v193
    %v195 = vrot.slane %v186, %v194
    %v196 = vlaneseq
    %v197 = vshrl.u32 %v196, 7
    %v198 = vsub.s32 2, %v197
    %v199 = vrot.slane %v186, %v198
    %203 = vmatprep.subr.mxu0 %v139
    %204 = vmatpush1.msra.mxu0 %v138
    %205 = vmatprep.subr.mxu0 %v142
    %206 = vmatpush1.msra.mxu0 %v141
    %207 = vmatprep.subr.mxu0 %v145
    %208 = vmatpush1.msra.mxu0 %v144
    %209 = vmatprep.subr.mxu0 %v148
    %210 = vmatpush1.msra.mxu0 %v147
    %211 = vmatprep.subr.mxu0 %v151
    %212 = vmatpush1.msra.mxu0 %v150
    %213 = vmatprep.subr.mxu0 %v154
    %214 = vmatpush1.msra.mxu0 %v153
    %215 = vmatprep.subr.mxu0 %v157
    %216 = vmatpush1.msra.mxu0 %v156
    %217 = vmatprep.subr.mxu0 %v160
    %218 = vmatpush1.msra.mxu0 %v159
    %219 = vmatprep.subr.mxu0 %v163
    %220 = vmatpush1.msra.mxu0 %v162
    %221 = vmatprep.subr.mxu0 %v166
    %222 = vmatpush1.msra.mxu0 %v165
    %223 = vmatprep.subr.mxu0 %v169
    %224 = vmatpush1.msra.mxu0 %v168
    %225 = vmatprep.subr.mxu0 %v172
    %226 = vmatpush1.msra.mxu0 %v171
    %227 = vmatprep.subr.mxu0 %v175
    %228 = vmatpush1.msra.mxu0 %v174
    %229 = vmatprep.subr.mxu0 %v178
    %230 = vmatpush1.msra.mxu0 %v177
    %231 = vmatprep.subr.mxu0 %v181
    %232 = vmatpush1.msra.mxu0 %v180
    %233 = vmatprep.subr.mxu0 %v184
    %234 = vmatpush1.msra.mxu0 %v183
    %235 = vmatprep.subr.mxu0 0.0
    %236 = vmatpush1.msra.mxu0 0.0
    %237 = vmatprep.subr.mxu0 0.0
    %238 = vmatpush1.msra.mxu0 0.0
    %239 = vmatprep.subr.mxu0 0.0
    %240 = vmatpush1.msra.mxu0 0.0
    %241 = vmatprep.subr.mxu0 0.0
    %242 = vmatpush1.msra.mxu0 0.0
    %243 = vmatprep.subr.mxu0 0.0
    %244 = vmatpush1.msra.mxu0 0.0
    %245 = vmatprep.subr.mxu0 0.0
    %246 = vmatpush1.msra.mxu0 0.0
    %247 = vmatprep.subr.mxu0 0.0
    %248 = vmatpush1.msra.mxu0 0.0
    %249 = vmatprep.subr.mxu0 0.0
    %250 = vmatpush1.msra.mxu0 0.0
    %251 = vmatprep.subr.mxu0 0.0
    %252 = vmatpush1.msra.mxu0 0.0
    %253 = vmatprep.subr.mxu0 0.0
    %254 = vmatpush1.msra.mxu0 0.0
    %255 = vmatprep.subr.mxu0 0.0
    %256 = vmatpush1.msra.mxu0 0.0
    %257 = vmatprep.subr.mxu0 0.0
    %258 = vmatpush1.msra.mxu0 0.0
    %259 = vmatprep.subr.mxu0 0.0
    %260 = vmatpush1.msra.mxu0 0.0
    %261 = vmatprep.subr.mxu0 0.0
    %262 = vmatpush1.msra.mxu0 0.0
    %263 = vmatprep.subr.mxu0 0.0
    %264 = vmatpush1.msra.mxu0 0.0
    %265 = vmatprep.subr.mxu0 0.0
    %266 = vmatpush1.msra.mxu0 0.0
    %267 = vmatprep.mubr.f32.mxu0 0.0
    %268 = vmatmul.mubr.f32.gmra.mrb[0].mxu0 %v130
    %v269 = vpop.f32.mrb[0].mxu0
    %v270 = vadd.f32 %v191, %v269
    %v271 = vpop.f32.mrb[0].mxu0
    %v272 = vadd.f32 %v195, %v271
    %273 = vmatprep.mubr.f32.mxu0 0.0
    %274 = vmatmul.mubr.f32.gmra.mrb[0].mxu0 %v131
    %v275 = vpop.f32.mrb[0].mxu0
    %v276 = vadd.f32 %v191, %v275
    %v277 = vpop.f32.mrb[0].mxu0
    %v278 = vadd.f32 %v195, %v277
    %279 = vmatprep.mubr.f32.mxu0 0.0
    %280 = vmatmul.mubr.f32.gmra.mrb[0].mxu0 %v132
    %v281 = vpop.f32.mrb[0].mxu0
    %v282 = vadd.f32 %v191, %v281
    %v283 = vpop.f32.mrb[0].mxu0
    %v284 = vadd.f32 %v195, %v283
    %285 = vmatprep.mubr.f32.mxu0 0.0
    %286 = vmatmul.mubr.f32.gmra.mrb[0].mxu0 %v133
    %v287 = vpop.f32.mrb[0].mxu0
    %v288 = vadd.f32 %v191, %v287
    %v289 = vpop.f32.mrb[0].mxu0
    %v290 = vadd.f32 %v195, %v289
    %291 = vmatprep.mubr.f32.mxu0 0.0
    %292 = vmatmul.mubr.f32.gmra.mrb[0].mxu0 %v134
    %v293 = vpop.f32.mrb[0].mxu0
    %v294 = vadd.f32 %v191, %v293
    %v295 = vpop.f32.mrb[0].mxu0
    %v296 = vadd.f32 %v195, %v295
    %297 = vmatprep.mubr.f32.mxu0 0.0
    %298 = vmatmul.mubr.f32.gmra.mrb[0].mxu0 %v135
    %v299 = vpop.f32.mrb[0].mxu0
    %v300 = vadd.f32 %v191, %v299
    %v301 = vpop.f32.mrb[0].mxu0
    %v302 = vadd.f32 %v195, %v301
    %303 = vmatprep.mubr.f32.mxu0 0.0
    %304 = vmatmul.mubr.f32.gmra.mrb[0].mxu0 %v136
    %v305 = vpop.f32.mrb[0].mxu0
    %v306 = vadd.f32 %v191, %v305
    %v307 = vpop.f32.mrb[0].mxu0
    %v308 = vadd.f32 %v195, %v307
    %309 = vmatprep.mubr.f32.mxu0 0.0
    %310 = vmatmul.mubr.f32.gmra.mrb[0].mxu0 %v137
    %v311 = vpop.f32.mrb[0].mxu0
    %v312 = vadd.f32 %v191, %v311
    %v313 = vpop.f32.mrb[0].mxu0
    %v314 = vadd.f32 %v195, %v313
    %315 = vdwg.mxu0
    %316 = vmatprep.subr.mxu0 0.0
    %317 = vmatpush1.msra.mxu0 %v140
    %318 = vmatprep.subr.mxu0 0.0
    %319 = vmatpush1.msra.mxu0 %v143
    %320 = vmatprep.subr.mxu0 0.0
    %321 = vmatpush1.msra.mxu0 %v146
    %322 = vmatprep.subr.mxu0 0.0
    %323 = vmatpush1.msra.mxu0 %v149
    %324 = vmatprep.subr.mxu0 0.0
    %325 = vmatpush1.msra.mxu0 %v152
    %326 = vmatprep.subr.mxu0 0.0
    %327 = vmatpush1.msra.mxu0 %v155
    %328 = vmatprep.subr.mxu0 0.0
    %329 = vmatpush1.msra.mxu0 %v158
    %330 = vmatprep.subr.mxu0 0.0
    %331 = vmatpush1.msra.mxu0 %v161
    %332 = vmatprep.subr.mxu0 0.0
    %333 = vmatpush1.msra.mxu0 %v164
    %334 = vmatprep.subr.mxu0 0.0
    %335 = vmatpush1.msra.mxu0 %v167
    %336 = vmatprep.subr.mxu0 0.0
    %337 = vmatpush1.msra.mxu0 %v170
    %338 = vmatprep.subr.mxu0 0.0
    %339 = vmatpush1.msra.mxu0 %v173
    %340 = vmatprep.subr.mxu0 0.0
    %341 = vmatpush1.msra.mxu0 %v176
    %342 = vmatprep.subr.mxu0 0.0
    %343 = vmatpush1.msra.mxu0 %v179
    %344 = vmatprep.subr.mxu0 0.0
    %345 = vmatpush1.msra.mxu0 %v182
    %346 = vmatprep.subr.mxu0 0.0
    %347 = vmatpush1.msra.mxu0 %v185
    %348 = vmatprep.subr.mxu0 0.0
    %349 = vmatpush1.msra.mxu0 0.0
    %350 = vmatprep.subr.mxu0 0.0
    %351 = vmatpush1.msra.mxu0 0.0
    %352 = vmatprep.subr.mxu0 0.0
    %353 = vmatpush1.msra.mxu0 0.0
    %354 = vmatprep.subr.mxu0 0.0
    %355 = vmatpush1.msra.mxu0 0.0
    %356 = vmatprep.subr.mxu0 0.0
    %357 = vmatpush1.msra.mxu0 0.0
    %358 = vmatprep.subr.mxu0 0.0
    %359 = vmatpush1.msra.mxu0 0.0
    %360 = vmatprep.subr.mxu0 0.0
    %361 = vmatpush1.msra.mxu0 0.0
    %362 = vmatprep.subr.mxu0 0.0
    %363 = vmatpush1.msra.mxu0 0.0
    %364 = vmatprep.subr.mxu0 0.0
    %365 = vmatpush1.msra.mxu0 0.0
    %366 = vmatprep.subr.mxu0 0.0
    %367 = vmatpush1.msra.mxu0 0.0
    %368 = vmatprep.subr.mxu0 0.0
    %369 = vmatpush1.msra.mxu0 0.0
    %370 = vmatprep.subr.mxu0 0.0
    %371 = vmatpush1.msra.mxu0 0.0
    %372 = vmatprep.subr.mxu0 0.0
    %373 = vmatpush1.msra.mxu0 0.0
    %374 = vmatprep.subr.mxu0 0.0
    %375 = vmatpush1.msra.mxu0 0.0
    %376 = vmatprep.subr.mxu0 0.0
    %377 = vmatpush1.msra.mxu0 0.0
    %378 = vmatprep.subr.mxu0 0.0
    %379 = vmatpush1.msra.mxu0 0.0
    %380 = vmatprep.mubr.f32.mxu0 0.0
    %381 = vmatmul.mubr.f32.gmra.mrb[0].mxu0 %v130
    %v382 = vpop.f32.mrb[0].mxu0
    %v383 = vadd.f32 %v199, %v382
    %v384 = vpop.f32.mrb[0].mxu0
    %385 = vmatprep.mubr.f32.mxu0 0.0
    %386 = vmatmul.mubr.f32.gmra.mrb[0].mxu0 %v131
    %v387 = vpop.f32.mrb[0].mxu0
    %v388 = vadd.f32 %v199, %v387
    %v389 = vpop.f32.mrb[0].mxu0
    %390 = vmatprep.mubr.f32.mxu0 0.0
    %391 = vmatmul.mubr.f32.gmra.mrb[0].mxu0 %v132
    %v392 = vpop.f32.mrb[0].mxu0
    %v393 = vadd.f32 %v199, %v392
    %v394 = vpop.f32.mrb[0].mxu0
    %395 = vmatprep.mubr.f32.mxu0 0.0
    %396 = vmatmul.mubr.f32.gmra.mrb[0].mxu0 %v133
    %v397 = vpop.f32.mrb[0].mxu0
    %v398 = vadd.f32 %v199, %v397
    %v399 = vpop.f32.mrb[0].mxu0
    %400 = vmatprep.mubr.f32.mxu0 0.0
    %401 = vmatmul.mubr.f32.gmra.mrb[0].mxu0 %v134
    %v402 = vpop.f32.mrb[0].mxu0
    %v403 = vadd.f32 %v199, %v402
    %v404 = vpop.f32.mrb[0].mxu0
    %405 = vmatprep.mubr.f32.mxu0 0.0
    %406 = vmatmul.mubr.f32.gmra.mrb[0].mxu0 %v135
    %v407 = vpop.f32.mrb[0].mxu0
    %v408 = vadd.f32 %v199, %v407
    %v409 = vpop.f32.mrb[0].mxu0
    %410 = vmatprep.mubr.f32.mxu0 0.0
    %411 = vmatmul.mubr.f32.gmra.mrb[0].mxu0 %v136
    %v412 = vpop.f32.mrb[0].mxu0
    %v413 = vadd.f32 %v199, %v412
    %v414 = vpop.f32.mrb[0].mxu0
    %415 = vmatprep.mubr.f32.mxu0 0.0
    %416 = vmatmul.mubr.f32.gmra.mrb[0].mxu0 %v137
    %v417 = vpop.f32.mrb[0].mxu0
    %v418 = vadd.f32 %v199, %v417
    %v419 = vpop.f32.mrb[0].mxu0
    %420 = vdwg.mxu0
    %421 = vst [vmem:[#allocation2] sm:$0xff] %v270
    %422 = vst [vmem:[#allocation2 + $0x8] sm:$0xff] %v272
    %423 = vst [vmem:[#allocation2 + $0x10] sm:$0xff] %v383
    %424 = vst [vmem:[#allocation2 + $0x18] sm:$0xff] %v276
    %425 = vst [vmem:[#allocation2 + $0x20] sm:$0xff] %v278
    %426 = vst [vmem:[#allocation2 + $0x28] sm:$0xff] %v388
    %427 = vst [vmem:[#allocation2 + $0x30] sm:$0xff] %v282
    %428 = vst [vmem:[#allocation2 + $0x38] sm:$0xff] %v284
    %429 = vst [vmem:[#allocation2 + $0x40] sm:$0xff] %v393
    %430 = vst [vmem:[#allocation2 + $0x48] sm:$0xff] %v288
    %431 = vst [vmem:[#allocation2 + $0x50] sm:$0xff] %v290
    %432 = vst [vmem:[#allocation2 + $0x58] sm:$0xff] %v398
    %433 = vst [vmem:[#allocation2 + $0x60] sm:$0xff] %v294
    %434 = vst [vmem:[#allocation2 + $0x68] sm:$0xff] %v296
    %435 = vst [vmem:[#allocation2 + $0x70] sm:$0xff] %v403
    %436 = vst [vmem:[#allocation2 + $0x78] sm:$0xff] %v300
    %437 = vst [vmem:[#allocation2 + $0x80] sm:$0xff] %v302
    %438 = vst [vmem:[#allocation2 + $0x88] sm:$0xff] %v408
    %439 = vst [vmem:[#allocation2 + $0x90] sm:$0xff] %v306
    %440 = vst [vmem:[#allocation2 + $0x98] sm:$0xff] %v308
    %441 = vst [vmem:[#allocation2 + $0xa0] sm:$0xff] %v413
    %442 = vst [vmem:[#allocation2 + $0xa8] sm:$0xff] %v312
    %443 = vst [vmem:[#allocation2 + $0xb0] sm:$0xff] %v314
    %444 = vst [vmem:[#allocation2 + $0xb8] sm:$0xff] %v418
    %v445 = vld [vmem:[#allocation13] sm:$0xff]
    %v446 = vld [vmem:[#allocation13 + $0x8] sm:$0xff]
    %v447 = vld [vmem:[#allocation13 + $0x10] sm:$0xff]
    %v448 = vld [vmem:[#allocation13 + $0x18] sm:$0xff]
    %v449 = vld [vmem:[#allocation13 + $0x20] sm:$0xff]
    %v450 = vld [vmem:[#allocation13 + $0x28] sm:$0xff]
    %v451 = vld [vmem:[#allocation13 + $0x30] sm:$0xff]
    %v452 = vld [vmem:[#allocation13 + $0x38] sm:$0xff]
    %v453 = vld [vmem:[#allocation13 + $0x40] sm:$0xff]
    %v454 = vld [vmem:[#allocation13 + $0x48] sm:$0xff]
    %v455 = vld [vmem:[#allocation13 + $0x50] sm:$0xff]
    %v456 = vld [vmem:[#allocation13 + $0x58] sm:$0xff]
    %v457 = vld [vmem:[#allocation13 + $0x60] sm:$0xff]
    %v458 = vld [vmem:[#allocation13 + $0x68] sm:$0xff]
    %v459 = vld [vmem:[#allocation13 + $0x70] sm:$0xff]
    %v460 = vld [vmem:[#allocation13 + $0x78] sm:$0xff]
    %v461 = vld [vmem:[#allocation13 + $0x80] sm:$0xff]
    %v462 = vld [vmem:[#allocation13 + $0x88] sm:$0xff]
    %v463 = vld [vmem:[#allocation13 + $0x90] sm:$0xff]
    %v464 = vld [vmem:[#allocation13 + $0x98] sm:$0xff]
    %v465 = vld [vmem:[#allocation13 + $0xa0] sm:$0xff]
    %v466 = vld [vmem:[#allocation13 + $0xa8] sm:$0xff]
    %v467 = vld [vmem:[#allocation13 + $0xb0] sm:$0xff]
    %v468 = vld [vmem:[#allocation13 + $0xb8] sm:$0xff]
    %v469 = vld [vmem:[#allocation13 + $0xc0] sm:$0xff]
    %v470 = vld [vmem:[#allocation13 + $0xc8] sm:$0xff]
    %v471 = vld [vmem:[#allocation13 + $0xd0] sm:$0xff]
    %v472 = vld [vmem:[#allocation13 + $0xd8] sm:$0xff]
    %v473 = vld [vmem:[#allocation13 + $0xe0] sm:$0xff]
    %v474 = vld [vmem:[#allocation13 + $0xe8] sm:$0xff]
    %v475 = vld [vmem:[#allocation13 + $0xf0] sm:$0xff]
    %v476 = vld [vmem:[#allocation13 + $0xf8] sm:$0xff]
    %v477 = vld [vmem:[#allocation13 + $0x100] sm:$0xff]
    %v478 = vld [vmem:[#allocation13 + $0x108] sm:$0xff]
    %v479 = vld [vmem:[#allocation13 + $0x110] sm:$0xff]
    %v480 = vld [vmem:[#allocation13 + $0x118] sm:$0xff]
    %v481 = vld [vmem:[#allocation13 + $0x120] sm:$0xff]
    %v482 = vld [vmem:[#allocation13 + $0x128] sm:$0xff]
    %v483 = vld [vmem:[#allocation13 + $0x130] sm:$0xff]
    %v484 = vld [vmem:[#allocation13 + $0x138] sm:$0xff]
    %v485 = vld [vmem:[#allocation13 + $0x140] sm:$0xff]
    %v486 = vld [vmem:[#allocation13 + $0x148] sm:$0xff]
    %v487 = vld [vmem:[#allocation13 + $0x150] sm:$0xff]
    %v488 = vld [vmem:[#allocation13 + $0x158] sm:$0xff]
    %v489 = vld [vmem:[#allocation13 + $0x160] sm:$0xff]
    %v490 = vld [vmem:[#allocation13 + $0x168] sm:$0xff]
    %v491 = vld [vmem:[#allocation13 + $0x170] sm:$0xff]
    %v492 = vld [vmem:[#allocation13 + $0x178] sm:$0xff]
    %v493 = vld [vmem:[%s10] sm:$0x7]
    %v495 = vlaneseq
    %v496 = vshrl.u32 %v495, 7
    %v497 = vsub.s32 0, %v496
    %v498 = vrot.slane %v493, %v497
    %v499 = vlaneseq
    %v500 = vshrl.u32 %v499, 7
    %v501 = vsub.s32 1, %v500
    %v502 = vrot.slane %v493, %v501
    %v503 = vlaneseq
    %v504 = vshrl.u32 %v503, 7
    %v505 = vsub.s32 2, %v504
    %v506 = vrot.slane %v493, %v505
    %510 = vmatprep.subr.mxu0 %v446
    %511 = vmatpush1.msra.mxu0 %v445
    %512 = vmatprep.subr.mxu0 %v449
    %513 = vmatpush1.msra.mxu0 %v448
    %514 = vmatprep.subr.mxu0 %v452
    %515 = vmatpush1.msra.mxu0 %v451
    %516 = vmatprep.subr.mxu0 %v455
    %517 = vmatpush1.msra.mxu0 %v454
    %518 = vmatprep.subr.mxu0 %v458
    %519 = vmatpush1.msra.mxu0 %v457
    %520 = vmatprep.subr.mxu0 %v461
    %521 = vmatpush1.msra.mxu0 %v460
    %522 = vmatprep.subr.mxu0 %v464
    %523 = vmatpush1.msra.mxu0 %v463
    %524 = vmatprep.subr.mxu0 %v467
    %525 = vmatpush1.msra.mxu0 %v466
    %526 = vmatprep.subr.mxu0 %v470
    %527 = vmatpush1.msra.mxu0 %v469
    %528 = vmatprep.subr.mxu0 %v473
    %529 = vmatpush1.msra.mxu0 %v472
    %530 = vmatprep.subr.mxu0 %v476
    %531 = vmatpush1.msra.mxu0 %v475
    %532 = vmatprep.subr.mxu0 %v479
    %533 = vmatpush1.msra.mxu0 %v478
    %534 = vmatprep.subr.mxu0 %v482
    %535 = vmatpush1.msra.mxu0 %v481
    %536 = vmatprep.subr.mxu0 %v485
    %537 = vmatpush1.msra.mxu0 %v484
    %538 = vmatprep.subr.mxu0 %v488
    %539 = vmatpush1.msra.mxu0 %v487
    %540 = vmatprep.subr.mxu0 %v491
    %541 = vmatpush1.msra.mxu0 %v490
    %542 = vmatprep.subr.mxu0 0.0
    %543 = vmatpush1.msra.mxu0 0.0
    %544 = vmatprep.subr.mxu0 0.0
    %545 = vmatpush1.msra.mxu0 0.0
    %546 = vmatprep.subr.mxu0 0.0
    %547 = vmatpush1.msra.mxu0 0.0
    %548 = vmatprep.subr.mxu0 0.0
    %549 = vmatpush1.msra.mxu0 0.0
    %550 = vmatprep.subr.mxu0 0.0
    %551 = vmatpush1.msra.mxu0 0.0
    %552 = vmatprep.subr.mxu0 0.0
    %553 = vmatpush1.msra.mxu0 0.0
    %554 = vmatprep.subr.mxu0 0.0
    %555 = vmatpush1.msra.mxu0 0.0
    %556 = vmatprep.subr.mxu0 0.0
    %557 = vmatpush1.msra.mxu0 0.0
    %558 = vmatprep.subr.mxu0 0.0
    %559 = vmatpush1.msra.mxu0 0.0
    %560 = vmatprep.subr.mxu0 0.0
    %561 = vmatpush1.msra.mxu0 0.0
    %562 = vmatprep.subr.mxu0 0.0
    %563 = vmatpush1.msra.mxu0 0.0
    %564 = vmatprep.subr.mxu0 0.0
    %565 = vmatpush1.msra.mxu0 0.0
    %566 = vmatprep.subr.mxu0 0.0
    %567 = vmatpush1.msra.mxu0 0.0
    %568 = vmatprep.subr.mxu0 0.0
    %569 = vmatpush1.msra.mxu0 0.0
    %570 = vmatprep.subr.mxu0 0.0
    %571 = vmatpush1.msra.mxu0 0.0
    %572 = vmatprep.subr.mxu0 0.0
    %573 = vmatpush1.msra.mxu0 0.0
    %574 = vmatprep.mubr.f32.mxu0 0.0
    %575 = vmatmul.mubr.f32.gmra.mrb[0].mxu0 %v130
    %v576 = vpop.f32.mrb[0].mxu0
    %v577 = vadd.f32 %v498, %v576
    %v578 = vpop.f32.mrb[0].mxu0
    %v579 = vadd.f32 %v502, %v578
    %580 = vmatprep.mubr.f32.mxu0 0.0
    %581 = vmatmul.mubr.f32.gmra.mrb[0].mxu0 %v131
    %v582 = vpop.f32.mrb[0].mxu0
    %v583 = vadd.f32 %v498, %v582
    %v584 = vpop.f32.mrb[0].mxu0
    %v585 = vadd.f32 %v502, %v584
    %586 = vmatprep.mubr.f32.mxu0 0.0
    %587 = vmatmul.mubr.f32.gmra.mrb[0].mxu0 %v132
    %v588 = vpop.f32.mrb[0].mxu0
    %v589 = vadd.f32 %v498, %v588
    %v590 = vpop.f32.mrb[0].mxu0
    %v591 = vadd.f32 %v502, %v590
    %592 = vmatprep.mubr.f32.mxu0 0.0
    %593 = vmatmul.mubr.f32.gmra.mrb[0].mxu0 %v133
    %v594 = vpop.f32.mrb[0].mxu0
    %v595 = vadd.f32 %v498, %v594
    %v596 = vpop.f32.mrb[0].mxu0
    %v597 = vadd.f32 %v502, %v596
    %598 = vmatprep.mubr.f32.mxu0 0.0
    %599 = vmatmul.mubr.f32.gmra.mrb[0].mxu0 %v134
    %v600 = vpop.f32.mrb[0].mxu0
    %v601 = vadd.f32 %v498, %v600
    %v602 = vpop.f32.mrb[0].mxu0
    %v603 = vadd.f32 %v502, %v602
    %604 = vmatprep.mubr.f32.mxu0 0.0
    %605 = vmatmul.mubr.f32.gmra.mrb[0].mxu0 %v135
    %v606 = vpop.f32.mrb[0].mxu0
    %v607 = vadd.f32 %v498, %v606
    %v608 = vpop.f32.mrb[0].mxu0
    %v609 = vadd.f32 %v502, %v608
    %610 = vmatprep.mubr.f32.mxu0 0.0
    %611 = vmatmul.mubr.f32.gmra.mrb[0].mxu0 %v136
    %v612 = vpop.f32.mrb[0].mxu0
    %v613 = vadd.f32 %v498, %v612
    %v614 = vpop.f32.mrb[0].mxu0
    %v615 = vadd.f32 %v502, %v614
    %616 = vmatprep.mubr.f32.mxu0 0.0
    %617 = vmatmul.mubr.f32.gmra.mrb[0].mxu0 %v137
    %v618 = vpop.f32.mrb[0].mxu0
    %v619 = vadd.f32 %v498, %v618
    %v620 = vpop.f32.mrb[0].mxu0
    %v621 = vadd.f32 %v502, %v620
    %622 = vdwg.mxu0
    %623 = vmatprep.subr.mxu0 0.0
    %624 = vmatpush1.msra.mxu0 %v447
    %625 = vmatprep.subr.mxu0 0.0
    %626 = vmatpush1.msra.mxu0 %v450
    %627 = vmatprep.subr.mxu0 0.0
    %628 = vmatpush1.msra.mxu0 %v453
    %629 = vmatprep.subr.mxu0 0.0
    %630 = vmatpush1.msra.mxu0 %v456
    %631 = vmatprep.subr.mxu0 0.0
    %632 = vmatpush1.msra.mxu0 %v459
    %633 = vmatprep.subr.mxu0 0.0
    %634 = vmatpush1.msra.mxu0 %v462
    %635 = vmatprep.subr.mxu0 0.0
    %636 = vmatpush1.msra.mxu0 %v465
    %637 = vmatprep.subr.mxu0 0.0
    %638 = vmatpush1.msra.mxu0 %v468
    %639 = vmatprep.subr.mxu0 0.0
    %640 = vmatpush1.msra.mxu0 %v471
    %641 = vmatprep.subr.mxu0 0.0
    %642 = vmatpush1.msra.mxu0 %v474
    %643 = vmatprep.subr.mxu0 0.0
    %644 = vmatpush1.msra.mxu0 %v477
    %645 = vmatprep.subr.mxu0 0.0
    %646 = vmatpush1.msra.mxu0 %v480
    %647 = vmatprep.subr.mxu0 0.0
    %648 = vmatpush1.msra.mxu0 %v483
    %649 = vmatprep.subr.mxu0 0.0
    %650 = vmatpush1.msra.mxu0 %v486
    %651 = vmatprep.subr.mxu0 0.0
    %652 = vmatpush1.msra.mxu0 %v489
    %653 = vmatprep.subr.mxu0 0.0
    %654 = vmatpush1.msra.mxu0 %v492
    %655 = vmatprep.subr.mxu0 0.0
    %656 = vmatpush1.msra.mxu0 0.0
    %657 = vmatprep.subr.mxu0 0.0
    %658 = vmatpush1.msra.mxu0 0.0
    %659 = vmatprep.subr.mxu0 0.0
    %660 = vmatpush1.msra.mxu0 0.0
    %661 = vmatprep.subr.mxu0 0.0
    %662 = vmatpush1.msra.mxu0 0.0
    %663 = vmatprep.subr.mxu0 0.0
    %664 = vmatpush1.msra.mxu0 0.0
    %665 = vmatprep.subr.mxu0 0.0
    %666 = vmatpush1.msra.mxu0 0.0
    %667 = vmatprep.subr.mxu0 0.0
    %668 = vmatpush1.msra.mxu0 0.0
    %669 = vmatprep.subr.mxu0 0.0
    %670 = vmatpush1.msra.mxu0 0.0
    %671 = vmatprep.subr.mxu0 0.0
    %672 = vmatpush1.msra.mxu0 0.0
    %673 = vmatprep.subr.mxu0 0.0
    %674 = vmatpush1.msra.mxu0 0.0
    %675 = vmatprep.subr.mxu0 0.0
    %676 = vmatpush1.msra.mxu0 0.0
    %677 = vmatprep.subr.mxu0 0.0
    %678 = vmatpush1.msra.mxu0 0.0
    %679 = vmatprep.subr.mxu0 0.0
    %680 = vmatpush1.msra.mxu0 0.0
    %681 = vmatprep.subr.mxu0 0.0
    %682 = vmatpush1.msra.mxu0 0.0
    %683 = vmatprep.subr.mxu0 0.0
    %684 = vmatpush1.msra.mxu0 0.0
    %685 = vmatprep.subr.mxu0 0.0
    %686 = vmatpush1.msra.mxu0 0.0
    %687 = vmatprep.mubr.f32.mxu0 0.0
    %688 = vmatmul.mubr.f32.gmra.mrb[0].mxu0 %v130
    %v689 = vpop.f32.mrb[0].mxu0
    %v690 = vadd.f32 %v506, %v689
    %v691 = vpop.f32.mrb[0].mxu0
    %692 = vmatprep.mubr.f32.mxu0 0.0
    %693 = vmatmul.mubr.f32.gmra.mrb[0].mxu0 %v131
    %v694 = vpop.f32.mrb[0].mxu0
    %v695 = vadd.f32 %v506, %v694
    %v696 = vpop.f32.mrb[0].mxu0
    %697 = vmatprep.mubr.f32.mxu0 0.0
    %698 = vmatmul.mubr.f32.gmra.mrb[0].mxu0 %v132
    %v699 = vpop.f32.mrb[0].mxu0
    %v700 = vadd.f32 %v506, %v699
    %v701 = vpop.f32.mrb[0].mxu0
    %702 = vmatprep.mubr.f32.mxu0 0.0
    %703 = vmatmul.mubr.f32.gmra.mrb[0].mxu0 %v133
    %v704 = vpop.f32.mrb[0].mxu0
    %v705 = vadd.f32 %v506, %v704
    %v706 = vpop.f32.mrb[0].mxu0
    %707 = vmatprep.mubr.f32.mxu0 0.0
    %708 = vmatmul.mubr.f32.gmra.mrb[0].mxu0 %v134
    %v709 = vpop.f32.mrb[0].mxu0
    %v710 = vadd.f32 %v506, %v709
    %v711 = vpop.f32.mrb[0].mxu0
    %712 = vmatprep.mubr.f32.mxu0 0.0
    %713 = vmatmul.mubr.f32.gmra.mrb[0].mxu0 %v135
    %v714 = vpop.f32.mrb[0].mxu0
    %v715 = vadd.f32 %v506, %v714
    %v716 = vpop.f32.mrb[0].mxu0
    %717 = vmatprep.mubr.f32.mxu0 0.0
    %718 = vmatmul.mubr.f32.gmra.mrb[0].mxu0 %v136
    %v719 = vpop.f32.mrb[0].mxu0
    %v720 = vadd.f32 %v506, %v719
    %v721 = vpop.f32.mrb[0].mxu0
    %722 = vmatprep.mubr.f32.mxu0 0.0
    %723 = vmatmul.mubr.f32.gmra.mrb[0].mxu0 %v137
    %v724 = vpop.f32.mrb[0].mxu0
    %v725 = vadd.f32 %v506, %v724
    %v726 = vpop.f32.mrb[0].mxu0
    %727 = vdwg.mxu0
    %728 = vst [vmem:[#allocation3] sm:$0xff] %v577
    %729 = vst [vmem:[#allocation3 + $0x8] sm:$0xff] %v579
    %730 = vst [vmem:[#allocation3 + $0x10] sm:$0xff] %v690
    %731 = vst [vmem:[#allocation3 + $0x18] sm:$0xff] %v583
    %732 = vst [vmem:[#allocation3 + $0x20] sm:$0xff] %v585
    %733 = vst [vmem:[#allocation3 + $0x28] sm:$0xff] %v695
    %734 = vst [vmem:[#allocation3 + $0x30] sm:$0xff] %v589
    %735 = vst [vmem:[#allocation3 + $0x38] sm:$0xff] %v591
    %736 = vst [vmem:[#allocation3 + $0x40] sm:$0xff] %v700
    %737 = vst [vmem:[#allocation3 + $0x48] sm:$0xff] %v595
    %738 = vst [vmem:[#allocation3 + $0x50] sm:$0xff] %v597
    %739 = vst [vmem:[#allocation3 + $0x58] sm:$0xff] %v705
    %740 = vst [vmem:[#allocation3 + $0x60] sm:$0xff] %v601
    %741 = vst [vmem:[#allocation3 + $0x68] sm:$0xff] %v603
    %742 = vst [vmem:[#allocation3 + $0x70] sm:$0xff] %v710
    %743 = vst [vmem:[#allocation3 + $0x78] sm:$0xff] %v607
    %744 = vst [vmem:[#allocation3 + $0x80] sm:$0xff] %v609
    %745 = vst [vmem:[#allocation3 + $0x88] sm:$0xff] %v715
    %746 = vst [vmem:[#allocation3 + $0x90] sm:$0xff] %v613
    %747 = vst [vmem:[#allocation3 + $0x98] sm:$0xff] %v615
    %748 = vst [vmem:[#allocation3 + $0xa0] sm:$0xff] %v720
    %749 = vst [vmem:[#allocation3 + $0xa8] sm:$0xff] %v619
    %750 = vst [vmem:[#allocation3 + $0xb0] sm:$0xff] %v621
    %751 = vst [vmem:[#allocation3 + $0xb8] sm:$0xff] %v725
    %v752 = vld [vmem:[#allocation12] sm:$0xff]
    %v753 = vld [vmem:[#allocation12 + $0x8] sm:$0xff]
    %v754 = vld [vmem:[#allocation12 + $0x10] sm:$0xff]
    %v755 = vld [vmem:[#allocation12 + $0x18] sm:$0xff]
    %v756 = vld [vmem:[#allocation12 + $0x20] sm:$0xff]
    %v757 = vld [vmem:[#allocation12 + $0x28] sm:$0xff]
    %v758 = vld [vmem:[#allocation12 + $0x30] sm:$0xff]
    %v759 = vld [vmem:[#allocation12 + $0x38] sm:$0xff]
    %v760 = vld [vmem:[#allocation12 + $0x40] sm:$0xff]
    %v761 = vld [vmem:[#allocation12 + $0x48] sm:$0xff]
    %v762 = vld [vmem:[#allocation12 + $0x50] sm:$0xff]
    %v763 = vld [vmem:[#allocation12 + $0x58] sm:$0xff]
    %v764 = vld [vmem:[#allocation12 + $0x60] sm:$0xff]
    %v765 = vld [vmem:[#allocation12 + $0x68] sm:$0xff]
    %v766 = vld [vmem:[#allocation12 + $0x70] sm:$0xff]
    %v767 = vld [vmem:[#allocation12 + $0x78] sm:$0xff]
    %v768 = vld [vmem:[#allocation12 + $0x80] sm:$0xff]
    %v769 = vld [vmem:[#allocation12 + $0x88] sm:$0xff]
    %v770 = vld [vmem:[#allocation12 + $0x90] sm:$0xff]
    %v771 = vld [vmem:[#allocation12 + $0x98] sm:$0xff]
    %v772 = vld [vmem:[#allocation12 + $0xa0] sm:$0xff]
    %v773 = vld [vmem:[#allocation12 + $0xa8] sm:$0xff]
    %v774 = vld [vmem:[#allocation12 + $0xb0] sm:$0xff]
    %v775 = vld [vmem:[#allocation12 + $0xb8] sm:$0xff]
    %v776 = vld [vmem:[#allocation12 + $0xc0] sm:$0xff]
    %v777 = vld [vmem:[#allocation12 + $0xc8] sm:$0xff]
    %v778 = vld [vmem:[#allocation12 + $0xd0] sm:$0xff]
    %v779 = vld [vmem:[#allocation12 + $0xd8] sm:$0xff]
    %v780 = vld [vmem:[#allocation12 + $0xe0] sm:$0xff]
    %v781 = vld [vmem:[#allocation12 + $0xe8] sm:$0xff]
    %v782 = vld [vmem:[#allocation12 + $0xf0] sm:$0xff]
    %v783 = vld [vmem:[#allocation12 + $0xf8] sm:$0xff]
    %v784 = vld [vmem:[#allocation12 + $0x100] sm:$0xff]
    %v785 = vld [vmem:[#allocation12 + $0x108] sm:$0xff]
    %v786 = vld [vmem:[#allocation12 + $0x110] sm:$0xff]
    %v787 = vld [vmem:[#allocation12 + $0x118] sm:$0xff]
    %v788 = vld [vmem:[#allocation12 + $0x120] sm:$0xff]
    %v789 = vld [vmem:[#allocation12 + $0x128] sm:$0xff]
    %v790 = vld [vmem:[#allocation12 + $0x130] sm:$0xff]
    %v791 = vld [vmem:[#allocation12 + $0x138] sm:$0xff]
    %v792 = vld [vmem:[#allocation12 + $0x140] sm:$0xff]
    %v793 = vld [vmem:[#allocation12 + $0x148] sm:$0xff]
    %v794 = vld [vmem:[#allocation12 + $0x150] sm:$0xff]
    %v795 = vld [vmem:[#allocation12 + $0x158] sm:$0xff]
    %v796 = vld [vmem:[#allocation12 + $0x160] sm:$0xff]
    %v797 = vld [vmem:[#allocation12 + $0x168] sm:$0xff]
    %v798 = vld [vmem:[#allocation12 + $0x170] sm:$0xff]
    %v799 = vld [vmem:[#allocation12 + $0x178] sm:$0xff]
    %v800 = vld [vmem:[#allocation15] sm:$0xff]
    %v801 = vld [vmem:[#allocation15 + $0x8] sm:$0xff]
    %v802 = vld [vmem:[#allocation15 + $0x10] sm:$0xff]
    %v803 = vld [vmem:[#allocation15 + $0x18] sm:$0xff]
    %v804 = vld [vmem:[#allocation15 + $0x20] sm:$0xff]
    %v805 = vld [vmem:[#allocation15 + $0x28] sm:$0xff]
    %v806 = vld [vmem:[#allocation15 + $0x30] sm:$0xff]
    %v807 = vld [vmem:[#allocation15 + $0x38] sm:$0xff]
    %v808 = vld [vmem:[#allocation15 + $0x40] sm:$0xff]
    %v809 = vld [vmem:[#allocation15 + $0x48] sm:$0xff]
    %v810 = vld [vmem:[#allocation15 + $0x50] sm:$0xff]
    %v811 = vld [vmem:[#allocation15 + $0x58] sm:$0xff]
    %v812 = vld [vmem:[#allocation15 + $0x60] sm:$0xff]
    %v813 = vld [vmem:[#allocation15 + $0x68] sm:$0xff]
    %v814 = vld [vmem:[#allocation15 + $0x70] sm:$0xff]
    %v815 = vld [vmem:[#allocation15 + $0x78] sm:$0xff]
    %v816 = vld [vmem:[#allocation15 + $0x80] sm:$0xff]
    %v817 = vld [vmem:[#allocation15 + $0x88] sm:$0xff]
    %v818 = vld [vmem:[#allocation15 + $0x90] sm:$0xff]
    %v819 = vld [vmem:[#allocation15 + $0x98] sm:$0xff]
    %v820 = vld [vmem:[#allocation15 + $0xa0] sm:$0xff]
    %v821 = vld [vmem:[#allocation15 + $0xa8] sm:$0xff]
    %v822 = vld [vmem:[#allocation15 + $0xb0] sm:$0xff]
    %v823 = vld [vmem:[#allocation15 + $0xb8] sm:$0xff]
    %v824 = vld [vmem:[#allocation15 + $0xc0] sm:$0xff]
    %v825 = vld [vmem:[#allocation15 + $0xc8] sm:$0xff]
    %v826 = vld [vmem:[#allocation15 + $0xd0] sm:$0xff]
    %v827 = vld [vmem:[#allocation15 + $0xd8] sm:$0xff]
    %v828 = vld [vmem:[#allocation15 + $0xe0] sm:$0xff]
    %v829 = vld [vmem:[#allocation15 + $0xe8] sm:$0xff]
    %v830 = vld [vmem:[#allocation15 + $0xf0] sm:$0xff]
    %v831 = vld [vmem:[#allocation15 + $0xf8] sm:$0xff]
    %v832 = vld [vmem:[#allocation15 + $0x100] sm:$0xff]
    %v833 = vld [vmem:[#allocation15 + $0x108] sm:$0xff]
    %v834 = vld [vmem:[#allocation15 + $0x110] sm:$0xff]
    %v835 = vld [vmem:[#allocation15 + $0x118] sm:$0xff]
    %v836 = vld [vmem:[#allocation15 + $0x120] sm:$0xff]
    %v837 = vld [vmem:[#allocation15 + $0x128] sm:$0xff]
    %v838 = vld [vmem:[#allocation15 + $0x130] sm:$0xff]
    %v839 = vld [vmem:[#allocation15 + $0x138] sm:$0xff]
    %v840 = vld [vmem:[#allocation15 + $0x140] sm:$0xff]
    %v841 = vld [vmem:[#allocation15 + $0x148] sm:$0xff]
    %v842 = vld [vmem:[#allocation15 + $0x150] sm:$0xff]
    %v843 = vld [vmem:[#allocation15 + $0x158] sm:$0xff]
    %v844 = vld [vmem:[#allocation15 + $0x160] sm:$0xff]
    %v845 = vld [vmem:[#allocation15 + $0x168] sm:$0xff]
    %v846 = vld [vmem:[#allocation15 + $0x170] sm:$0xff]
    %v847 = vld [vmem:[#allocation15 + $0x178] sm:$0xff]
    %v848 = vld [vmem:[%s7] sm:$0x1]
    %v850 = vlaneseq
    %v851 = vshrl.u32 %v850, 7
    %v852 = vsub.s32 0, %v851
    %v853 = vrot.slane %v848, %v852
    %v855 = vld [vmem:[%s11] sm:$0x1]
    %v857 = vlaneseq
    %v858 = vshrl.u32 %v857, 7
    %v859 = vsub.s32 0, %v858
    %v860 = vrot.slane %v855, %v859
    %v862 = vld [vmem:[%s1] sm:$0xff]
    %vm863 = vcmp.gt.s32.totalorder %v862, 0
    %v864 = vsel %vm863, 1, 0
    %v865 = vcvt.s32.f32 %v864
    %v866 = vld [vmem:[#allocation2] sm:$0xff]
    %v867 = vld [vmem:[#allocation2 + $0x8] sm:$0xff]
    %v868 = vld [vmem:[#allocation2 + $0x10] sm:$0xff]
    %869 = vmatprep.subr.mxu0 %v753
    %870 = vmatpush1.msra.mxu0 %v752
    %871 = vmatprep.subr.mxu0 %v756
    %872 = vmatpush1.msra.mxu0 %v755
    %873 = vmatprep.subr.mxu0 %v759
    %874 = vmatpush1.msra.mxu0 %v758
    %875 = vmatprep.subr.mxu0 %v762
    %876 = vmatpush1.msra.mxu0 %v761
    %877 = vmatprep.subr.mxu0 %v765
    %878 = vmatpush1.msra.mxu0 %v764
    %879 = vmatprep.subr.mxu0 %v768
    %880 = vmatpush1.msra.mxu0 %v767
    %881 = vmatprep.subr.mxu0 %v771
    %882 = vmatpush1.msra.mxu0 %v770
    %883 = vmatprep.subr.mxu0 %v774
    %884 = vmatpush1.msra.mxu0 %v773
    %885 = vmatprep.subr.mxu0 %v777
    %886 = vmatpush1.msra.mxu0 %v776
    %887 = vmatprep.subr.mxu0 %v780
    %888 = vmatpush1.msra.mxu0 %v779
    %889 = vmatprep.subr.mxu0 %v783
    %890 = vmatpush1.msra.mxu0 %v782
    %891 = vmatprep.subr.mxu0 %v786
    %892 = vmatpush1.msra.mxu0 %v785
    %893 = vmatprep.subr.mxu0 %v789
    %894 = vmatpush1.msra.mxu0 %v788
    %895 = vmatprep.subr.mxu0 %v792
    %896 = vmatpush1.msra.mxu0 %v791
    %897 = vmatprep.subr.mxu0 %v795
    %898 = vmatpush1.msra.mxu0 %v794
    %899 = vmatprep.subr.mxu0 %v798
    %900 = vmatpush1.msra.mxu0 %v797
    %901 = vmatprep.subr.mxu0 0.0
    %902 = vmatpush1.msra.mxu0 0.0
    %903 = vmatprep.subr.mxu0 0.0
    %904 = vmatpush1.msra.mxu0 0.0
    %905 = vmatprep.subr.mxu0 0.0
    %906 = vmatpush1.msra.mxu0 0.0
    %907 = vmatprep.subr.mxu0 0.0
    %908 = vmatpush1.msra.mxu0 0.0
    %909 = vmatprep.subr.mxu0 0.0
    %910 = vmatpush1.msra.mxu0 0.0
    %911 = vmatprep.subr.mxu0 0.0
    %912 = vmatpush1.msra.mxu0 0.0
    %913 = vmatprep.subr.mxu0 0.0
    %914 = vmatpush1.msra.mxu0 0.0
    %915 = vmatprep.subr.mxu0 0.0
    %916 = vmatpush1.msra.mxu0 0.0
    %917 = vmatprep.subr.mxu0 0.0
    %918 = vmatpush1.msra.mxu0 0.0
    %919 = vmatprep.subr.mxu0 0.0
    %920 = vmatpush1.msra.mxu0 0.0
    %921 = vmatprep.subr.mxu0 0.0
    %922 = vmatpush1.msra.mxu0 0.0
    %923 = vmatprep.subr.mxu0 0.0
    %924 = vmatpush1.msra.mxu0 0.0
    %925 = vmatprep.subr.mxu0 0.0
    %926 = vmatpush1.msra.mxu0 0.0
    %927 = vmatprep.subr.mxu0 0.0
    %928 = vmatpush1.msra.mxu0 0.0
    %929 = vmatprep.subr.mxu0 0.0
    %930 = vmatpush1.msra.mxu0 0.0
    %931 = vmatprep.subr.mxu0 0.0
    %932 = vmatpush1.msra.mxu0 0.0
    %933 = vmatprep.mubr.f32.mxu0 0.0
    %934 = vmatmul.mubr.f32.gmra.mrb[0].mxu0 0.0
    %v935 = vpop.f32.mrb[0].mxu0
    %v936 = vadd.f32 0.0, %v935
    %v937 = vpop.f32.mrb[0].mxu0
    %v938 = vadd.f32 0.0, %v937
    %939 = vdwg.mxu0
    %940 = vmatprep.subr.mxu0 0.0
    %941 = vmatpush1.msra.mxu0 %v754
    %942 = vmatprep.subr.mxu0 0.0
    %943 = vmatpush1.msra.mxu0 %v757
    %944 = vmatprep.subr.mxu0 0.0
    %945 = vmatpush1.msra.mxu0 %v760
    %946 = vmatprep.subr.mxu0 0.0
    %947 = vmatpush1.msra.mxu0 %v763
    %948 = vmatprep.subr.mxu0 0.0
    %949 = vmatpush1.msra.mxu0 %v766
    %950 = vmatprep.subr.mxu0 0.0
    %951 = vmatpush1.msra.mxu0 %v769
    %952 = vmatprep.subr.mxu0 0.0
    %953 = vmatpush1.msra.mxu0 %v772
    %954 = vmatprep.subr.mxu0 0.0
    %955 = vmatpush1.msra.mxu0 %v775
    %956 = vmatprep.subr.mxu0 0.0
    %957 = vmatpush1.msra.mxu0 %v778
    %958 = vmatprep.subr.mxu0 0.0
    %959 = vmatpush1.msra.mxu0 %v781
    %960 = vmatprep.subr.mxu0 0.0
    %961 = vmatpush1.msra.mxu0 %v784
    %962 = vmatprep.subr.mxu0 0.0
    %963 = vmatpush1.msra.mxu0 %v787
    %964 = vmatprep.subr.mxu0 0.0
    %965 = vmatpush1.msra.mxu0 %v790
    %966 = vmatprep.subr.mxu0 0.0
    %967 = vmatpush1.msra.mxu0 %v793
    %968 = vmatprep.subr.mxu0 0.0
    %969 = vmatpush1.msra.mxu0 %v796
    %970 = vmatprep.subr.mxu0 0.0
    %971 = vmatpush1.msra.mxu0 %v799
    %972 = vmatprep.subr.mxu0 0.0
    %973 = vmatpush1.msra.mxu0 0.0
    %974 = vmatprep.subr.mxu0 0.0
    %975 = vmatpush1.msra.mxu0 0.0
    %976 = vmatprep.subr.mxu0 0.0
    %977 = vmatpush1.msra.mxu0 0.0
    %978 = vmatprep.subr.mxu0 0.0
    %979 = vmatpush1.msra.mxu0 0.0
    %980 = vmatprep.subr.mxu0 0.0
    %981 = vmatpush1.msra.mxu0 0.0
    %982 = vmatprep.subr.mxu0 0.0
    %983 = vmatpush1.msra.mxu0 0.0
    %984 = vmatprep.subr.mxu0 0.0
    %985 = vmatpush1.msra.mxu0 0.0
    %986 = vmatprep.subr.mxu0 0.0
    %987 = vmatpush1.msra.mxu0 0.0
    %988 = vmatprep.subr.mxu0 0.0
    %989 = vmatpush1.msra.mxu0 0.0
    %990 = vmatprep.subr.mxu0 0.0
    %991 = vmatpush1.msra.mxu0 0.0
    %992 = vmatprep.subr.mxu0 0.0
    %993 = vmatpush1.msra.mxu0 0.0
    %994 = vmatprep.subr.mxu0 0.0
    %995 = vmatpush1.msra.mxu0 0.0
    %996 = vmatprep.subr.mxu0 0.0
    %997 = vmatpush1.msra.mxu0 0.0
    %998 = vmatprep.subr.mxu0 0.0
    %999 = vmatpush1.msra.mxu0 0.0
    %1000 = vmatprep.subr.mxu0 0.0
    %1001 = vmatpush1.msra.mxu0 0.0
    %1002 = vmatprep.subr.mxu0 0.0
    %1003 = vmatpush1.msra.mxu0 0.0
    %1004 = vmatprep.mubr.f32.mxu0 0.0
    %1005 = vmatmul.mubr.f32.gmra.mrb[0].mxu0 0.0
    %v1006 = vpop.f32.mrb[0].mxu0
    %v1007 = vadd.f32 0.0, %v1006
    %v1008 = vpop.f32.mrb[0].mxu0
    %1009 = vdwg.mxu0
    %v1010 = vadd.f32 %v866, %v936
    %v1011 = vadd.f32 %v867, %v938
    %v1012 = vxor.u32 %v1010, 2147483648
    %v1013 = vxor.u32 %v1011, 2147483648
    %v1014 = vmul.f32 %v1012, 1.442695
    %v1015 = vpow.pop %v1014
    %v1016 = vmul.f32 %v1013, 1.442695
    %v1017 = vpow.pop %v1016
    %v1018 = vadd.f32 %v1015, 1.0
    %v1019 = vadd.f32 %v1017, 1.0
    %v1020 = vrcp.pop %v1018
    %v1021 = vmul.f32 1.0, %v1020
    %v1022 = vrcp.pop %v1019
    %v1023 = vmul.f32 1.0, %v1022
    %v1024 = vadd.f32 %v1007, %v853
    %v1025 = vmul.f32 %v1021, %v1024
    %v1026 = vadd.f32 %v868, %v1025
    %v1027 = vtanh.pop %v1026
    %v1028 = vsub.f32 0.0, %v1027
    %v1029 = vmul.f32 %v1023, %v1028
    %v1030 = vadd.f32 %v1027, %v1029
    %1032 = vset.pattern.permute.xlu0 0
    %1033 = vperm.xlu0 %1032, %v865
    %v1034 = vpop.permute.xlu0 %1033
    %v1036 = vmul.f32 %v1034, %v1030
    %v1037 = vadd.f32 %v1036, 0.0
    %v1038 = vmul.f32 %v1034, %v1037
    %1039 = vst [vmem:[#allocation4] sm:$0xff] %v1038
    %vm1040 = vcmp.gt.s32.totalorder %v862, 1
    %v1041 = vsel %vm1040, 1, 0
    %v1042 = vcvt.s32.f32 %v1041
    %s1043 = scalar_lea.vmem [#allocation2], 24
    %v1044 = vld [vmem:[%s1043] sm:$0xff]
    %v1045 = vld [vmem:[%s1043 + $0x8] sm:$0xff]
    %v1046 = vld [vmem:[%s1043 + $0x10] sm:$0xff]
    %1047 = vmatprep.subr.mxu0 %v753
    %1048 = vmatpush1.msra.mxu0 %v752
    %1049 = vmatprep.subr.mxu0 %v756
    %1050 = vmatpush1.msra.mxu0 %v755
    %1051 = vmatprep.subr.mxu0 %v759
    %1052 = vmatpush1.msra.mxu0 %v758
    %1053 = vmatprep.subr.mxu0 %v762
    %1054 = vmatpush1.msra.mxu0 %v761
    %1055 = vmatprep.subr.mxu0 %v765
    %1056 = vmatpush1.msra.mxu0 %v764
    %1057 = vmatprep.subr.mxu0 %v768
    %1058 = vmatpush1.msra.mxu0 %v767
    %1059 = vmatprep.subr.mxu0 %v771
    %1060 = vmatpush1.msra.mxu0 %v770
    %1061 = vmatprep.subr.mxu0 %v774
    %1062 = vmatpush1.msra.mxu0 %v773
    %1063 = vmatprep.subr.mxu0 %v777
    %1064 = vmatpush1.msra.mxu0 %v776
    %1065 = vmatprep.subr.mxu0 %v780
    %1066 = vmatpush1.msra.mxu0 %v779
    %1067 = vmatprep.subr.mxu0 %v783
    %1068 = vmatpush1.msra.mxu0 %v782
    %1069 = vmatprep.subr.mxu0 %v786
    %1070 = vmatpush1.msra.mxu0 %v785
    %1071 = vmatprep.subr.mxu0 %v789
    %1072 = vmatpush1.msra.mxu0 %v788
    %1073 = vmatprep.subr.mxu0 %v792
    %1074 = vmatpush1.msra.mxu0 %v791
    %1075 = vmatprep.subr.mxu0 %v795
    %1076 = vmatpush1.msra.mxu0 %v794
    %1077 = vmatprep.subr.mxu0 %v798
    %1078 = vmatpush1.msra.mxu0 %v797
    %1079 = vmatprep.subr.mxu0 0.0
    %1080 = vmatpush1.msra.mxu0 0.0
    %1081 = vmatprep.subr.mxu0 0.0
    %1082 = vmatpush1.msra.mxu0 0.0
    %1083 = vmatprep.subr.mxu0 0.0
    %1084 = vmatpush1.msra.mxu0 0.0
    %1085 = vmatprep.subr.mxu0 0.0
    %1086 = vmatpush1.msra.mxu0 0.0
    %1087 = vmatprep.subr.mxu0 0.0
    %1088 = vmatpush1.msra.mxu0 0.0
    %1089 = vmatprep.subr.mxu0 0.0
    %1090 = vmatpush1.msra.mxu0 0.0
    %1091 = vmatprep.subr.mxu0 0.0
    %1092 = vmatpush1.msra.mxu0 0.0
    %1093 = vmatprep.subr.mxu0 0.0
    %1094 = vmatpush1.msra.mxu0 0.0
    %1095 = vmatprep.subr.mxu0 0.0
    %1096 = vmatpush1.msra.mxu0 0.0
    %1097 = vmatprep.subr.mxu0 0.0
    %1098 = vmatpush1.msra.mxu0 0.0
    %1099 = vmatprep.subr.mxu0 0.0
    %1100 = vmatpush1.msra.mxu0 0.0
    %1101 = vmatprep.subr.mxu0 0.0
    %1102 = vmatpush1.msra.mxu0 0.0
    %1103 = vmatprep.subr.mxu0 0.0
    %1104 = vmatpush1.msra.mxu0 0.0
    %1105 = vmatprep.subr.mxu0 0.0
    %1106 = vmatpush1.msra.mxu0 0.0
    %1107 = vmatprep.subr.mxu0 0.0
    %1108 = vmatpush1.msra.mxu0 0.0
    %1109 = vmatprep.subr.mxu0 0.0
    %1110 = vmatpush1.msra.mxu0 0.0
    %1111 = vmatprep.mubr.f32.mxu0 0.0
    %1112 = vmatmul.mubr.f32.gmra.mrb[0].mxu0 %v1037
    %v1113 = vpop.f32.mrb[0].mxu0
    %v1114 = vadd.f32 0.0, %v1113
    %v1115 = vpop.f32.mrb[0].mxu0
    %v1116 = vadd.f32 0.0, %v1115
    %1117 = vdwg.mxu0
    %1118 = vmatprep.subr.mxu0 0.0
    %1119 = vmatpush1.msra.mxu0 %v754
    %1120 = vmatprep.subr.mxu0 0.0
    %1121 = vmatpush1.msra.mxu0 %v757
    %1122 = vmatprep.subr.mxu0 0.0
    %1123 = vmatpush1.msra.mxu0 %v760
    %1124 = vmatprep.subr.mxu0 0.0
    %1125 = vmatpush1.msra.mxu0 %v763
    %1126 = vmatprep.subr.mxu0 0.0
    %1127 = vmatpush1.msra.mxu0 %v766
    %1128 = vmatprep.subr.mxu0 0.0
    %1129 = vmatpush1.msra.mxu0 %v769
    %1130 = vmatprep.subr.mxu0 0.0
    %1131 = vmatpush1.msra.mxu0 %v772
    %1132 = vmatprep.subr.mxu0 0.0
    %1133 = vmatpush1.msra.mxu0 %v775
    %1134 = vmatprep.subr.mxu0 0.0
    %1135 = vmatpush1.msra.mxu0 %v778
    %1136 = vmatprep.subr.mxu0 0.0
    %1137 = vmatpush1.msra.mxu0 %v781
    %1138 = vmatprep.subr.mxu0 0.0
    %1139 = vmatpush1.msra.mxu0 %v784
    %1140 = vmatprep.subr.mxu0 0.0
    %1141 = vmatpush1.msra.mxu0 %v787
    %1142 = vmatprep.subr.mxu0 0.0
    %1143 = vmatpush1.msra.mxu0 %v790
    %1144 = vmatprep.subr.mxu0 0.0
    %1145 = vmatpush1.msra.mxu0 %v793
    %1146 = vmatprep.subr.mxu0 0.0
    %1147 = vmatpush1.msra.mxu0 %v796
    %1148 = vmatprep.subr.mxu0 0.0
    %1149 = vmatpush1.msra.mxu0 %v799
    %1150 = vmatprep.subr.mxu0 0.0
    %1151 = vmatpush1.msra.mxu0 0.0
    %1152 = vmatprep.subr.mxu0 0.0
    %1153 = vmatpush1.msra.mxu0 0.0
    %1154 = vmatprep.subr.mxu0 0.0
    %1155 = vmatpush1.msra.mxu0 0.0
    %1156 = vmatprep.subr.mxu0 0.0
    %1157 = vmatpush1.msra.mxu0 0.0
    %1158 = vmatprep.subr.mxu0 0.0
    %1159 = vmatpush1.msra.mxu0 0.0
    %1160 = vmatprep.subr.mxu0 0.0
    %1161 = vmatpush1.msra.mxu0 0.0
    %1162 = vmatprep.subr.mxu0 0.0
    %1163 = vmatpush1.msra.mxu0 0.0
    %1164 = vmatprep.subr.mxu0 0.0
    %1165 = vmatpush1.msra.mxu0 0.0
    %1166 = vmatprep.subr.mxu0 0.0
    %1167 = vmatpush1.msra.mxu0 0.0
    %1168 = vmatprep.subr.mxu0 0.0
    %1169 = vmatpush1.msra.mxu0 0.0
    %1170 = vmatprep.subr.mxu0 0.0
    %1171 = vmatpush1.msra.mxu0 0.0
    %1172 = vmatprep.subr.mxu0 0.0
    %1173 = vmatpush1.msra.mxu0 0.0
    %1174 = vmatprep.subr.mxu0 0.0
    %1175 = vmatpush1.msra.mxu0 0.0
    %1176 = vmatprep.subr.mxu0 0.0
    %1177 = vmatpush1.msra.mxu0 0.0
    %1178 = vmatprep.subr.mxu0 0.0
    %1179 = vmatpush1.msra.mxu0 0.0
    %1180 = vmatprep.subr.mxu0 0.0
    %1181 = vmatpush1.msra.mxu0 0.0
    %1182 = vmatprep.mubr.f32.mxu0 0.0
    %1183 = vmatmul.mubr.f32.gmra.mrb[0].mxu0 %v1037
    %v1184 = vpop.f32.mrb[0].mxu0
    %v1185 = vadd.f32 0.0, %v1184
    %v1186 = vpop.f32.mrb[0].mxu0
    %1187 = vdwg.mxu0
    %v1188 = vadd.f32 %v1044, %v1114
    %v1189 = vadd.f32 %v1045, %v1116
    %v1190 = vxor.u32 %v1188, 2147483648
    %v1191 = vxor.u32 %v1189, 2147483648
    %v1192 = vmul.f32 %v1190, 1.442695
    %v1193 = vpow.pop %v1192
    %v1194 = vmul.f32 %v1191, 1.442695
    %v1195 = vpow.pop %v1194
    %v1196 = vadd.f32 %v1193, 1.0
    %v1197 = vadd.f32 %v1195, 1.0
    %v1198 = vrcp.pop %v1196
    %v1199 = vmul.f32 1.0, %v1198
    %v1200 = vrcp.pop %v1197
    %v1201 = vmul.f32 1.0, %v1200
    %v1202 = vadd.f32 %v1185, %v853
    %v1203 = vmul.f32 %v1199, %v1202
    %v1204 = vadd.f32 %v1046, %v1203
    %v1205 = vtanh.pop %v1204
    %v1206 = vsub.f32 %v1037, %v1205
    %v1207 = vmul.f32 %v1201, %v1206
    %v1208 = vadd.f32 %v1205, %v1207
    %v1209 = vsub.f32 %v1208, %v1037
    %1211 = vset.pattern.permute.xlu0 0
    %1212 = vperm.xlu0 %1211, %v1042
    %v1213 = vpop.permute.xlu0 %1212
    %v1215 = vmul.f32 %v1213, %v1209
    %v1216 = vadd.f32 %v1037, %v1215
    %v1217 = vmul.f32 %v1213, %v1216
    %s1218 = scalar_lea.vmem [#allocation4], 8
    %1219 = vst [vmem:[%s1218] sm:$0xff] %v1217
    %vm1220 = vcmp.gt.s32.totalorder %v862, 2
    %v1221 = vsel %vm1220, 1, 0
    %v1222 = vcvt.s32.f32 %v1221
    %s1223 = scalar_lea.vmem [#allocation2], 48
    %v1224 = vld [vmem:[%s1223] sm:$0xff]
    %v1225 = vld [vmem:[%s1223 + $0x8] sm:$0xff]
    %v1226 = vld [vmem:[%s1223 + $0x10] sm:$0xff]
    %1227 = vmatprep.subr.mxu0 %v753
    %1228 = vmatpush1.msra.mxu0 %v752
    %1229 = vmatprep.subr.mxu0 %v756
    %1230 = vmatpush1.msra.mxu0 %v755
    %1231 = vmatprep.subr.mxu0 %v759
    %1232 = vmatpush1.msra.mxu0 %v758
    %1233 = vmatprep.subr.mxu0 %v762
    %1234 = vmatpush1.msra.mxu0 %v761
    %1235 = vmatprep.subr.mxu0 %v765
    %1236 = vmatpush1.msra.mxu0 %v764
    %1237 = vmatprep.subr.mxu0 %v768
    %1238 = vmatpush1.msra.mxu0 %v767
    %1239 = vmatprep.subr.mxu0 %v771
    %1240 = vmatpush1.msra.mxu0 %v770
    %1241 = vmatprep.subr.mxu0 %v774
    %1242 = vmatpush1.msra.mxu0 %v773
    %1243 = vmatprep.subr.mxu0 %v777
    %1244 = vmatpush1.msra.mxu0 %v776
    %1245 = vmatprep.subr.mxu0 %v780
    %1246 = vmatpush1.msra.mxu0 %v779
    %1247 = vmatprep.subr.mxu0 %v783
    %1248 = vmatpush1.msra.mxu0 %v782
    %1249 = vmatprep.subr.mxu0 %v786
    %1250 = vmatpush1.msra.mxu0 %v785
    %1251 = vmatprep.subr.mxu0 %v789
    %1252 = vmatpush1.msra.mxu0 %v788
    %1253 = vmatprep.subr.mxu0 %v792
    %1254 = vmatpush1.msra.mxu0 %v791
    %1255 = vmatprep.subr.mxu0 %v795
    %1256 = vmatpush1.msra.mxu0 %v794
    %1257 = vmatprep.subr.mxu0 %v798
    %1258 = vmatpush1.msra.mxu0 %v797
    %1259 = vmatprep.subr.mxu0 0.0
    %1260 = vmatpush1.msra.mxu0 0.0
    %1261 = vmatprep.subr.mxu0 0.0
    %1262 = vmatpush1.msra.mxu0 0.0
    %1263 = vmatprep.subr.mxu0 0.0
    %1264 = vmatpush1.msra.mxu0 0.0
    %1265 = vmatprep.subr.mxu0 0.0
    %1266 = vmatpush1.msra.mxu0 0.0
    %1267 = vmatprep.subr.mxu0 0.0
    %1268 = vmatpush1.msra.mxu0 0.0
    %1269 = vmatprep.subr.mxu0 0.0
    %1270 = vmatpush1.msra.mxu0 0.0
    %1271 = vmatprep.subr.mxu0 0.0
    %1272 = vmatpush1.msra.mxu0 0.0
    %1273 = vmatprep.subr.mxu0 0.0
    %1274 = vmatpush1.msra.mxu0 0.0
    %1275 = vmatprep.subr.mxu0 0.0
    %1276 = vmatpush1.msra.mxu0 0.0
    %1277 = vmatprep.subr.mxu0 0.0
    %1278 = vmatpush1.msra.mxu0 0.0
    %1279 = vmatprep.subr.mxu0 0.0
    %1280 = vmatpush1.msra.mxu0 0.0
    %1281 = vmatprep.subr.mxu0 0.0
    %1282 = vmatpush1.msra.mxu0 0.0
    %1283 = vmatprep.subr.mxu0 0.0
    %1284 = vmatpush1.msra.mxu0 0.0
    %1285 = vmatprep.subr.mxu0 0.0
    %1286 = vmatpush1.msra.mxu0 0.0
    %1287 = vmatprep.subr.mxu0 0.0
    %1288 = vmatpush1.msra.mxu0 0.0
    %1289 = vmatprep.subr.mxu0 0.0
    %1290 = vmatpush1.msra.mxu0 0.0
    %1291 = vmatprep.mubr.f32.mxu0 0.0
    %1292 = vmatmul.mubr.f32.gmra.mrb[0].mxu0 %v1216
    %v1293 = vpop.f32.mrb[0].mxu0
    %v1294 = vadd.f32 0.0, %v1293
    %v1295 = vpop.f32.mrb[0].mxu0
    %v1296 = vadd.f32 0.0, %v1295
    %1297 = vdwg.mxu0
    %1298 = vmatprep.subr.mxu0 0.0
    %1299 = vmatpush1.msra.mxu0 %v754
    %1300 = vmatprep.subr.mxu0 0.0
    %1301 = vmatpush1.msra.mxu0 %v757
    %1302 = vmatprep.subr.mxu0 0.0
    %1303 = vmatpush1.msra.mxu0 %v760
    %1304 = vmatprep.subr.mxu0 0.0
    %1305 = vmatpush1.msra.mxu0 %v763
    %1306 = vmatprep.subr.mxu0 0.0
    %1307 = vmatpush1.msra.mxu0 %v766
    %1308 = vmatprep.subr.mxu0 0.0
    %1309 = vmatpush1.msra.mxu0 %v769
    %1310 = vmatprep.subr.mxu0 0.0
    %1311 = vmatpush1.msra.mxu0 %v772
    %1312 = vmatprep.subr.mxu0 0.0
    %1313 = vmatpush1.msra.mxu0 %v775
    %1314 = vmatprep.subr.mxu0 0.0
    %1315 = vmatpush1.msra.mxu0 %v778
    %1316 = vmatprep.subr.mxu0 0.0
    %1317 = vmatpush1.msra.mxu0 %v781
    %1318 = vmatprep.subr.mxu0 0.0
    %1319 = vmatpush1.msra.mxu0 %v784
    %1320 = vmatprep.subr.mxu0 0.0
    %1321 = vmatpush1.msra.mxu0 %v787
    %1322 = vmatprep.subr.mxu0 0.0
    %1323 = vmatpush1.msra.mxu0 %v790
    %1324 = vmatprep.subr.mxu0 0.0
    %1325 = vmatpush1.msra.mxu0 %v793
    %1326 = vmatprep.subr.mxu0 0.0
    %1327 = vmatpush1.msra.mxu0 %v796
    %1328 = vmatprep.subr.mxu0 0.0
    %1329 = vmatpush1.msra.mxu0 %v799
    %1330 = vmatprep.subr.mxu0 0.0
    %1331 = vmatpush1.msra.mxu0 0.0
    %1332 = vmatprep.subr.mxu0 0.0
    %1333 = vmatpush1.msra.mxu0 0.0
    %1334 = vmatprep.subr.mxu0 0.0
    %1335 = vmatpush1.msra.mxu0 0.0
    %1336 = vmatprep.subr.mxu0 0.0
    %1337 = vmatpush1.msra.mxu0 0.0
    %1338 = vmatprep.subr.mxu0 0.0
    %1339 = vmatpush1.msra.mxu0 0.0
    %1340 = vmatprep.subr.mxu0 0.0
    %1341 = vmatpush1.msra.mxu0 0.0
    %1342 = vmatprep.subr.mxu0 0.0
    %1343 = vmatpush1.msra.mxu0 0.0
    %1344 = vmatprep.subr.mxu0 0.0
    %1345 = vmatpush1.msra.mxu0 0.0
    %1346 = vmatprep.subr.mxu0 0.0
    %1347 = vmatpush1.msra.mxu0 0.0
    %1348 = vmatprep.subr.mxu0 0.0
    %1349 = vmatpush1.msra.mxu0 0.0
    %1350 = vmatprep.subr.mxu0 0.0
    %1351 = vmatpush1.msra.mxu0 0.0
    %1352 = vmatprep.subr.mxu0 0.0
    %1353 = vmatpush1.msra.mxu0 0.0
    %1354 = vmatprep.subr.mxu0 0.0
    %1355 = vmatpush1.msra.mxu0 0.0
    %1356 = vmatprep.subr.mxu0 0.0
    %1357 = vmatpush1.msra.mxu0 0.0
    %1358 = vmatprep.subr.mxu0 0.0
    %1359 = vmatpush1.msra.mxu0 0.0
    %1360 = vmatprep.subr.mxu0 0.0
    %1361 = vmatpush1.msra.mxu0 0.0
    %1362 = vmatprep.mubr.f32.mxu0 0.0
    %1363 = vmatmul.mubr.f32.gmra.mrb[0].mxu0 %v1216
    %v1364 = vpop.f32.mrb[0].mxu0
    %v1365 = vadd.f32 0.0, %v1364
    %v1366 = vpop.f32.mrb[0].mxu0
    %1367 = vdwg.mxu0
    %v1368 = vadd.f32 %v1224, %v1294
    %v1369 = vadd.f32 %v1225, %v1296
    %v1370 = vxor.u32 %v1368, 2147483648
    %v1371 = vxor.u32 %v1369, 2147483648
    %v1372 = vmul.f32 %v1370, 1.442695
    %v1373 = vpow.pop %v1372
    %v1374 = vmul.f32 %v1371, 1.442695
    %v1375 = vpow.pop %v1374
    %v1376 = vadd.f32 %v1373, 1.0
    %v1377 = vadd.f32 %v1375, 1.0
    %v1378 = vrcp.pop %v1376
    %v1379 = vmul.f32 1.0, %v1378
    %v1380 = vrcp.pop %v1377
    %v1381 = vmul.f32 1.0, %v1380
    %v1382 = vadd.f32 %v1365, %v853
    %v1383 = vmul.f32 %v1379, %v1382
    %v1384 = vadd.f32 %v1226, %v1383
    %v1385 = vtanh.pop %v1384
    %v1386 = vsub.f32 %v1216, %v1385
    %v1387 = vmul.f32 %v1381, %v1386
    %v1388 = vadd.f32 %v1385, %v1387
    %v1389 = vsub.f32 %v1388, %v1216
    %1391 = vset.pattern.permute.xlu0 0
    %1392 = vperm.xlu0 %1391, %v1222
    %v1393 = vpop.permute.xlu0 %1392
    %v1395 = vmul.f32 %v1393, %v1389
    %v1396 = vadd.f32 %v1216, %v1395
    %v1397 = vmul.f32 %v1393, %v1396
    %s1398 = scalar_lea.vmem [#allocation4], 16
    %1399 = vst [vmem:[%s1398] sm:$0xff] %v1397
    %vm1400 = vcmp.gt.s32.totalorder %v862, 3
    %v1401 = vsel %vm1400, 1, 0
    %v1402 = vcvt.s32.f32 %v1401
    %s1403 = scalar_lea.vmem [#allocation2], 72
    %v1404 = vld [vmem:[%s1403] sm:$0xff]
    %v1405 = vld [vmem:[%s1403 + $0x8] sm:$0xff]
    %v1406 = vld [vmem:[%s1403 + $0x10] sm:$0xff]
    %1407 = vmatprep.subr.mxu0 %v753
    %1408 = vmatpush1.msra.mxu0 %v752
    %1409 = vmatprep.subr.mxu0 %v756
    %1410 = vmatpush1.msra.mxu0 %v755
    %1411 = vmatprep.subr.mxu0 %v759
    %1412 = vmatpush1.msra.mxu0 %v758
    %1413 = vmatprep.subr.mxu0 %v762
    %1414 = vmatpush1.msra.mxu0 %v761
    %1415 = vmatprep.subr.mxu0 %v765
    %1416 = vmatpush1.msra.mxu0 %v764
    %1417 = vmatprep.subr.mxu0 %v768
    %1418 = vmatpush1.msra.mxu0 %v767
    %1419 = vmatprep.subr.mxu0 %v771
    %1420 = vmatpush1.msra.mxu0 %v770
    %1421 = vmatprep.subr.mxu0 %v774
    %1422 = vmatpush1.msra.mxu0 %v773
    %1423 = vmatprep.subr.mxu0 %v777
    %1424 = vmatpush1.msra.mxu0 %v776
    %1425 = vmatprep.subr.mxu0 %v780
    %1426 = vmatpush1.msra.mxu0 %v779
    %1427 = vmatprep.subr.mxu0 %v783
    %1428 = vmatpush1.msra.mxu0 %v782
    %1429 = vmatprep.subr.mxu0 %v786
    %1430 = vmatpush1.msra.mxu0 %v785
    %1431 = vmatprep.subr.mxu0 %v789
    %1432 = vmatpush1.msra.mxu0 %v788
    %1433 = vmatprep.subr.mxu0 %v792
    %1434 = vmatpush1.msra.mxu0 %v791
    %1435 = vmatprep.subr.mxu0 %v795
    %1436 = vmatpush1.msra.mxu0 %v794
    %1437 = vmatprep.subr.mxu0 %v798
    %1438 = vmatpush1.msra.mxu0 %v797
    %1439 = vmatprep.subr.mxu0 0.0
    %1440 = vmatpush1.msra.mxu0 0.0
    %1441 = vmatprep.subr.mxu0 0.0
    %1442 = vmatpush1.msra.mxu0 0.0
    %1443 = vmatprep.subr.mxu0 0.0
    %1444 = vmatpush1.msra.mxu0 0.0
    %1445 = vmatprep.subr.mxu0 0.0
    %1446 = vmatpush1.msra.mxu0 0.0
    %1447 = vmatprep.subr.mxu0 0.0
    %1448 = vmatpush1.msra.mxu0 0.0
    %1449 = vmatprep.subr.mxu0 0.0
    %1450 = vmatpush1.msra.mxu0 0.0
    %1451 = vmatprep.subr.mxu0 0.0
    %1452 = vmatpush1.msra.mxu0 0.0
    %1453 = vmatprep.subr.mxu0 0.0
    %1454 = vmatpush1.msra.mxu0 0.0
    %1455 = vmatprep.subr.mxu0 0.0
    %1456 = vmatpush1.msra.mxu0 0.0
    %1457 = vmatprep.subr.mxu0 0.0
    %1458 = vmatpush1.msra.mxu0 0.0
    %1459 = vmatprep.subr.mxu0 0.0
    %1460 = vmatpush1.msra.mxu0 0.0
    %1461 = vmatprep.subr.mxu0 0.0
    %1462 = vmatpush1.msra.mxu0 0.0
    %1463 = vmatprep.subr.mxu0 0.0
    %1464 = vmatpush1.msra.mxu0 0.0
    %1465 = vmatprep.subr.mxu0 0.0
    %1466 = vmatpush1.msra.mxu0 0.0
    %1467 = vmatprep.subr.mxu0 0.0
    %1468 = vmatpush1.msra.mxu0 0.0
    %1469 = vmatprep.subr.mxu0 0.0
    %1470 = vmatpush1.msra.mxu0 0.0
    %1471 = vmatprep.mubr.f32.mxu0 0.0
    %1472 = vmatmul.mubr.f32.gmra.mrb[0].mxu0 %v1396
    %v1473 = vpop.f32.mrb[0].mxu0
    %v1474 = vadd.f32 0.0, %v1473
    %v1475 = vpop.f32.mrb[0].mxu0
    %v1476 = vadd.f32 0.0, %v1475
    %1477 = vdwg.mxu0
    %1478 = vmatprep.subr.mxu0 0.0
    %1479 = vmatpush1.msra.mxu0 %v754
    %1480 = vmatprep.subr.mxu0 0.0
    %1481 = vmatpush1.msra.mxu0 %v757
    %1482 = vmatprep.subr.mxu0 0.0
    %1483 = vmatpush1.msra.mxu0 %v760
    %1484 = vmatprep.subr.mxu0 0.0
    %1485 = vmatpush1.msra.mxu0 %v763
    %1486 = vmatprep.subr.mxu0 0.0
    %1487 = vmatpush1.msra.mxu0 %v766
    %1488 = vmatprep.subr.mxu0 0.0
    %1489 = vmatpush1.msra.mxu0 %v769
    %1490 = vmatprep.subr.mxu0 0.0
    %1491 = vmatpush1.msra.mxu0 %v772
    %1492 = vmatprep.subr.mxu0 0.0
    %1493 = vmatpush1.msra.mxu0 %v775
    %1494 = vmatprep.subr.mxu0 0.0
    %1495 = vmatpush1.msra.mxu0 %v778
    %1496 = vmatprep.subr.mxu0 0.0
    %1497 = vmatpush1.msra.mxu0 %v781
    %1498 = vmatprep.subr.mxu0 0.0
    %1499 = vmatpush1.msra.mxu0 %v784
    %1500 = vmatprep.subr.mxu0 0.0
    %1501 = vmatpush1.msra.mxu0 %v787
    %1502 = vmatprep.subr.mxu0 0.0
    %1503 = vmatpush1.msra.mxu0 %v790
    %1504 = vmatprep.subr.mxu0 0.0
    %1505 = vmatpush1.msra.mxu0 %v793
    %1506 = vmatprep.subr.mxu0 0.0
    %1507 = vmatpush1.msra.mxu0 %v796
    %1508 = vmatprep.subr.mxu0 0.0
    %1509 = vmatpush1.msra.mxu0 %v799
    %1510 = vmatprep.subr.mxu0 0.0
    %1511 = vmatpush1.msra.mxu0 0.0
    %1512 = vmatprep.subr.mxu0 0.0
    %1513 = vmatpush1.msra.mxu0 0.0
    %1514 = vmatprep.subr.mxu0 0.0
    %1515 = vmatpush1.msra.mxu0 0.0
    %1516 = vmatprep.subr.mxu0 0.0
    %1517 = vmatpush1.msra.mxu0 0.0
    %1518 = vmatprep.subr.mxu0 0.0
    %1519 = vmatpush1.msra.mxu0 0.0
    %1520 = vmatprep.subr.mxu0 0.0
    %1521 = vmatpush1.msra.mxu0 0.0
    %1522 = vmatprep.subr.mxu0 0.0
    %1523 = vmatpush1.msra.mxu0 0.0
    %1524 = vmatprep.subr.mxu0 0.0
    %1525 = vmatpush1.msra.mxu0 0.0
    %1526 = vmatprep.subr.mxu0 0.0
    %1527 = vmatpush1.msra.mxu0 0.0
    %1528 = vmatprep.subr.mxu0 0.0
    %1529 = vmatpush1.msra.mxu0 0.0
    %1530 = vmatprep.subr.mxu0 0.0
    %1531 = vmatpush1.msra.mxu0 0.0
    %1532 = vmatprep.subr.mxu0 0.0
    %1533 = vmatpush1.msra.mxu0 0.0
    %1534 = vmatprep.subr.mxu0 0.0
    %1535 = vmatpush1.msra.mxu0 0.0
    %1536 = vmatprep.subr.mxu0 0.0
    %1537 = vmatpush1.msra.mxu0 0.0
    %1538 = vmatprep.subr.mxu0 0.0
    %1539 = vmatpush1.msra.mxu0 0.0
    %1540 = vmatprep.subr.mxu0 0.0
    %1541 = vmatpush1.msra.mxu0 0.0
    %1542 = vmatprep.mubr.f32.mxu0 0.0
    %1543 = vmatmul.mubr.f32.gmra.mrb[0].mxu0 %v1396
    %v1544 = vpop.f32.mrb[0].mxu0
    %v1545 = vadd.f32 0.0, %v1544
    %v1546 = vpop.f32.mrb[0].mxu0
    %1547 = vdwg.mxu0
    %v1548 = vadd.f32 %v1404, %v1474
    %v1549 = vadd.f32 %v1405, %v1476
    %v1550 = vxor.u32 %v1548, 2147483648
    %v1551 = vxor.u32 %v1549, 2147483648
    %v1552 = vmul.f32 %v1550, 1.442695
    %v1553 = vpow.pop %v1552
    %v1554 = vmul.f32 %v1551, 1.442695
    %v1555 = vpow.pop %v1554
    %v1556 = vadd.f32 %v1553, 1.0
    %v1557 = vadd.f32 %v1555, 1.0
    %v1558 = vrcp.pop %v1556
    %v1559 = vmul.f32 1.0, %v1558
    %v1560 = vrcp.pop %v1557
    %v1561 = vmul.f32 1.0, %v1560
    %v1562 = vadd.f32 %v1545, %v853
    %v1563 = vmul.f32 %v1559, %v1562
    %v1564 = vadd.f32 %v1406, %v1563
    %v1565 = vtanh.pop %v1564
    %v1566 = vsub.f32 %v1396, %v1565
    %v1567 = vmul.f32 %v1561, %v1566
    %v1568 = vadd.f32 %v1565, %v1567
    %v1569 = vsub.f32 %v1568, %v1396
    %1571 = vset.pattern.permute.xlu0 0
    %1572 = vperm.xlu0 %1571, %v1402
    %v1573 = vpop.permute.xlu0 %1572
    %v1575 = vmul.f32 %v1573, %v1569
    %v1576 = vadd.f32 %v1396, %v1575
    %v1577 = vmul.f32 %v1573, %v1576
    %s1578 = scalar_lea.vmem [#allocation4], 24
    %1579 = vst [vmem:[%s1578] sm:$0xff] %v1577
    %vm1580 = vcmp.gt.s32.totalorder %v862, 4
    %v1581 = vsel %vm1580, 1, 0
    %v1582 = vcvt.s32.f32 %v1581
    %s1583 = scalar_lea.vmem [#allocation2], 96
    %v1584 = vld [vmem:[%s1583] sm:$0xff]
    %v1585 = vld [vmem:[%s1583 + $0x8] sm:$0xff]
    %v1586 = vld [vmem:[%s1583 + $0x10] sm:$0xff]
    %1587 = vmatprep.subr.mxu0 %v753
    %1588 = vmatpush1.msra.mxu0 %v752
    %1589 = vmatprep.subr.mxu0 %v756
    %1590 = vmatpush1.msra.mxu0 %v755
    %1591 = vmatprep.subr.mxu0 %v759
    %1592 = vmatpush1.msra.mxu0 %v758
    %1593 = vmatprep.subr.mxu0 %v762
    %1594 = vmatpush1.msra.mxu0 %v761
    %1595 = vmatprep.subr.mxu0 %v765
    %1596 = vmatpush1.msra.mxu0 %v764
    %1597 = vmatprep.subr.mxu0 %v768
    %1598 = vmatpush1.msra.mxu0 %v767
    %1599 = vmatprep.subr.mxu0 %v771
    %1600 = vmatpush1.msra.mxu0 %v770
    %1601 = vmatprep.subr.mxu0 %v774
    %1602 = vmatpush1.msra.mxu0 %v773
    %1603 = vmatprep.subr.mxu0 %v777
    %1604 = vmatpush1.msra.mxu0 %v776
    %1605 = vmatprep.subr.mxu0 %v780
    %1606 = vmatpush1.msra.mxu0 %v779
    %1607 = vmatprep.subr.mxu0 %v783
    %1608 = vmatpush1.msra.mxu0 %v782
    %1609 = vmatprep.subr.mxu0 %v786
    %1610 = vmatpush1.msra.mxu0 %v785
    %1611 = vmatprep.subr.mxu0 %v789
    %1612 = vmatpush1.msra.mxu0 %v788
    %1613 = vmatprep.subr.mxu0 %v792
    %1614 = vmatpush1.msra.mxu0 %v791
    %1615 = vmatprep.subr.mxu0 %v795
    %1616 = vmatpush1.msra.mxu0 %v794
    %1617 = vmatprep.subr.mxu0 %v798
    %1618 = vmatpush1.msra.mxu0 %v797
    %1619 = vmatprep.subr.mxu0 0.0
    %1620 = vmatpush1.msra.mxu0 0.0
    %1621 = vmatprep.subr.mxu0 0.0
    %1622 = vmatpush1.msra.mxu0 0.0
    %1623 = vmatprep.subr.mxu0 0.0
    %1624 = vmatpush1.msra.mxu0 0.0
    %1625 = vmatprep.subr.mxu0 0.0
    %1626 = vmatpush1.msra.mxu0 0.0
    %1627 = vmatprep.subr.mxu0 0.0
    %1628 = vmatpush1.msra.mxu0 0.0
    %1629 = vmatprep.subr.mxu0 0.0
    %1630 = vmatpush1.msra.mxu0 0.0
    %1631 = vmatprep.subr.mxu0 0.0
    %1632 = vmatpush1.msra.mxu0 0.0
    %1633 = vmatprep.subr.mxu0 0.0
    %1634 = vmatpush1.msra.mxu0 0.0
    %1635 = vmatprep.subr.mxu0 0.0
    %1636 = vmatpush1.msra.mxu0 0.0
    %1637 = vmatprep.subr.mxu0 0.0
    %1638 = vmatpush1.msra.mxu0 0.0
    %1639 = vmatprep.subr.mxu0 0.0
    %1640 = vmatpush1.msra.mxu0 0.0
    %1641 = vmatprep.subr.mxu0 0.0
    %1642 = vmatpush1.msra.mxu0 0.0
    %1643 = vmatprep.subr.mxu0 0.0
    %1644 = vmatpush1.msra.mxu0 0.0
    %1645 = vmatprep.subr.mxu0 0.0
    %1646 = vmatpush1.msra.mxu0 0.0
    %1647 = vmatprep.subr.mxu0 0.0
    %1648 = vmatpush1.msra.mxu0 0.0
    %1649 = vmatprep.subr.mxu0 0.0
    %1650 = vmatpush1.msra.mxu0 0.0
    %1651 = vmatprep.mubr.f32.mxu0 0.0
    %1652 = vmatmul.mubr.f32.gmra.mrb[0].mxu0 %v1576
    %v1653 = vpop.f32.mrb[0].mxu0
    %v1654 = vadd.f32 0.0, %v1653
    %v1655 = vpop.f32.mrb[0].mxu0
    %v1656 = vadd.f32 0.0, %v1655
    %1657 = vdwg.mxu0
    %1658 = vmatprep.subr.mxu0 0.0
    %1659 = vmatpush1.msra.mxu0 %v754
    %1660 = vmatprep.subr.mxu0 0.0
    %1661 = vmatpush1.msra.mxu0 %v757
    %1662 = vmatprep.subr.mxu0 0.0
    %1663 = vmatpush1.msra.mxu0 %v760
    %1664 = vmatprep.subr.mxu0 0.0
    %1665 = vmatpush1.msra.mxu0 %v763
    %1666 = vmatprep.subr.mxu0 0.0
    %1667 = vmatpush1.msra.mxu0 %v766
    %1668 = vmatprep.subr.mxu0 0.0
    %1669 = vmatpush1.msra.mxu0 %v769
    %1670 = vmatprep.subr.mxu0 0.0
    %1671 = vmatpush1.msra.mxu0 %v772
    %1672 = vmatprep.subr.mxu0 0.0
    %1673 = vmatpush1.msra.mxu0 %v775
    %1674 = vmatprep.subr.mxu0 0.0
    %1675 = vmatpush1.msra.mxu0 %v778
    %1676 = vmatprep.subr.mxu0 0.0
    %1677 = vmatpush1.msra.mxu0 %v781
    %1678 = vmatprep.subr.mxu0 0.0
    %1679 = vmatpush1.msra.mxu0 %v784
    %1680 = vmatprep.subr.mxu0 0.0
    %1681 = vmatpush1.msra.mxu0 %v787
    %1682 = vmatprep.subr.mxu0 0.0
    %1683 = vmatpush1.msra.mxu0 %v790
    %1684 = vmatprep.subr.mxu0 0.0
    %1685 = vmatpush1.msra.mxu0 %v793
    %1686 = vmatprep.subr.mxu0 0.0
    %1687 = vmatpush1.msra.mxu0 %v796
    %1688 = vmatprep.subr.mxu0 0.0
    %1689 = vmatpush1.msra.mxu0 %v799
    %1690 = vmatprep.subr.mxu0 0.0
    %1691 = vmatpush1.msra.mxu0 0.0
    %1692 = vmatprep.subr.mxu0 0.0
    %1693 = vmatpush1.msra.mxu0 0.0
    %1694 = vmatprep.subr.mxu0 0.0
    %1695 = vmatpush1.msra.mxu0 0.0
    %1696 = vmatprep.subr.mxu0 0.0
    %1697 = vmatpush1.msra.mxu0 0.0
    %1698 = vmatprep.subr.mxu0 0.0
    %1699 = vmatpush1.msra.mxu0 0.0
    %1700 = vmatprep.subr.mxu0 0.0
    %1701 = vmatpush1.msra.mxu0 0.0
    %1702 = vmatprep.subr.mxu0 0.0
    %1703 = vmatpush1.msra.mxu0 0.0
    %1704 = vmatprep.subr.mxu0 0.0
    %1705 = vmatpush1.msra.mxu0 0.0
    %1706 = vmatprep.subr.mxu0 0.0
    %1707 = vmatpush1.msra.mxu0 0.0
    %1708 = vmatprep.subr.mxu0 0.0
    %1709 = vmatpush1.msra.mxu0 0.0
    %1710 = vmatprep.subr.mxu0 0.0
    %1711 = vmatpush1.msra.mxu0 0.0
    %1712 = vmatprep.subr.mxu0 0.0
    %1713 = vmatpush1.msra.mxu0 0.0
    %1714 = vmatprep.subr.mxu0 0.0
    %1715 = vmatpush1.msra.mxu0 0.0
    %1716 = vmatprep.subr.mxu0 0.0
    %1717 = vmatpush1.msra.mxu0 0.0
    %1718 = vmatprep.subr.mxu0 0.0
    %1719 = vmatpush1.msra.mxu0 0.0
    %1720 = vmatprep.subr.mxu0 0.0
    %1721 = vmatpush1.msra.mxu0 0.0
    %1722 = vmatprep.mubr.f32.mxu0 0.0
    %1723 = vmatmul.mubr.f32.gmra.mrb[0].mxu0 %v1576
    %v1724 = vpop.f32.mrb[0].mxu0
    %v1725 = vadd.f32 0.0, %v1724
    %v1726 = vpop.f32.mrb[0].mxu0
    %1727 = vdwg.mxu0
    %v1728 = vadd.f32 %v1584, %v1654
    %v1729 = vadd.f32 %v1585, %v1656
    %v1730 = vxor.u32 %v1728, 2147483648
    %v1731 = vxor.u32 %v1729, 2147483648
    %v1732 = vmul.f32 %v1730, 1.442695
    %v1733 = vpow.pop %v1732
    %v1734 = vmul.f32 %v1731, 1.442695
    %v1735 = vpow.pop %v1734
    %v1736 = vadd.f32 %v1733, 1.0
    %v1737 = vadd.f32 %v1735, 1.0
    %v1738 = vrcp.pop %v1736
    %v1739 = vmul.f32 1.0, %v1738
    %v1740 = vrcp.pop %v1737
    %v1741 = vmul.f32 1.0, %v1740
    %v1742 = vadd.f32 %v1725, %v853
    %v1743 = vmul.f32 %v1739, %v1742
    %v1744 = vadd.f32 %v1586, %v1743
    %v1745 = vtanh.pop %v1744
    %v1746 = vsub.f32 %v1576, %v1745
    %v1747 = vmul.f32 %v1741, %v1746
    %v1748 = vadd.f32 %v1745, %v1747
    %v1749 = vsub.f32 %v1748, %v1576
    %1751 = vset.pattern.permute.xlu0 0
    %1752 = vperm.xlu0 %1751, %v1582
    %v1753 = vpop.permute.xlu0 %1752
    %v1755 = vmul.f32 %v1753, %v1749
    %v1756 = vadd.f32 %v1576, %v1755
    %v1757 = vmul.f32 %v1753, %v1756
    %s1758 = scalar_lea.vmem [#allocation4], 32
    %1759 = vst [vmem:[%s1758] sm:$0xff] %v1757
    %vm1760 = vcmp.gt.s32.totalorder %v862, 5
    %v1761 = vsel %vm1760, 1, 0
    %v1762 = vcvt.s32.f32 %v1761
    %s1763 = scalar_lea.vmem [#allocation2], 120
    %v1764 = vld [vmem:[%s1763] sm:$0xff]
    %v1765 = vld [vmem:[%s1763 + $0x8] sm:$0xff]
    %v1766 = vld [vmem:[%s1763 + $0x10] sm:$0xff]
    %1767 = vmatprep.subr.mxu0 %v753
    %1768 = vmatpush1.msra.mxu0 %v752
    %1769 = vmatprep.subr.mxu0 %v756
    %1770 = vmatpush1.msra.mxu0 %v755
    %1771 = vmatprep.subr.mxu0 %v759
    %1772 = vmatpush1.msra.mxu0 %v758
    %1773 = vmatprep.subr.mxu0 %v762
    %1774 = vmatpush1.msra.mxu0 %v761
    %1775 = vmatprep.subr.mxu0 %v765
    %1776 = vmatpush1.msra.mxu0 %v764
    %1777 = vmatprep.subr.mxu0 %v768
    %1778 = vmatpush1.msra.mxu0 %v767
    %1779 = vmatprep.subr.mxu0 %v771
    %1780 = vmatpush1.msra.mxu0 %v770
    %1781 = vmatprep.subr.mxu0 %v774
    %1782 = vmatpush1.msra.mxu0 %v773
    %1783 = vmatprep.subr.mxu0 %v777
    %1784 = vmatpush1.msra.mxu0 %v776
    %1785 = vmatprep.subr.mxu0 %v780
    %1786 = vmatpush1.msra.mxu0 %v779
    %1787 = vmatprep.subr.mxu0 %v783
    %1788 = vmatpush1.msra.mxu0 %v782
    %1789 = vmatprep.subr.mxu0 %v786
    %1790 = vmatpush1.msra.mxu0 %v785
    %1791 = vmatprep.subr.mxu0 %v789
    %1792 = vmatpush1.msra.mxu0 %v788
    %1793 = vmatprep.subr.mxu0 %v792
    %1794 = vmatpush1.msra.mxu0 %v791
    %1795 = vmatprep.subr.mxu0 %v795
    %1796 = vmatpush1.msra.mxu0 %v794
    %1797 = vmatprep.subr.mxu0 %v798
    %1798 = vmatpush1.msra.mxu0 %v797
    %1799 = vmatprep.subr.mxu0 0.0
    %1800 = vmatpush1.msra.mxu0 0.0
    %1801 = vmatprep.subr.mxu0 0.0
    %1802 = vmatpush1.msra.mxu0 0.0
    %1803 = vmatprep.subr.mxu0 0.0
    %1804 = vmatpush1.msra.mxu0 0.0
    %1805 = vmatprep.subr.mxu0 0.0
    %1806 = vmatpush1.msra.mxu0 0.0
    %1807 = vmatprep.subr.mxu0 0.0
    %1808 = vmatpush1.msra.mxu0 0.0
    %1809 = vmatprep.subr.mxu0 0.0
    %1810 = vmatpush1.msra.mxu0 0.0
    %1811 = vmatprep.subr.mxu0 0.0
    %1812 = vmatpush1.msra.mxu0 0.0
    %1813 = vmatprep.subr.mxu0 0.0
    %1814 = vmatpush1.msra.mxu0 0.0
    %1815 = vmatprep.subr.mxu0 0.0
    %1816 = vmatpush1.msra.mxu0 0.0
    %1817 = vmatprep.subr.mxu0 0.0
    %1818 = vmatpush1.msra.mxu0 0.0
    %1819 = vmatprep.subr.mxu0 0.0
    %1820 = vmatpush1.msra.mxu0 0.0
    %1821 = vmatprep.subr.mxu0 0.0
    %1822 = vmatpush1.msra.mxu0 0.0
    %1823 = vmatprep.subr.mxu0 0.0
    %1824 = vmatpush1.msra.mxu0 0.0
    %1825 = vmatprep.subr.mxu0 0.0
    %1826 = vmatpush1.msra.mxu0 0.0
    %1827 = vmatprep.subr.mxu0 0.0
    %1828 = vmatpush1.msra.mxu0 0.0
    %1829 = vmatprep.subr.mxu0 0.0
    %1830 = vmatpush1.msra.mxu0 0.0
    %1831 = vmatprep.mubr.f32.mxu0 0.0
    %1832 = vmatmul.mubr.f32.gmra.mrb[0].mxu0 %v1756
    %v1833 = vpop.f32.mrb[0].mxu0
    %v1834 = vadd.f32 0.0, %v1833
    %v1835 = vpop.f32.mrb[0].mxu0
    %v1836 = vadd.f32 0.0, %v1835
    %1837 = vdwg.mxu0
    %1838 = vmatprep.subr.mxu0 0.0
    %1839 = vmatpush1.msra.mxu0 %v754
    %1840 = vmatprep.subr.mxu0 0.0
    %1841 = vmatpush1.msra.mxu0 %v757
    %1842 = vmatprep.subr.mxu0 0.0
    %1843 = vmatpush1.msra.mxu0 %v760
    %1844 = vmatprep.subr.mxu0 0.0
    %1845 = vmatpush1.msra.mxu0 %v763
    %1846 = vmatprep.subr.mxu0 0.0
    %1847 = vmatpush1.msra.mxu0 %v766
    %1848 = vmatprep.subr.mxu0 0.0
    %1849 = vmatpush1.msra.mxu0 %v769
    %1850 = vmatprep.subr.mxu0 0.0
    %1851 = vmatpush1.msra.mxu0 %v772
    %1852 = vmatprep.subr.mxu0 0.0
    %1853 = vmatpush1.msra.mxu0 %v775
    %1854 = vmatprep.subr.mxu0 0.0
    %1855 = vmatpush1.msra.mxu0 %v778
    %1856 = vmatprep.subr.mxu0 0.0
    %1857 = vmatpush1.msra.mxu0 %v781
    %1858 = vmatprep.subr.mxu0 0.0
    %1859 = vmatpush1.msra.mxu0 %v784
    %1860 = vmatprep.subr.mxu0 0.0
    %1861 = vmatpush1.msra.mxu0 %v787
    %1862 = vmatprep.subr.mxu0 0.0
    %1863 = vmatpush1.msra.mxu0 %v790
    %1864 = vmatprep.subr.mxu0 0.0
    %1865 = vmatpush1.msra.mxu0 %v793
    %1866 = vmatprep.subr.mxu0 0.0
    %1867 = vmatpush1.msra.mxu0 %v796
    %1868 = vmatprep.subr.mxu0 0.0
    %1869 = vmatpush1.msra.mxu0 %v799
    %1870 = vmatprep.subr.mxu0 0.0
    %1871 = vmatpush1.msra.mxu0 0.0
    %1872 = vmatprep.subr.mxu0 0.0
    %1873 = vmatpush1.msra.mxu0 0.0
    %1874 = vmatprep.subr.mxu0 0.0
    %1875 = vmatpush1.msra.mxu0 0.0
    %1876 = vmatprep.subr.mxu0 0.0
    %1877 = vmatpush1.msra.mxu0 0.0
    %1878 = vmatprep.subr.mxu0 0.0
    %1879 = vmatpush1.msra.mxu0 0.0
    %1880 = vmatprep.subr.mxu0 0.0
    %1881 = vmatpush1.msra.mxu0 0.0
    %1882 = vmatprep.subr.mxu0 0.0
    %1883 = vmatpush1.msra.mxu0 0.0
    %1884 = vmatprep.subr.mxu0 0.0
    %1885 = vmatpush1.msra.mxu0 0.0
    %1886 = vmatprep.subr.mxu0 0.0
    %1887 = vmatpush1.msra.mxu0 0.0
    %1888 = vmatprep.subr.mxu0 0.0
    %1889 = vmatpush1.msra.mxu0 0.0
    %1890 = vmatprep.subr.mxu0 0.0
    %1891 = vmatpush1.msra.mxu0 0.0
    %1892 = vmatprep.subr.mxu0 0.0
    %1893 = vmatpush1.msra.mxu0 0.0
    %1894 = vmatprep.subr.mxu0 0.0
    %1895 = vmatpush1.msra.mxu0 0.0
    %1896 = vmatprep.subr.mxu0 0.0
    %1897 = vmatpush1.msra.mxu0 0.0
    %1898 = vmatprep.subr.mxu0 0.0
    %1899 = vmatpush1.msra.mxu0 0.0
    %1900 = vmatprep.subr.mxu0 0.0
    %1901 = vmatpush1.msra.mxu0 0.0
    %1902 = vmatprep.mubr.f32.mxu0 0.0
    %1903 = vmatmul.mubr.f32.gmra.mrb[0].mxu0 %v1756
    %v1904 = vpop.f32.mrb[0].mxu0
    %v1905 = vadd.f32 0.0, %v1904
    %v1906 = vpop.f32.mrb[0].mxu0
    %1907 = vdwg.mxu0
    %v1908 = vadd.f32 %v1764, %v1834
    %v1909 = vadd.f32 %v1765, %v1836
    %v1910 = vxor.u32 %v1908, 2147483648
    %v1911 = vxor.u32 %v1909, 2147483648
    %v1912 = vmul.f32 %v1910, 1.442695
    %v1913 = vpow.pop %v1912
    %v1914 = vmul.f32 %v1911, 1.442695
    %v1915 = vpow.pop %v1914
    %v1916 = vadd.f32 %v1913, 1.0
    %v1917 = vadd.f32 %v1915, 1.0
    %v1918 = vrcp.pop %v1916
    %v1919 = vmul.f32 1.0, %v1918
    %v1920 = vrcp.pop %v1917
    %v1921 = vmul.f32 1.0, %v1920
    %v1922 = vadd.f32 %v1905, %v853
    %v1923 = vmul.f32 %v1919, %v1922
    %v1924 = vadd.f32 %v1766, %v1923
    %v1925 = vtanh.pop %v1924
    %v1926 = vsub.f32 %v1756, %v1925
    %v1927 = vmul.f32 %v1921, %v1926
    %v1928 = vadd.f32 %v1925, %v1927
    %v1929 = vsub.f32 %v1928, %v1756
    %1931 = vset.pattern.permute.xlu0 0
    %1932 = vperm.xlu0 %1931, %v1762
    %v1933 = vpop.permute.xlu0 %1932
    %v1935 = vmul.f32 %v1933, %v1929
    %v1936 = vadd.f32 %v1756, %v1935
    %v1937 = vmul.f32 %v1933, %v1936
    %s1938 = scalar_lea.vmem [#allocation4], 40
    %1939 = vst [vmem:[%s1938] sm:$0xff] %v1937
    %vm1940 = vcmp.gt.s32.totalorder %v862, 6
    %v1941 = vsel %vm1940, 1, 0
    %v1942 = vcvt.s32.f32 %v1941
    %s1943 = scalar_lea.vmem [#allocation2], 144
    %v1944 = vld [vmem:[%s1943] sm:$0xff]
    %v1945 = vld [vmem:[%s1943 + $0x8] sm:$0xff]
    %v1946 = vld [vmem:[%s1943 + $0x10] sm:$0xff]
    %1947 = vmatprep.subr.mxu0 %v753
    %1948 = vmatpush1.msra.mxu0 %v752
    %1949 = vmatprep.subr.mxu0 %v756
    %1950 = vmatpush1.msra.mxu0 %v755
    %1951 = vmatprep.subr.mxu0 %v759
    %1952 = vmatpush1.msra.mxu0 %v758
    %1953 = vmatprep.subr.mxu0 %v762
    %1954 = vmatpush1.msra.mxu0 %v761
    %1955 = vmatprep.subr.mxu0 %v765
    %1956 = vmatpush1.msra.mxu0 %v764
    %1957 = vmatprep.subr.mxu0 %v768
    %1958 = vmatpush1.msra.mxu0 %v767
    %1959 = vmatprep.subr.mxu0 %v771
    %1960 = vmatpush1.msra.mxu0 %v770
    %1961 = vmatprep.subr.mxu0 %v774
    %1962 = vmatpush1.msra.mxu0 %v773
    %1963 = vmatprep.subr.mxu0 %v777
    %1964 = vmatpush1.msra.mxu0 %v776
    %1965 = vmatprep.subr.mxu0 %v780
    %1966 = vmatpush1.msra.mxu0 %v779
    %1967 = vmatprep.subr.mxu0 %v783
    %1968 = vmatpush1.msra.mxu0 %v782
    %1969 = vmatprep.subr.mxu0 %v786
    %1970 = vmatpush1.msra.mxu0 %v785
    %1971 = vmatprep.subr.mxu0 %v789
    %1972 = vmatpush1.msra.mxu0 %v788
    %1973 = vmatprep.subr.mxu0 %v792
    %1974 = vmatpush1.msra.mxu0 %v791
    %1975 = vmatprep.subr.mxu0 %v795
    %1976 = vmatpush1.msra.mxu0 %v794
    %1977 = vmatprep.subr.mxu0 %v798
    %1978 = vmatpush1.msra.mxu0 %v797
    %1979 = vmatprep.subr.mxu0 0.0
    %1980 = vmatpush1.msra.mxu0 0.0
    %1981 = vmatprep.subr.mxu0 0.0
    %1982 = vmatpush1.msra.mxu0 0.0
    %1983 = vmatprep.subr.mxu0 0.0
    %1984 = vmatpush1.msra.mxu0 0.0
    %1985 = vmatprep.subr.mxu0 0.0
    %1986 = vmatpush1.msra.mxu0 0.0
    %1987 = vmatprep.subr.mxu0 0.0
    %1988 = vmatpush1.msra.mxu0 0.0
    %1989 = vmatprep.subr.mxu0 0.0
    %1990 = vmatpush1.msra.mxu0 0.0
    %1991 = vmatprep.subr.mxu0 0.0
    %1992 = vmatpush1.msra.mxu0 0.0
    %1993 = vmatprep.subr.mxu0 0.0
    %1994 = vmatpush1.msra.mxu0 0.0
    %1995 = vmatprep.subr.mxu0 0.0
    %1996 = vmatpush1.msra.mxu0 0.0
    %1997 = vmatprep.subr.mxu0 0.0
    %1998 = vmatpush1.msra.mxu0 0.0
    %1999 = vmatprep.subr.mxu0 0.0
    %2000 = vmatpush1.msra.mxu0 0.0
    %2001 = vmatprep.subr.mxu0 0.0
    %2002 = vmatpush1.msra.mxu0 0.0
    %2003 = vmatprep.subr.mxu0 0.0
    %2004 = vmatpush1.msra.mxu0 0.0
    %2005 = vmatprep.subr.mxu0 0.0
    %2006 = vmatpush1.msra.mxu0 0.0
    %2007 = vmatprep.subr.mxu0 0.0
    %2008 = vmatpush1.msra.mxu0 0.0
    %2009 = vmatprep.subr.mxu0 0.0
    %2010 = vmatpush1.msra.mxu0 0.0
    %2011 = vmatprep.mubr.f32.mxu0 0.0
    %2012 = vmatmul.mubr.f32.gmra.mrb[0].mxu0 %v1936
    %v2013 = vpop.f32.mrb[0].mxu0
    %v2014 = vadd.f32 0.0, %v2013
    %v2015 = vpop.f32.mrb[0].mxu0
    %v2016 = vadd.f32 0.0, %v2015
    %2017 = vdwg.mxu0
    %2018 = vmatprep.subr.mxu0 0.0
    %2019 = vmatpush1.msra.mxu0 %v754
    %2020 = vmatprep.subr.mxu0 0.0
    %2021 = vmatpush1.msra.mxu0 %v757
    %2022 = vmatprep.subr.mxu0 0.0
    %2023 = vmatpush1.msra.mxu0 %v760
    %2024 = vmatprep.subr.mxu0 0.0
    %2025 = vmatpush1.msra.mxu0 %v763
    %2026 = vmatprep.subr.mxu0 0.0
    %2027 = vmatpush1.msra.mxu0 %v766
    %2028 = vmatprep.subr.mxu0 0.0
    %2029 = vmatpush1.msra.mxu0 %v769
    %2030 = vmatprep.subr.mxu0 0.0
    %2031 = vmatpush1.msra.mxu0 %v772
    %2032 = vmatprep.subr.mxu0 0.0
    %2033 = vmatpush1.msra.mxu0 %v775
    %2034 = vmatprep.subr.mxu0 0.0
    %2035 = vmatpush1.msra.mxu0 %v778
    %2036 = vmatprep.subr.mxu0 0.0
    %2037 = vmatpush1.msra.mxu0 %v781
    %2038 = vmatprep.subr.mxu0 0.0
    %2039 = vmatpush1.msra.mxu0 %v784
    %2040 = vmatprep.subr.mxu0 0.0
    %2041 = vmatpush1.msra.mxu0 %v787
    %2042 = vmatprep.subr.mxu0 0.0
    %2043 = vmatpush1.msra.mxu0 %v790
    %2044 = vmatprep.subr.mxu0 0.0
    %2045 = vmatpush1.msra.mxu0 %v793
    %2046 = vmatprep.subr.mxu0 0.0
    %2047 = vmatpush1.msra.mxu0 %v796
    %2048 = vmatprep.subr.mxu0 0.0
    %2049 = vmatpush1.msra.mxu0 %v799
    %2050 = vmatprep.subr.mxu0 0.0
    %2051 = vmatpush1.msra.mxu0 0.0
    %2052 = vmatprep.subr.mxu0 0.0
    %2053 = vmatpush1.msra.mxu0 0.0
    %2054 = vmatprep.subr.mxu0 0.0
    %2055 = vmatpush1.msra.mxu0 0.0
    %2056 = vmatprep.subr.mxu0 0.0
    %2057 = vmatpush1.msra.mxu0 0.0
    %2058 = vmatprep.subr.mxu0 0.0
    %2059 = vmatpush1.msra.mxu0 0.0
    %2060 = vmatprep.subr.mxu0 0.0
    %2061 = vmatpush1.msra.mxu0 0.0
    %2062 = vmatprep.subr.mxu0 0.0
    %2063 = vmatpush1.msra.mxu0 0.0
    %2064 = vmatprep.subr.mxu0 0.0
    %2065 = vmatpush1.msra.mxu0 0.0
    %2066 = vmatprep.subr.mxu0 0.0
    %2067 = vmatpush1.msra.mxu0 0.0
    %2068 = vmatprep.subr.mxu0 0.0
    %2069 = vmatpush1.msra.mxu0 0.0
    %2070 = vmatprep.subr.mxu0 0.0
    %2071 = vmatpush1.msra.mxu0 0.0
    %2072 = vmatprep.subr.mxu0 0.0
    %2073 = vmatpush1.msra.mxu0 0.0
    %2074 = vmatprep.subr.mxu0 0.0
    %2075 = vmatpush1.msra.mxu0 0.0
    %2076 = vmatprep.subr.mxu0 0.0
    %2077 = vmatpush1.msra.mxu0 0.0
    %2078 = vmatprep.subr.mxu0 0.0
    %2079 = vmatpush1.msra.mxu0 0.0
    %2080 = vmatprep.subr.mxu0 0.0
    %2081 = vmatpush1.msra.mxu0 0.0
    %2082 = vmatprep.mubr.f32.mxu0 0.0
    %2083 = vmatmul.mubr.f32.gmra.mrb[0].mxu0 %v1936
    %v2084 = vpop.f32.mrb[0].mxu0
    %v2085 = vadd.f32 0.0, %v2084
    %v2086 = vpop.f32.mrb[0].mxu0
    %2087 = vdwg.mxu0
    %v2088 = vadd.f32 %v1944, %v2014
    %v2089 = vadd.f32 %v1945, %v2016
    %v2090 = vxor.u32 %v2088, 2147483648
    %v2091 = vxor.u32 %v2089, 2147483648
    %v2092 = vmul.f32 %v2090, 1.442695
    %v2093 = vpow.pop %v2092
    %v2094 = vmul.f32 %v2091, 1.442695
    %v2095 = vpow.pop %v2094
    %v2096 = vadd.f32 %v2093, 1.0
    %v2097 = vadd.f32 %v2095, 1.0
    %v2098 = vrcp.pop %v2096
    %v2099 = vmul.f32 1.0, %v2098
    %v2100 = vrcp.pop %v2097
    %v2101 = vmul.f32 1.0, %v2100
    %v2102 = vadd.f32 %v2085, %v853
    %v2103 = vmul.f32 %v2099, %v2102
    %v2104 = vadd.f32 %v1946, %v2103
    %v2105 = vtanh.pop %v2104
    %v2106 = vsub.f32 %v1936, %v2105
    %v2107 = vmul.f32 %v2101, %v2106
    %v2108 = vadd.f32 %v2105, %v2107
    %v2109 = vsub.f32 %v2108, %v1936
    %2111 = vset.pattern.permute.xlu0 0
    %2112 = vperm.xlu0 %2111, %v1942
    %v2113 = vpop.permute.xlu0 %2112
    %v2115 = vmul.f32 %v2113, %v2109
    %v2116 = vadd.f32 %v1936, %v2115
    %v2117 = vmul.f32 %v2113, %v2116
    %s2118 = scalar_lea.vmem [#allocation4], 48
    %2119 = vst [vmem:[%s2118] sm:$0xff] %v2117
    %vm2120 = vcmp.gt.s32.totalorder %v862, 7
    %v2121 = vsel %vm2120, 1, 0
    %v2122 = vcvt.s32.f32 %v2121
    %s2123 = scalar_lea.vmem [#allocation2], 168
    %v2124 = vld [vmem:[%s2123] sm:$0xff]
    %v2125 = vld [vmem:[%s2123 + $0x8] sm:$0xff]
    %v2126 = vld [vmem:[%s2123 + $0x10] sm:$0xff]
    %2127 = vmatprep.subr.mxu0 %v753
    %2128 = vmatpush1.msra.mxu0 %v752
    %2129 = vmatprep.subr.mxu0 %v756
    %2130 = vmatpush1.msra.mxu0 %v755
    %2131 = vmatprep.subr.mxu0 %v759
    %2132 = vmatpush1.msra.mxu0 %v758
    %2133 = vmatprep.subr.mxu0 %v762
    %2134 = vmatpush1.msra.mxu0 %v761
    %2135 = vmatprep.subr.mxu0 %v765
    %2136 = vmatpush1.msra.mxu0 %v764
    %2137 = vmatprep.subr.mxu0 %v768
    %2138 = vmatpush1.msra.mxu0 %v767
    %2139 = vmatprep.subr.mxu0 %v771
    %2140 = vmatpush1.msra.mxu0 %v770
    %2141 = vmatprep.subr.mxu0 %v774
    %2142 = vmatpush1.msra.mxu0 %v773
    %2143 = vmatprep.subr.mxu0 %v777
    %2144 = vmatpush1.msra.mxu0 %v776
    %2145 = vmatprep.subr.mxu0 %v780
    %2146 = vmatpush1.msra.mxu0 %v779
    %2147 = vmatprep.subr.mxu0 %v783
    %2148 = vmatpush1.msra.mxu0 %v782
    %2149 = vmatprep.subr.mxu0 %v786
    %2150 = vmatpush1.msra.mxu0 %v785
    %2151 = vmatprep.subr.mxu0 %v789
    %2152 = vmatpush1.msra.mxu0 %v788
    %2153 = vmatprep.subr.mxu0 %v792
    %2154 = vmatpush1.msra.mxu0 %v791
    %2155 = vmatprep.subr.mxu0 %v795
    %2156 = vmatpush1.msra.mxu0 %v794
    %2157 = vmatprep.subr.mxu0 %v798
    %2158 = vmatpush1.msra.mxu0 %v797
    %2159 = vmatprep.subr.mxu0 0.0
    %2160 = vmatpush1.msra.mxu0 0.0
    %2161 = vmatprep.subr.mxu0 0.0
    %2162 = vmatpush1.msra.mxu0 0.0
    %2163 = vmatprep.subr.mxu0 0.0
    %2164 = vmatpush1.msra.mxu0 0.0
    %2165 = vmatprep.subr.mxu0 0.0
    %2166 = vmatpush1.msra.mxu0 0.0
    %2167 = vmatprep.subr.mxu0 0.0
    %2168 = vmatpush1.msra.mxu0 0.0
    %2169 = vmatprep.subr.mxu0 0.0
    %2170 = vmatpush1.msra.mxu0 0.0
    %2171 = vmatprep.subr.mxu0 0.0
    %2172 = vmatpush1.msra.mxu0 0.0
    %2173 = vmatprep.subr.mxu0 0.0
    %2174 = vmatpush1.msra.mxu0 0.0
    %2175 = vmatprep.subr.mxu0 0.0
    %2176 = vmatpush1.msra.mxu0 0.0
    %2177 = vmatprep.subr.mxu0 0.0
    %2178 = vmatpush1.msra.mxu0 0.0
    %2179 = vmatprep.subr.mxu0 0.0
    %2180 = vmatpush1.msra.mxu0 0.0
    %2181 = vmatprep.subr.mxu0 0.0
    %2182 = vmatpush1.msra.mxu0 0.0
    %2183 = vmatprep.subr.mxu0 0.0
    %2184 = vmatpush1.msra.mxu0 0.0
    %2185 = vmatprep.subr.mxu0 0.0
    %2186 = vmatpush1.msra.mxu0 0.0
    %2187 = vmatprep.subr.mxu0 0.0
    %2188 = vmatpush1.msra.mxu0 0.0
    %2189 = vmatprep.subr.mxu0 0.0
    %2190 = vmatpush1.msra.mxu0 0.0
    %2191 = vmatprep.mubr.f32.mxu0 0.0
    %2192 = vmatmul.mubr.f32.gmra.mrb[0].mxu0 %v2116
    %v2193 = vpop.f32.mrb[0].mxu0
    %v2194 = vadd.f32 0.0, %v2193
    %v2195 = vpop.f32.mrb[0].mxu0
    %v2196 = vadd.f32 0.0, %v2195
    %2197 = vdwg.mxu0
    %2198 = vmatprep.subr.mxu0 0.0
    %2199 = vmatpush1.msra.mxu0 %v754
    %2200 = vmatprep.subr.mxu0 0.0
    %2201 = vmatpush1.msra.mxu0 %v757
    %2202 = vmatprep.subr.mxu0 0.0
    %2203 = vmatpush1.msra.mxu0 %v760
    %2204 = vmatprep.subr.mxu0 0.0
    %2205 = vmatpush1.msra.mxu0 %v763
    %2206 = vmatprep.subr.mxu0 0.0
    %2207 = vmatpush1.msra.mxu0 %v766
    %2208 = vmatprep.subr.mxu0 0.0
    %2209 = vmatpush1.msra.mxu0 %v769
    %2210 = vmatprep.subr.mxu0 0.0
    %2211 = vmatpush1.msra.mxu0 %v772
    %2212 = vmatprep.subr.mxu0 0.0
    %2213 = vmatpush1.msra.mxu0 %v775
    %2214 = vmatprep.subr.mxu0 0.0
    %2215 = vmatpush1.msra.mxu0 %v778
    %2216 = vmatprep.subr.mxu0 0.0
    %2217 = vmatpush1.msra.mxu0 %v781
    %2218 = vmatprep.subr.mxu0 0.0
    %2219 = vmatpush1.msra.mxu0 %v784
    %2220 = vmatprep.subr.mxu0 0.0
    %2221 = vmatpush1.msra.mxu0 %v787
    %2222 = vmatprep.subr.mxu0 0.0
    %2223 = vmatpush1.msra.mxu0 %v790
    %2224 = vmatprep.subr.mxu0 0.0
    %2225 = vmatpush1.msra.mxu0 %v793
    %2226 = vmatprep.subr.mxu0 0.0
    %2227 = vmatpush1.msra.mxu0 %v796
    %2228 = vmatprep.subr.mxu0 0.0
    %2229 = vmatpush1.msra.mxu0 %v799
    %2230 = vmatprep.subr.mxu0 0.0
    %2231 = vmatpush1.msra.mxu0 0.0
    %2232 = vmatprep.subr.mxu0 0.0
    %2233 = vmatpush1.msra.mxu0 0.0
    %2234 = vmatprep.subr.mxu0 0.0
    %2235 = vmatpush1.msra.mxu0 0.0
    %2236 = vmatprep.subr.mxu0 0.0
    %2237 = vmatpush1.msra.mxu0 0.0
    %2238 = vmatprep.subr.mxu0 0.0
    %2239 = vmatpush1.msra.mxu0 0.0
    %2240 = vmatprep.subr.mxu0 0.0
    %2241 = vmatpush1.msra.mxu0 0.0
    %2242 = vmatprep.subr.mxu0 0.0
    %2243 = vmatpush1.msra.mxu0 0.0
    %2244 = vmatprep.subr.mxu0 0.0
    %2245 = vmatpush1.msra.mxu0 0.0
    %2246 = vmatprep.subr.mxu0 0.0
    %2247 = vmatpush1.msra.mxu0 0.0
    %2248 = vmatprep.subr.mxu0 0.0
    %2249 = vmatpush1.msra.mxu0 0.0
    %2250 = vmatprep.subr.mxu0 0.0
    %2251 = vmatpush1.msra.mxu0 0.0
    %2252 = vmatprep.subr.mxu0 0.0
    %2253 = vmatpush1.msra.mxu0 0.0
    %2254 = vmatprep.subr.mxu0 0.0
    %2255 = vmatpush1.msra.mxu0 0.0
    %2256 = vmatprep.subr.mxu0 0.0
    %2257 = vmatpush1.msra.mxu0 0.0
    %2258 = vmatprep.subr.mxu0 0.0
    %2259 = vmatpush1.msra.mxu0 0.0
    %2260 = vmatprep.subr.mxu0 0.0
    %2261 = vmatpush1.msra.mxu0 0.0
    %2262 = vmatprep.mubr.f32.mxu0 0.0
    %2263 = vmatmul.mubr.f32.gmra.mrb[0].mxu0 %v2116
    %v2264 = vpop.f32.mrb[0].mxu0
    %v2265 = vadd.f32 0.0, %v2264
    %v2266 = vpop.f32.mrb[0].mxu0
    %2267 = vdwg.mxu0
    %v2268 = vadd.f32 %v2124, %v2194
    %v2269 = vadd.f32 %v2125, %v2196
    %v2270 = vxor.u32 %v2268, 2147483648
    %v2271 = vxor.u32 %v2269, 2147483648
    %v2272 = vmul.f32 %v2270, 1.442695
    %v2273 = vpow.pop %v2272
    %v2274 = vmul.f32 %v2271, 1.442695
    %v2275 = vpow.pop %v2274
    %v2276 = vadd.f32 %v2273, 1.0
    %v2277 = vadd.f32 %v2275, 1.0
    %v2278 = vrcp.pop %v2276
    %v2279 = vmul.f32 1.0, %v2278
    %v2280 = vrcp.pop %v2277
    %v2281 = vmul.f32 1.0, %v2280
    %v2282 = vadd.f32 %v2265, %v853
    %v2283 = vmul.f32 %v2279, %v2282
    %v2284 = vadd.f32 %v2126, %v2283
    %v2285 = vtanh.pop %v2284
    %v2286 = vsub.f32 %v2116, %v2285
    %v2287 = vmul.f32 %v2281, %v2286
    %v2288 = vadd.f32 %v2285, %v2287
    %v2289 = vsub.f32 %v2288, %v2116
    %2291 = vset.pattern.permute.xlu0 0
    %2292 = vperm.xlu0 %2291, %v2122
    %v2293 = vpop.permute.xlu0 %2292
    %v2295 = vmul.f32 %v2293, %v2289
    %v2296 = vadd.f32 %v2116, %v2295
    %v2297 = vmul.f32 %v2293, %v2296
    %s2298 = scalar_lea.vmem [#allocation4], 56
    %2299 = vst [vmem:[%s2298] sm:$0xff] %v2297
    %2300 = vst [vmem:[#allocation5] sm:$0xff] 0.0
    %2301 = vst [vmem:[#allocation6] sm:$0xff] -inf
    %s2302 = scalar_lea.vmem [#allocation3], 168
    %v2303 = vld [vmem:[%s2302] sm:$0xff]
    %v2304 = vld [vmem:[%s2302 + $0x8] sm:$0xff]
    %v2305 = vld [vmem:[%s2302 + $0x10] sm:$0xff]
    %2306 = vmatprep.subr.mxu0 %v801
    %2307 = vmatpush1.msra.mxu0 %v800
    %2308 = vmatprep.subr.mxu0 %v804
    %2309 = vmatpush1.msra.mxu0 %v803
    %2310 = vmatprep.subr.mxu0 %v807
    %2311 = vmatpush1.msra.mxu0 %v806
    %2312 = vmatprep.subr.mxu0 %v810
    %2313 = vmatpush1.msra.mxu0 %v809
    %2314 = vmatprep.subr.mxu0 %v813
    %2315 = vmatpush1.msra.mxu0 %v812
    %2316 = vmatprep.subr.mxu0 %v816
    %2317 = vmatpush1.msra.mxu0 %v815
    %2318 = vmatprep.subr.mxu0 %v819
    %2319 = vmatpush1.msra.mxu0 %v818
    %2320 = vmatprep.subr.mxu0 %v822
    %2321 = vmatpush1.msra.mxu0 %v821
    %2322 = vmatprep.subr.mxu0 %v825
    %2323 = vmatpush1.msra.mxu0 %v824
    %2324 = vmatprep.subr.mxu0 %v828
    %2325 = vmatpush1.msra.mxu0 %v827
    %2326 = vmatprep.subr.mxu0 %v831
    %2327 = vmatpush1.msra.mxu0 %v830
    %2328 = vmatprep.subr.mxu0 %v834
    %2329 = vmatpush1.msra.mxu0 %v833
    %2330 = vmatprep.subr.mxu0 %v837
    %2331 = vmatpush1.msra.mxu0 %v836
    %2332 = vmatprep.subr.mxu0 %v840
    %2333 = vmatpush1.msra.mxu0 %v839
    %2334 = vmatprep.subr.mxu0 %v843
    %2335 = vmatpush1.msra.mxu0 %v842
    %2336 = vmatprep.subr.mxu0 %v846
    %2337 = vmatpush1.msra.mxu0 %v845
    %2338 = vmatprep.subr.mxu0 0.0
    %2339 = vmatpush1.msra.mxu0 0.0
    %2340 = vmatprep.subr.mxu0 0.0
    %2341 = vmatpush1.msra.mxu0 0.0
    %2342 = vmatprep.subr.mxu0 0.0
    %2343 = vmatpush1.msra.mxu0 0.0
    %2344 = vmatprep.subr.mxu0 0.0
    %2345 = vmatpush1.msra.mxu0 0.0
    %2346 = vmatprep.subr.mxu0 0.0
    %2347 = vmatpush1.msra.mxu0 0.0
    %2348 = vmatprep.subr.mxu0 0.0
    %2349 = vmatpush1.msra.mxu0 0.0
    %2350 = vmatprep.subr.mxu0 0.0
    %2351 = vmatpush1.msra.mxu0 0.0
    %2352 = vmatprep.subr.mxu0 0.0
    %2353 = vmatpush1.msra.mxu0 0.0
    %2354 = vmatprep.subr.mxu0 0.0
    %2355 = vmatpush1.msra.mxu0 0.0
    %2356 = vmatprep.subr.mxu0 0.0
    %2357 = vmatpush1.msra.mxu0 0.0
    %2358 = vmatprep.subr.mxu0 0.0
    %2359 = vmatpush1.msra.mxu0 0.0
    %2360 = vmatprep.subr.mxu0 0.0
    %2361 = vmatpush1.msra.mxu0 0.0
    %2362 = vmatprep.subr.mxu0 0.0
    %2363 = vmatpush1.msra.mxu0 0.0
    %2364 = vmatprep.subr.mxu0 0.0
    %2365 = vmatpush1.msra.mxu0 0.0
    %2366 = vmatprep.subr.mxu0 0.0
    %2367 = vmatpush1.msra.mxu0 0.0
    %2368 = vmatprep.subr.mxu0 0.0
    %2369 = vmatpush1.msra.mxu0 0.0
    %2370 = vmatprep.mubr.f32.mxu0 0.0
    %2371 = vmatmul.mubr.f32.gmra.mrb[0].mxu0 0.0
    %v2372 = vpop.f32.mrb[0].mxu0
    %v2373 = vadd.f32 0.0, %v2372
    %v2374 = vpop.f32.mrb[0].mxu0
    %v2375 = vadd.f32 0.0, %v2374
    %2376 = vdwg.mxu0
    %2377 = vmatprep.subr.mxu0 0.0
    %2378 = vmatpush1.msra.mxu0 %v802
    %2379 = vmatprep.subr.mxu0 0.0
    %2380 = vmatpush1.msra.mxu0 %v805
    %2381 = vmatprep.subr.mxu0 0.0
    %2382 = vmatpush1.msra.mxu0 %v808
    %2383 = vmatprep.subr.mxu0 0.0
    %2384 = vmatpush1.msra.mxu0 %v811
    %2385 = vmatprep.subr.mxu0 0.0
    %2386 = vmatpush1.msra.mxu0 %v814
    %2387 = vmatprep.subr.mxu0 0.0
    %2388 = vmatpush1.msra.mxu0 %v817
    %2389 = vmatprep.subr.mxu0 0.0
    %2390 = vmatpush1.msra.mxu0 %v820
    %2391 = vmatprep.subr.mxu0 0.0
    %2392 = vmatpush1.msra.mxu0 %v823
    %2393 = vmatprep.subr.mxu0 0.0
    %2394 = vmatpush1.msra.mxu0 %v826
    %2395 = vmatprep.subr.mxu0 0.0
    %2396 = vmatpush1.msra.mxu0 %v829
    %2397 = vmatprep.subr.mxu0 0.0
    %2398 = vmatpush1.msra.mxu0 %v832
    %2399 = vmatprep.subr.mxu0 0.0
    %2400 = vmatpush1.msra.mxu0 %v835
    %2401 = vmatprep.subr.mxu0 0.0
    %2402 = vmatpush1.msra.mxu0 %v838
    %2403 = vmatprep.subr.mxu0 0.0
    %2404 = vmatpush1.msra.mxu0 %v841
    %2405 = vmatprep.subr.mxu0 0.0
    %2406 = vmatpush1.msra.mxu0 %v844
    %2407 = vmatprep.subr.mxu0 0.0
    %2408 = vmatpush1.msra.mxu0 %v847
    %2409 = vmatprep.subr.mxu0 0.0
    %2410 = vmatpush1.msra.mxu0 0.0
    %2411 = vmatprep.subr.mxu0 0.0
    %2412 = vmatpush1.msra.mxu0 0.0
    %2413 = vmatprep.subr.mxu0 0.0
    %2414 = vmatpush1.msra.mxu0 0.0
    %2415 = vmatprep.subr.mxu0 0.0
    %2416 = vmatpush1.msra.mxu0 0.0
    %2417 = vmatprep.subr.mxu0 0.0
    %2418 = vmatpush1.msra.mxu0 0.0
    %2419 = vmatprep.subr.mxu0 0.0
    %2420 = vmatpush1.msra.mxu0 0.0
    %2421 = vmatprep.subr.mxu0 0.0
    %2422 = vmatpush1.msra.mxu0 0.0
    %2423 = vmatprep.subr.mxu0 0.0
    %2424 = vmatpush1.msra.mxu0 0.0
    %2425 = vmatprep.subr.mxu0 0.0
    %2426 = vmatpush1.msra.mxu0 0.0
    %2427 = vmatprep.subr.mxu0 0.0
    %2428 = vmatpush1.msra.mxu0 0.0
    %2429 = vmatprep.subr.mxu0 0.0
    %2430 = vmatpush1.msra.mxu0 0.0
    %2431 = vmatprep.subr.mxu0 0.0
    %2432 = vmatpush1.msra.mxu0 0.0
    %2433 = vmatprep.subr.mxu0 0.0
    %2434 = vmatpush1.msra.mxu0 0.0
    %2435 = vmatprep.subr.mxu0 0.0
    %2436 = vmatpush1.msra.mxu0 0.0
    %2437 = vmatprep.subr.mxu0 0.0
    %2438 = vmatpush1.msra.mxu0 0.0
    %2439 = vmatprep.subr.mxu0 0.0
    %2440 = vmatpush1.msra.mxu0 0.0
    %2441 = vmatprep.mubr.f32.mxu0 0.0
    %2442 = vmatmul.mubr.f32.gmra.mrb[0].mxu0 0.0
    %v2443 = vpop.f32.mrb[0].mxu0
    %v2444 = vadd.f32 0.0, %v2443
    %v2445 = vpop.f32.mrb[0].mxu0
    %2446 = vdwg.mxu0
    %v2447 = vadd.f32 %v2303, %v2373
    %v2448 = vadd.f32 %v2304, %v2375
    %v2449 = vxor.u32 %v2447, 2147483648
    %v2450 = vxor.u32 %v2448, 2147483648
    %v2451 = vmul.f32 %v2449, 1.442695
    %v2452 = vpow.pop %v2451
    %v2453 = vmul.f32 %v2450, 1.442695
    %v2454 = vpow.pop %v2453
    %v2455 = vadd.f32 %v2452, 1.0
    %v2456 = vadd.f32 %v2454, 1.0
    %v2457 = vrcp.pop %v2455
    %v2458 = vmul.f32 1.0, %v2457
    %v2459 = vrcp.pop %v2456
    %v2460 = vmul.f32 1.0, %v2459
    %v2461 = vadd.f32 %v2444, %v860
    %v2462 = vmul.f32 %v2458, %v2461
    %v2463 = vadd.f32 %v2305, %v2462
    %v2464 = vtanh.pop %v2463
    %v2465 = vsub.f32 0.0, %v2464
    %v2466 = vmul.f32 %v2460, %v2465
    %v2467 = vadd.f32 %v2464, %v2466
    %v2468 = vmul.f32 %v2293, %v2467
    %v2469 = vadd.f32 %v2468, 0.0
    %v2470 = vld [vmem:[%s2298] sm:$0xff]
    %v2471 = vmul.f32 %v2293, %v2469
    %v2472 = vadd.f32 %v2470, %v2471
    %v2473 = vld [vmem:[#allocation5] sm:$0xff]
    %v2474 = vadd.f32 %v2473, %v2472
    %2475 = vst [vmem:[#allocation5] sm:$0xff] %v2474
    %v2476 = vld [vmem:[#allocation6] sm:$0xff]
    %v2477 = vmax.f32 %v2476, %v2472
    %2478 = vst [vmem:[#allocation6] sm:$0xff] %v2477
    %s2479 = scalar_lea.vmem [#allocation3], 144
    %v2480 = vld [vmem:[%s2479] sm:$0xff]
    %v2481 = vld [vmem:[%s2479 + $0x8] sm:$0xff]
    %v2482 = vld [vmem:[%s2479 + $0x10] sm:$0xff]
    %2483 = vmatprep.subr.mxu0 %v801
    %2484 = vmatpush1.msra.mxu0 %v800
    %2485 = vmatprep.subr.mxu0 %v804
    %2486 = vmatpush1.msra.mxu0 %v803
    %2487 = vmatprep.subr.mxu0 %v807
    %2488 = vmatpush1.msra.mxu0 %v806
    %2489 = vmatprep.subr.mxu0 %v810
    %2490 = vmatpush1.msra.mxu0 %v809
    %2491 = vmatprep.subr.mxu0 %v813
    %2492 = vmatpush1.msra.mxu0 %v812
    %2493 = vmatprep.subr.mxu0 %v816
    %2494 = vmatpush1.msra.mxu0 %v815
    %2495 = vmatprep.subr.mxu0 %v819
    %2496 = vmatpush1.msra.mxu0 %v818
    %2497 = vmatprep.subr.mxu0 %v822
    %2498 = vmatpush1.msra.mxu0 %v821
    %2499 = vmatprep.subr.mxu0 %v825
    %2500 = vmatpush1.msra.mxu0 %v824
    %2501 = vmatprep.subr.mxu0 %v828
    %2502 = vmatpush1.msra.mxu0 %v827
    %2503 = vmatprep.subr.mxu0 %v831
    %2504 = vmatpush1.msra.mxu0 %v830
    %2505 = vmatprep.subr.mxu0 %v834
    %2506 = vmatpush1.msra.mxu0 %v833
    %2507 = vmatprep.subr.mxu0 %v837
    %2508 = vmatpush1.msra.mxu0 %v836
    %2509 = vmatprep.subr.mxu0 %v840
    %2510 = vmatpush1.msra.mxu0 %v839
    %2511 = vmatprep.subr.mxu0 %v843
    %2512 = vmatpush1.msra.mxu0 %v842
    %2513 = vmatprep.subr.mxu0 %v846
    %2514 = vmatpush1.msra.mxu0 %v845
    %2515 = vmatprep.subr.mxu0 0.0
    %2516 = vmatpush1.msra.mxu0 0.0
    %2517 = vmatprep.subr.mxu0 0.0
    %2518 = vmatpush1.msra.mxu0 0.0
    %2519 = vmatprep.subr.mxu0 0.0
    %2520 = vmatpush1.msra.mxu0 0.0
    %2521 = vmatprep.subr.mxu0 0.0
    %2522 = vmatpush1.msra.mxu0 0.0
    %2523 = vmatprep.subr.mxu0 0.0
    %2524 = vmatpush1.msra.mxu0 0.0
    %2525 = vmatprep.subr.mxu0 0.0
    %2526 = vmatpush1.msra.mxu0 0.0
    %2527 = vmatprep.subr.mxu0 0.0
    %2528 = vmatpush1.msra.mxu0 0.0
    %2529 = vmatprep.subr.mxu0 0.0
    %2530 = vmatpush1.msra.mxu0 0.0
    %2531 = vmatprep.subr.mxu0 0.0
    %2532 = vmatpush1.msra.mxu0 0.0
    %2533 = vmatprep.subr.mxu0 0.0
    %2534 = vmatpush1.msra.mxu0 0.0
    %2535 = vmatprep.subr.mxu0 0.0
    %2536 = vmatpush1.msra.mxu0 0.0
    %2537 = vmatprep.subr.mxu0 0.0
    %2538 = vmatpush1.msra.mxu0 0.0
    %2539 = vmatprep.subr.mxu0 0.0
    %2540 = vmatpush1.msra.mxu0 0.0
    %2541 = vmatprep.subr.mxu0 0.0
    %2542 = vmatpush1.msra.mxu0 0.0
    %2543 = vmatprep.subr.mxu0 0.0
    %2544 = vmatpush1.msra.mxu0 0.0
    %2545 = vmatprep.subr.mxu0 0.0
    %2546 = vmatpush1.msra.mxu0 0.0
    %2547 = vmatprep.mubr.f32.mxu0 0.0
    %2548 = vmatmul.mubr.f32.gmra.mrb[0].mxu0 %v2469
    %v2549 = vpop.f32.mrb[0].mxu0
    %v2550 = vadd.f32 0.0, %v2549
    %v2551 = vpop.f32.mrb[0].mxu0
    %v2552 = vadd.f32 0.0, %v2551
    %2553 = vdwg.mxu0
    %2554 = vmatprep.subr.mxu0 0.0
    %2555 = vmatpush1.msra.mxu0 %v802
    %2556 = vmatprep.subr.mxu0 0.0
    %2557 = vmatpush1.msra.mxu0 %v805
    %2558 = vmatprep.subr.mxu0 0.0
    %2559 = vmatpush1.msra.mxu0 %v808
    %2560 = vmatprep.subr.mxu0 0.0
    %2561 = vmatpush1.msra.mxu0 %v811
    %2562 = vmatprep.subr.mxu0 0.0
    %2563 = vmatpush1.msra.mxu0 %v814
    %2564 = vmatprep.subr.mxu0 0.0
    %2565 = vmatpush1.msra.mxu0 %v817
    %2566 = vmatprep.subr.mxu0 0.0
    %2567 = vmatpush1.msra.mxu0 %v820
    %2568 = vmatprep.subr.mxu0 0.0
    %2569 = vmatpush1.msra.mxu0 %v823
    %2570 = vmatprep.subr.mxu0 0.0
    %2571 = vmatpush1.msra.mxu0 %v826
    %2572 = vmatprep.subr.mxu0 0.0
    %2573 = vmatpush1.msra.mxu0 %v829
    %2574 = vmatprep.subr.mxu0 0.0
    %2575 = vmatpush1.msra.mxu0 %v832
    %2576 = vmatprep.subr.mxu0 0.0
    %2577 = vmatpush1.msra.mxu0 %v835
    %2578 = vmatprep.subr.mxu0 0.0
    %2579 = vmatpush1.msra.mxu0 %v838
    %2580 = vmatprep.subr.mxu0 0.0
    %2581 = vmatpush1.msra.mxu0 %v841
    %2582 = vmatprep.subr.mxu0 0.0
    %2583 = vmatpush1.msra.mxu0 %v844
    %2584 = vmatprep.subr.mxu0 0.0
    %2585 = vmatpush1.msra.mxu0 %v847
    %2586 = vmatprep.subr.mxu0 0.0
    %2587 = vmatpush1.msra.mxu0 0.0
    %2588 = vmatprep.subr.mxu0 0.0
    %2589 = vmatpush1.msra.mxu0 0.0
    %2590 = vmatprep.subr.mxu0 0.0
    %2591 = vmatpush1.msra.mxu0 0.0
    %2592 = vmatprep.subr.mxu0 0.0
    %2593 = vmatpush1.msra.mxu0 0.0
    %2594 = vmatprep.subr.mxu0 0.0
    %2595 = vmatpush1.msra.mxu0 0.0
    %2596 = vmatprep.subr.mxu0 0.0
    %2597 = vmatpush1.msra.mxu0 0.0
    %2598 = vmatprep.subr.mxu0 0.0
    %2599 = vmatpush1.msra.mxu0 0.0
    %2600 = vmatprep.subr.mxu0 0.0
    %2601 = vmatpush1.msra.mxu0 0.0
    %2602 = vmatprep.subr.mxu0 0.0
    %2603 = vmatpush1.msra.mxu0 0.0
    %2604 = vmatprep.subr.mxu0 0.0
    %2605 = vmatpush1.msra.mxu0 0.0
    %2606 = vmatprep.subr.mxu0 0.0
    %2607 = vmatpush1.msra.mxu0 0.0
    %2608 = vmatprep.subr.mxu0 0.0
    %2609 = vmatpush1.msra.mxu0 0.0
    %2610 = vmatprep.subr.mxu0 0.0
    %2611 = vmatpush1.msra.mxu0 0.0
    %2612 = vmatprep.subr.mxu0 0.0
    %2613 = vmatpush1.msra.mxu0 0.0
    %2614 = vmatprep.subr.mxu0 0.0
    %2615 = vmatpush1.msra.mxu0 0.0
    %2616 = vmatprep.subr.mxu0 0.0
    %2617 = vmatpush1.msra.mxu0 0.0
    %2618 = vmatprep.mubr.f32.mxu0 0.0
    %2619 = vmatmul.mubr.f32.gmra.mrb[0].mxu0 %v2469
    %v2620 = vpop.f32.mrb[0].mxu0
    %v2621 = vadd.f32 0.0, %v2620
    %v2622 = vpop.f32.mrb[0].mxu0
    %2623 = vdwg.mxu0
    %v2624 = vadd.f32 %v2480, %v2550
    %v2625 = vadd.f32 %v2481, %v2552
    %v2626 = vxor.u32 %v2624, 2147483648
    %v2627 = vxor.u32 %v2625, 2147483648
    %v2628 = vmul.f32 %v2626, 1.442695
    %v2629 = vpow.pop %v2628
    %v2630 = vmul.f32 %v2627, 1.442695
    %v2631 = vpow.pop %v2630
    %v2632 = vadd.f32 %v2629, 1.0
    %v2633 = vadd.f32 %v2631, 1.0
    %v2634 = vrcp.pop %v2632
    %v2635 = vmul.f32 1.0, %v2634
    %v2636 = vrcp.pop %v2633
    %v2637 = vmul.f32 1.0, %v2636
    %v2638 = vadd.f32 %v2621, %v860
    %v2639 = vmul.f32 %v2635, %v2638
    %v2640 = vadd.f32 %v2482, %v2639
    %v2641 = vtanh.pop %v2640
    %v2642 = vsub.f32 %v2469, %v2641
    %v2643 = vmul.f32 %v2637, %v2642
    %v2644 = vadd.f32 %v2641, %v2643
    %v2645 = vsub.f32 %v2644, %v2469
    %v2646 = vmul.f32 %v2113, %v2645
    %v2647 = vadd.f32 %v2469, %v2646
    %v2648 = vld [vmem:[%s2118] sm:$0xff]
    %v2649 = vmul.f32 %v2113, %v2647
    %v2650 = vadd.f32 %v2648, %v2649
    %v2651 = vld [vmem:[#allocation5] sm:$0xff]
    %v2652 = vadd.f32 %v2651, %v2650
    %2653 = vst [vmem:[#allocation5] sm:$0xff] %v2652
    %v2654 = vld [vmem:[#allocation6] sm:$0xff]
    %v2655 = vmax.f32 %v2654, %v2650
    %2656 = vst [vmem:[#allocation6] sm:$0xff] %v2655
    %s2657 = scalar_lea.vmem [#allocation3], 120
    %v2658 = vld [vmem:[%s2657] sm:$0xff]
    %v2659 = vld [vmem:[%s2657 + $0x8] sm:$0xff]
    %v2660 = vld [vmem:[%s2657 + $0x10] sm:$0xff]
    %2661 = vmatprep.subr.mxu0 %v801
    %2662 = vmatpush1.msra.mxu0 %v800
    %2663 = vmatprep.subr.mxu0 %v804
    %2664 = vmatpush1.msra.mxu0 %v803
    %2665 = vmatprep.subr.mxu0 %v807
    %2666 = vmatpush1.msra.mxu0 %v806
    %2667 = vmatprep.subr.mxu0 %v810
    %2668 = vmatpush1.msra.mxu0 %v809
    %2669 = vmatprep.subr.mxu0 %v813
    %2670 = vmatpush1.msra.mxu0 %v812
    %2671 = vmatprep.subr.mxu0 %v816
    %2672 = vmatpush1.msra.mxu0 %v815
    %2673 = vmatprep.subr.mxu0 %v819
    %2674 = vmatpush1.msra.mxu0 %v818
    %2675 = vmatprep.subr.mxu0 %v822
    %2676 = vmatpush1.msra.mxu0 %v821
    %2677 = vmatprep.subr.mxu0 %v825
    %2678 = vmatpush1.msra.mxu0 %v824
    %2679 = vmatprep.subr.mxu0 %v828
    %2680 = vmatpush1.msra.mxu0 %v827
    %2681 = vmatprep.subr.mxu0 %v831
    %2682 = vmatpush1.msra.mxu0 %v830
    %2683 = vmatprep.subr.mxu0 %v834
    %2684 = vmatpush1.msra.mxu0 %v833
    %2685 = vmatprep.subr.mxu0 %v837
    %2686 = vmatpush1.msra.mxu0 %v836
    %2687 = vmatprep.subr.mxu0 %v840
    %2688 = vmatpush1.msra.mxu0 %v839
    %2689 = vmatprep.subr.mxu0 %v843
    %2690 = vmatpush1.msra.mxu0 %v842
    %2691 = vmatprep.subr.mxu0 %v846
    %2692 = vmatpush1.msra.mxu0 %v845
    %2693 = vmatprep.subr.mxu0 0.0
    %2694 = vmatpush1.msra.mxu0 0.0
    %2695 = vmatprep.subr.mxu0 0.0
    %2696 = vmatpush1.msra.mxu0 0.0
    %2697 = vmatprep.subr.mxu0 0.0
    %2698 = vmatpush1.msra.mxu0 0.0
    %2699 = vmatprep.subr.mxu0 0.0
    %2700 = vmatpush1.msra.mxu0 0.0
    %2701 = vmatprep.subr.mxu0 0.0
    %2702 = vmatpush1.msra.mxu0 0.0
    %2703 = vmatprep.subr.mxu0 0.0
    %2704 = vmatpush1.msra.mxu0 0.0
    %2705 = vmatprep.subr.mxu0 0.0
    %2706 = vmatpush1.msra.mxu0 0.0
    %2707 = vmatprep.subr.mxu0 0.0
    %2708 = vmatpush1.msra.mxu0 0.0
    %2709 = vmatprep.subr.mxu0 0.0
    %2710 = vmatpush1.msra.mxu0 0.0
    %2711 = vmatprep.subr.mxu0 0.0
    %2712 = vmatpush1.msra.mxu0 0.0
    %2713 = vmatprep.subr.mxu0 0.0
    %2714 = vmatpush1.msra.mxu0 0.0
    %2715 = vmatprep.subr.mxu0 0.0
    %2716 = vmatpush1.msra.mxu0 0.0
    %2717 = vmatprep.subr.mxu0 0.0
    %2718 = vmatpush1.msra.mxu0 0.0
    %2719 = vmatprep.subr.mxu0 0.0
    %2720 = vmatpush1.msra.mxu0 0.0
    %2721 = vmatprep.subr.mxu0 0.0
    %2722 = vmatpush1.msra.mxu0 0.0
    %2723 = vmatprep.subr.mxu0 0.0
    %2724 = vmatpush1.msra.mxu0 0.0
    %2725 = vmatprep.mubr.f32.mxu0 0.0
    %2726 = vmatmul.mubr.f32.gmra.mrb[0].mxu0 %v2647
    %v2727 = vpop.f32.mrb[0].mxu0
    %v2728 = vadd.f32 0.0, %v2727
    %v2729 = vpop.f32.mrb[0].mxu0
    %v2730 = vadd.f32 0.0, %v2729
    %2731 = vdwg.mxu0
    %2732 = vmatprep.subr.mxu0 0.0
    %2733 = vmatpush1.msra.mxu0 %v802
    %2734 = vmatprep.subr.mxu0 0.0
    %2735 = vmatpush1.msra.mxu0 %v805
    %2736 = vmatprep.subr.mxu0 0.0
    %2737 = vmatpush1.msra.mxu0 %v808
    %2738 = vmatprep.subr.mxu0 0.0
    %2739 = vmatpush1.msra.mxu0 %v811
    %2740 = vmatprep.subr.mxu0 0.0
    %2741 = vmatpush1.msra.mxu0 %v814
    %2742 = vmatprep.subr.mxu0 0.0
    %2743 = vmatpush1.msra.mxu0 %v817
    %2744 = vmatprep.subr.mxu0 0.0
    %2745 = vmatpush1.msra.mxu0 %v820
    %2746 = vmatprep.subr.mxu0 0.0
    %2747 = vmatpush1.msra.mxu0 %v823
    %2748 = vmatprep.subr.mxu0 0.0
    %2749 = vmatpush1.msra.mxu0 %v826
    %2750 = vmatprep.subr.mxu0 0.0
    %2751 = vmatpush1.msra.mxu0 %v829
    %2752 = vmatprep.subr.mxu0 0.0
    %2753 = vmatpush1.msra.mxu0 %v832
    %2754 = vmatprep.subr.mxu0 0.0
    %2755 = vmatpush1.msra.mxu0 %v835
    %2756 = vmatprep.subr.mxu0 0.0
    %2757 = vmatpush1.msra.mxu0 %v838
    %2758 = vmatprep.subr.mxu0 0.0
    %2759 = vmatpush1.msra.mxu0 %v841
    %2760 = vmatprep.subr.mxu0 0.0
    %2761 = vmatpush1.msra.mxu0 %v844
    %2762 = vmatprep.subr.mxu0 0.0
    %2763 = vmatpush1.msra.mxu0 %v847
    %2764 = vmatprep.subr.mxu0 0.0
    %2765 = vmatpush1.msra.mxu0 0.0
    %2766 = vmatprep.subr.mxu0 0.0
    %2767 = vmatpush1.msra.mxu0 0.0
    %2768 = vmatprep.subr.mxu0 0.0
    %2769 = vmatpush1.msra.mxu0 0.0
    %2770 = vmatprep.subr.mxu0 0.0
    %2771 = vmatpush1.msra.mxu0 0.0
    %2772 = vmatprep.subr.mxu0 0.0
    %2773 = vmatpush1.msra.mxu0 0.0
    %2774 = vmatprep.subr.mxu0 0.0
    %2775 = vmatpush1.msra.mxu0 0.0
    %2776 = vmatprep.subr.mxu0 0.0
    %2777 = vmatpush1.msra.mxu0 0.0
    %2778 = vmatprep.subr.mxu0 0.0
    %2779 = vmatpush1.msra.mxu0 0.0
    %2780 = vmatprep.subr.mxu0 0.0
    %2781 = vmatpush1.msra.mxu0 0.0
    %2782 = vmatprep.subr.mxu0 0.0
    %2783 = vmatpush1.msra.mxu0 0.0
    %2784 = vmatprep.subr.mxu0 0.0
    %2785 = vmatpush1.msra.mxu0 0.0
    %2786 = vmatprep.subr.mxu0 0.0
    %2787 = vmatpush1.msra.mxu0 0.0
    %2788 = vmatprep.subr.mxu0 0.0
    %2789 = vmatpush1.msra.mxu0 0.0
    %2790 = vmatprep.subr.mxu0 0.0
    %2791 = vmatpush1.msra.mxu0 0.0
    %2792 = vmatprep.subr.mxu0 0.0
    %2793 = vmatpush1.msra.mxu0 0.0
    %2794 = vmatprep.subr.mxu0 0.0
    %2795 = vmatpush1.msra.mxu0 0.0
    %2796 = vmatprep.mubr.f32.mxu0 0.0
    %2797 = vmatmul.mubr.f32.gmra.mrb[0].mxu0 %v2647
    %v2798 = vpop.f32.mrb[0].mxu0
    %v2799 = vadd.f32 0.0, %v2798
    %v2800 = vpop.f32.mrb[0].mxu0
    %2801 = vdwg.mxu0
    %v2802 = vadd.f32 %v2658, %v2728
    %v2803 = vadd.f32 %v2659, %v2730
    %v2804 = vxor.u32 %v2802, 2147483648
    %v2805 = vxor.u32 %v2803, 2147483648
    %v2806 = vmul.f32 %v2804, 1.442695
    %v2807 = vpow.pop %v2806
    %v2808 = vmul.f32 %v2805, 1.442695
    %v2809 = vpow.pop %v2808
    %v2810 = vadd.f32 %v2807, 1.0
    %v2811 = vadd.f32 %v2809, 1.0
    %v2812 = vrcp.pop %v2810
    %v2813 = vmul.f32 1.0, %v2812
    %v2814 = vrcp.pop %v2811
    %v2815 = vmul.f32 1.0, %v2814
    %v2816 = vadd.f32 %v2799, %v860
    %v2817 = vmul.f32 %v2813, %v2816
    %v2818 = vadd.f32 %v2660, %v2817
    %v2819 = vtanh.pop %v2818
    %v2820 = vsub.f32 %v2647, %v2819
    %v2821 = vmul.f32 %v2815, %v2820
    %v2822 = vadd.f32 %v2819, %v2821
    %v2823 = vsub.f32 %v2822, %v2647
    %v2824 = vmul.f32 %v1933, %v2823
    %v2825 = vadd.f32 %v2647, %v2824
    %v2826 = vld [vmem:[%s1938] sm:$0xff]
    %v2827 = vmul.f32 %v1933, %v2825
    %v2828 = vadd.f32 %v2826, %v2827
    %v2829 = vld [vmem:[#allocation5] sm:$0xff]
    %v2830 = vadd.f32 %v2829, %v2828
    %2831 = vst [vmem:[#allocation5] sm:$0xff] %v2830
    %v2832 = vld [vmem:[#allocation6] sm:$0xff]
    %v2833 = vmax.f32 %v2832, %v2828
    %2834 = vst [vmem:[#allocation6] sm:$0xff] %v2833
    %s2835 = scalar_lea.vmem [#allocation3], 96
    %v2836 = vld [vmem:[%s2835] sm:$0xff]
    %v2837 = vld [vmem:[%s2835 + $0x8] sm:$0xff]
    %v2838 = vld [vmem:[%s2835 + $0x10] sm:$0xff]
    %2839 = vmatprep.subr.mxu0 %v801
    %2840 = vmatpush1.msra.mxu0 %v800
    %2841 = vmatprep.subr.mxu0 %v804
    %2842 = vmatpush1.msra.mxu0 %v803
    %2843 = vmatprep.subr.mxu0 %v807
    %2844 = vmatpush1.msra.mxu0 %v806
    %2845 = vmatprep.subr.mxu0 %v810
    %2846 = vmatpush1.msra.mxu0 %v809
    %2847 = vmatprep.subr.mxu0 %v813
    %2848 = vmatpush1.msra.mxu0 %v812
    %2849 = vmatprep.subr.mxu0 %v816
    %2850 = vmatpush1.msra.mxu0 %v815
    %2851 = vmatprep.subr.mxu0 %v819
    %2852 = vmatpush1.msra.mxu0 %v818
    %2853 = vmatprep.subr.mxu0 %v822
    %2854 = vmatpush1.msra.mxu0 %v821
    %2855 = vmatprep.subr.mxu0 %v825
    %2856 = vmatpush1.msra.mxu0 %v824
    %2857 = vmatprep.subr.mxu0 %v828
    %2858 = vmatpush1.msra.mxu0 %v827
    %2859 = vmatprep.subr.mxu0 %v831
    %2860 = vmatpush1.msra.mxu0 %v830
    %2861 = vmatprep.subr.mxu0 %v834
    %2862 = vmatpush1.msra.mxu0 %v833
    %2863 = vmatprep.subr.mxu0 %v837
    %2864 = vmatpush1.msra.mxu0 %v836
    %2865 = vmatprep.subr.mxu0 %v840
    %2866 = vmatpush1.msra.mxu0 %v839
    %2867 = vmatprep.subr.mxu0 %v843
    %2868 = vmatpush1.msra.mxu0 %v842
    %2869 = vmatprep.subr.mxu0 %v846
    %2870 = vmatpush1.msra.mxu0 %v845
    %2871 = vmatprep.subr.mxu0 0.0
    %2872 = vmatpush1.msra.mxu0 0.0
    %2873 = vmatprep.subr.mxu0 0.0
    %2874 = vmatpush1.msra.mxu0 0.0
    %2875 = vmatprep.subr.mxu0 0.0
    %2876 = vmatpush1.msra.mxu0 0.0
    %2877 = vmatprep.subr.mxu0 0.0
    %2878 = vmatpush1.msra.mxu0 0.0
    %2879 = vmatprep.subr.mxu0 0.0
    %2880 = vmatpush1.msra.mxu0 0.0
    %2881 = vmatprep.subr.mxu0 0.0
    %2882 = vmatpush1.msra.mxu0 0.0
    %2883 = vmatprep.subr.mxu0 0.0
    %2884 = vmatpush1.msra.mxu0 0.0
    %2885 = vmatprep.subr.mxu0 0.0
    %2886 = vmatpush1.msra.mxu0 0.0
    %2887 = vmatprep.subr.mxu0 0.0
    %2888 = vmatpush1.msra.mxu0 0.0
    %2889 = vmatprep.subr.mxu0 0.0
    %2890 = vmatpush1.msra.mxu0 0.0
    %2891 = vmatprep.subr.mxu0 0.0
    %2892 = vmatpush1.msra.mxu0 0.0
    %2893 = vmatprep.subr.mxu0 0.0
    %2894 = vmatpush1.msra.mxu0 0.0
    %2895 = vmatprep.subr.mxu0 0.0
    %2896 = vmatpush1.msra.mxu0 0.0
    %2897 = vmatprep.subr.mxu0 0.0
    %2898 = vmatpush1.msra.mxu0 0.0
    %2899 = vmatprep.subr.mxu0 0.0
    %2900 = vmatpush1.msra.mxu0 0.0
    %2901 = vmatprep.subr.mxu0 0.0
    %2902 = vmatpush1.msra.mxu0 0.0
    %2903 = vmatprep.mubr.f32.mxu0 0.0
    %2904 = vmatmul.mubr.f32.gmra.mrb[0].mxu0 %v2825
    %v2905 = vpop.f32.mrb[0].mxu0
    %v2906 = vadd.f32 0.0, %v2905
    %v2907 = vpop.f32.mrb[0].mxu0
    %v2908 = vadd.f32 0.0, %v2907
    %2909 = vdwg.mxu0
    %2910 = vmatprep.subr.mxu0 0.0
    %2911 = vmatpush1.msra.mxu0 %v802
    %2912 = vmatprep.subr.mxu0 0.0
    %2913 = vmatpush1.msra.mxu0 %v805
    %2914 = vmatprep.subr.mxu0 0.0
    %2915 = vmatpush1.msra.mxu0 %v808
    %2916 = vmatprep.subr.mxu0 0.0
    %2917 = vmatpush1.msra.mxu0 %v811
    %2918 = vmatprep.subr.mxu0 0.0
    %2919 = vmatpush1.msra.mxu0 %v814
    %2920 = vmatprep.subr.mxu0 0.0
    %2921 = vmatpush1.msra.mxu0 %v817
    %2922 = vmatprep.subr.mxu0 0.0
    %2923 = vmatpush1.msra.mxu0 %v820
    %2924 = vmatprep.subr.mxu0 0.0
    %2925 = vmatpush1.msra.mxu0 %v823
    %2926 = vmatprep.subr.mxu0 0.0
    %2927 = vmatpush1.msra.mxu0 %v826
    %2928 = vmatprep.subr.mxu0 0.0
    %2929 = vmatpush1.msra.mxu0 %v829
    %2930 = vmatprep.subr.mxu0 0.0
    %2931 = vmatpush1.msra.mxu0 %v832
    %2932 = vmatprep.subr.mxu0 0.0
    %2933 = vmatpush1.msra.mxu0 %v835
    %2934 = vmatprep.subr.mxu0 0.0
    %2935 = vmatpush1.msra.mxu0 %v838
    %2936 = vmatprep.subr.mxu0 0.0
    %2937 = vmatpush1.msra.mxu0 %v841
    %2938 = vmatprep.subr.mxu0 0.0
    %2939 = vmatpush1.msra.mxu0 %v844
    %2940 = vmatprep.subr.mxu0 0.0
    %2941 = vmatpush1.msra.mxu0 %v847
    %2942 = vmatprep.subr.mxu0 0.0
    %2943 = vmatpush1.msra.mxu0 0.0
    %2944 = vmatprep.subr.mxu0 0.0
    %2945 = vmatpush1.msra.mxu0 0.0
    %2946 = vmatprep.subr.mxu0 0.0
    %2947 = vmatpush1.msra.mxu0 0.0
    %2948 = vmatprep.subr.mxu0 0.0
    %2949 = vmatpush1.msra.mxu0 0.0
    %2950 = vmatprep.subr.mxu0 0.0
    %2951 = vmatpush1.msra.mxu0 0.0
    %2952 = vmatprep.subr.mxu0 0.0
    %2953 = vmatpush1.msra.mxu0 0.0
    %2954 = vmatprep.subr.mxu0 0.0
    %2955 = vmatpush1.msra.mxu0 0.0
    %2956 = vmatprep.subr.mxu0 0.0
    %2957 = vmatpush1.msra.mxu0 0.0
    %2958 = vmatprep.subr.mxu0 0.0
    %2959 = vmatpush1.msra.mxu0 0.0
    %2960 = vmatprep.subr.mxu0 0.0
    %2961 = vmatpush1.msra.mxu0 0.0
    %2962 = vmatprep.subr.mxu0 0.0
    %2963 = vmatpush1.msra.mxu0 0.0
    %2964 = vmatprep.subr.mxu0 0.0
    %2965 = vmatpush1.msra.mxu0 0.0
    %2966 = vmatprep.subr.mxu0 0.0
    %2967 = vmatpush1.msra.mxu0 0.0
    %2968 = vmatprep.subr.mxu0 0.0
    %2969 = vmatpush1.msra.mxu0 0.0
    %2970 = vmatprep.subr.mxu0 0.0
    %2971 = vmatpush1.msra.mxu0 0.0
    %2972 = vmatprep.subr.mxu0 0.0
    %2973 = vmatpush1.msra.mxu0 0.0
    %2974 = vmatprep.mubr.f32.mxu0 0.0
    %2975 = vmatmul.mubr.f32.gmra.mrb[0].mxu0 %v2825
    %v2976 = vpop.f32.mrb[0].mxu0
    %v2977 = vadd.f32 0.0, %v2976
    %v2978 = vpop.f32.mrb[0].mxu0
    %2979 = vdwg.mxu0
    %v2980 = vadd.f32 %v2836, %v2906
    %v2981 = vadd.f32 %v2837, %v2908
    %v2982 = vxor.u32 %v2980, 2147483648
    %v2983 = vxor.u32 %v2981, 2147483648
    %v2984 = vmul.f32 %v2982, 1.442695
    %v2985 = vpow.pop %v2984
    %v2986 = vmul.f32 %v2983, 1.442695
    %v2987 = vpow.pop %v2986
    %v2988 = vadd.f32 %v2985, 1.0
    %v2989 = vadd.f32 %v2987, 1.0
    %v2990 = vrcp.pop %v2988
    %v2991 = vmul.f32 1.0, %v2990
    %v2992 = vrcp.pop %v2989
    %v2993 = vmul.f32 1.0, %v2992
    %v2994 = vadd.f32 %v2977, %v860
    %v2995 = vmul.f32 %v2991, %v2994
    %v2996 = vadd.f32 %v2838, %v2995
    %v2997 = vtanh.pop %v2996
    %v2998 = vsub.f32 %v2825, %v2997
    %v2999 = vmul.f32 %v2993, %v2998
    %v3000 = vadd.f32 %v2997, %v2999
    %v3001 = vsub.f32 %v3000, %v2825
    %v3002 = vmul.f32 %v1753, %v3001
    %v3003 = vadd.f32 %v2825, %v3002
    %v3004 = vld [vmem:[%s1758] sm:$0xff]
    %v3005 = vmul.f32 %v1753, %v3003
    %v3006 = vadd.f32 %v3004, %v3005
    %v3007 = vld [vmem:[#allocation5] sm:$0xff]
    %v3008 = vadd.f32 %v3007, %v3006
    %3009 = vst [vmem:[#allocation5] sm:$0xff] %v3008
    %v3010 = vld [vmem:[#allocation6] sm:$0xff]
    %v3011 = vmax.f32 %v3010, %v3006
    %3012 = vst [vmem:[#allocation6] sm:$0xff] %v3011
    %s3013 = scalar_lea.vmem [#allocation3], 72
    %v3014 = vld [vmem:[%s3013] sm:$0xff]
    %v3015 = vld [vmem:[%s3013 + $0x8] sm:$0xff]
    %v3016 = vld [vmem:[%s3013 + $0x10] sm:$0xff]
    %3017 = vmatprep.subr.mxu0 %v801
    %3018 = vmatpush1.msra.mxu0 %v800
    %3019 = vmatprep.subr.mxu0 %v804
    %3020 = vmatpush1.msra.mxu0 %v803
    %3021 = vmatprep.subr.mxu0 %v807
    %3022 = vmatpush1.msra.mxu0 %v806
    %3023 = vmatprep.subr.mxu0 %v810
    %3024 = vmatpush1.msra.mxu0 %v809
    %3025 = vmatprep.subr.mxu0 %v813
    %3026 = vmatpush1.msra.mxu0 %v812
    %3027 = vmatprep.subr.mxu0 %v816
    %3028 = vmatpush1.msra.mxu0 %v815
    %3029 = vmatprep.subr.mxu0 %v819
    %3030 = vmatpush1.msra.mxu0 %v818
    %3031 = vmatprep.subr.mxu0 %v822
    %3032 = vmatpush1.msra.mxu0 %v821
    %3033 = vmatprep.subr.mxu0 %v825
    %3034 = vmatpush1.msra.mxu0 %v824
    %3035 = vmatprep.subr.mxu0 %v828
    %3036 = vmatpush1.msra.mxu0 %v827
    %3037 = vmatprep.subr.mxu0 %v831
    %3038 = vmatpush1.msra.mxu0 %v830
    %3039 = vmatprep.subr.mxu0 %v834
    %3040 = vmatpush1.msra.mxu0 %v833
    %3041 = vmatprep.subr.mxu0 %v837
    %3042 = vmatpush1.msra.mxu0 %v836
    %3043 = vmatprep.subr.mxu0 %v840
    %3044 = vmatpush1.msra.mxu0 %v839
    %3045 = vmatprep.subr.mxu0 %v843
    %3046 = vmatpush1.msra.mxu0 %v842
    %3047 = vmatprep.subr.mxu0 %v846
    %3048 = vmatpush1.msra.mxu0 %v845
    %3049 = vmatprep.subr.mxu0 0.0
    %3050 = vmatpush1.msra.mxu0 0.0
    %3051 = vmatprep.subr.mxu0 0.0
    %3052 = vmatpush1.msra.mxu0 0.0
    %3053 = vmatprep.subr.mxu0 0.0
    %3054 = vmatpush1.msra.mxu0 0.0
    %3055 = vmatprep.subr.mxu0 0.0
    %3056 = vmatpush1.msra.mxu0 0.0
    %3057 = vmatprep.subr.mxu0 0.0
    %3058 = vmatpush1.msra.mxu0 0.0
    %3059 = vmatprep.subr.mxu0 0.0
    %3060 = vmatpush1.msra.mxu0 0.0
    %3061 = vmatprep.subr.mxu0 0.0
    %3062 = vmatpush1.msra.mxu0 0.0
    %3063 = vmatprep.subr.mxu0 0.0
    %3064 = vmatpush1.msra.mxu0 0.0
    %3065 = vmatprep.subr.mxu0 0.0
    %3066 = vmatpush1.msra.mxu0 0.0
    %3067 = vmatprep.subr.mxu0 0.0
    %3068 = vmatpush1.msra.mxu0 0.0
    %3069 = vmatprep.subr.mxu0 0.0
    %3070 = vmatpush1.msra.mxu0 0.0
    %3071 = vmatprep.subr.mxu0 0.0
    %3072 = vmatpush1.msra.mxu0 0.0
    %3073 = vmatprep.subr.mxu0 0.0
    %3074 = vmatpush1.msra.mxu0 0.0
    %3075 = vmatprep.subr.mxu0 0.0
    %3076 = vmatpush1.msra.mxu0 0.0
    %3077 = vmatprep.subr.mxu0 0.0
    %3078 = vmatpush1.msra.mxu0 0.0
    %3079 = vmatprep.subr.mxu0 0.0
    %3080 = vmatpush1.msra.mxu0 0.0
    %3081 = vmatprep.mubr.f32.mxu0 0.0
    %3082 = vmatmul.mubr.f32.gmra.mrb[0].mxu0 %v3003
    %v3083 = vpop.f32.mrb[0].mxu0
    %v3084 = vadd.f32 0.0, %v3083
    %v3085 = vpop.f32.mrb[0].mxu0
    %v3086 = vadd.f32 0.0, %v3085
    %3087 = vdwg.mxu0
    %3088 = vmatprep.subr.mxu0 0.0
    %3089 = vmatpush1.msra.mxu0 %v802
    %3090 = vmatprep.subr.mxu0 0.0
    %3091 = vmatpush1.msra.mxu0 %v805
    %3092 = vmatprep.subr.mxu0 0.0
    %3093 = vmatpush1.msra.mxu0 %v808
    %3094 = vmatprep.subr.mxu0 0.0
    %3095 = vmatpush1.msra.mxu0 %v811
    %3096 = vmatprep.subr.mxu0 0.0
    %3097 = vmatpush1.msra.mxu0 %v814
    %3098 = vmatprep.subr.mxu0 0.0
    %3099 = vmatpush1.msra.mxu0 %v817
    %3100 = vmatprep.subr.mxu0 0.0
    %3101 = vmatpush1.msra.mxu0 %v820
    %3102 = vmatprep.subr.mxu0 0.0
    %3103 = vmatpush1.msra.mxu0 %v823
    %3104 = vmatprep.subr.mxu0 0.0
    %3105 = vmatpush1.msra.mxu0 %v826
    %3106 = vmatprep.subr.mxu0 0.0
    %3107 = vmatpush1.msra.mxu0 %v829
    %3108 = vmatprep.subr.mxu0 0.0
    %3109 = vmatpush1.msra.mxu0 %v832
    %3110 = vmatprep.subr.mxu0 0.0
    %3111 = vmatpush1.msra.mxu0 %v835
    %3112 = vmatprep.subr.mxu0 0.0
    %3113 = vmatpush1.msra.mxu0 %v838
    %3114 = vmatprep.subr.mxu0 0.0
    %3115 = vmatpush1.msra.mxu0 %v841
    %3116 = vmatprep.subr.mxu0 0.0
    %3117 = vmatpush1.msra.mxu0 %v844
    %3118 = vmatprep.subr.mxu0 0.0
    %3119 = vmatpush1.msra.mxu0 %v847
    %3120 = vmatprep.subr.mxu0 0.0
    %3121 = vmatpush1.msra.mxu0 0.0
    %3122 = vmatprep.subr.mxu0 0.0
    %3123 = vmatpush1.msra.mxu0 0.0
    %3124 = vmatprep.subr.mxu0 0.0
    %3125 = vmatpush1.msra.mxu0 0.0
    %3126 = vmatprep.subr.mxu0 0.0
    %3127 = vmatpush1.msra.mxu0 0.0
    %3128 = vmatprep.subr.mxu0 0.0
    %3129 = vmatpush1.msra.mxu0 0.0
    %3130 = vmatprep.subr.mxu0 0.0
    %3131 = vmatpush1.msra.mxu0 0.0
    %3132 = vmatprep.subr.mxu0 0.0
    %3133 = vmatpush1.msra.mxu0 0.0
    %3134 = vmatprep.subr.mxu0 0.0
    %3135 = vmatpush1.msra.mxu0 0.0
    %3136 = vmatprep.subr.mxu0 0.0
    %3137 = vmatpush1.msra.mxu0 0.0
    %3138 = vmatprep.subr.mxu0 0.0
    %3139 = vmatpush1.msra.mxu0 0.0
    %3140 = vmatprep.subr.mxu0 0.0
    %3141 = vmatpush1.msra.mxu0 0.0
    %3142 = vmatprep.subr.mxu0 0.0
    %3143 = vmatpush1.msra.mxu0 0.0
    %3144 = vmatprep.subr.mxu0 0.0
    %3145 = vmatpush1.msra.mxu0 0.0
    %3146 = vmatprep.subr.mxu0 0.0
    %3147 = vmatpush1.msra.mxu0 0.0
    %3148 = vmatprep.subr.mxu0 0.0
    %3149 = vmatpush1.msra.mxu0 0.0
    %3150 = vmatprep.subr.mxu0 0.0
    %3151 = vmatpush1.msra.mxu0 0.0
    %3152 = vmatprep.mubr.f32.mxu0 0.0
    %3153 = vmatmul.mubr.f32.gmra.mrb[0].mxu0 %v3003
    %v3154 = vpop.f32.mrb[0].mxu0
    %v3155 = vadd.f32 0.0, %v3154
    %v3156 = vpop.f32.mrb[0].mxu0
    %3157 = vdwg.mxu0
    %v3158 = vadd.f32 %v3014, %v3084
    %v3159 = vadd.f32 %v3015, %v3086
    %v3160 = vxor.u32 %v3158, 2147483648
    %v3161 = vxor.u32 %v3159, 2147483648
    %v3162 = vmul.f32 %v3160, 1.442695
    %v3163 = vpow.pop %v3162
    %v3164 = vmul.f32 %v3161, 1.442695
    %v3165 = vpow.pop %v3164
    %v3166 = vadd.f32 %v3163, 1.0
    %v3167 = vadd.f32 %v3165, 1.0
    %v3168 = vrcp.pop %v3166
    %v3169 = vmul.f32 1.0, %v3168
    %v3170 = vrcp.pop %v3167
    %v3171 = vmul.f32 1.0, %v3170
    %v3172 = vadd.f32 %v3155, %v860
    %v3173 = vmul.f32 %v3169, %v3172
    %v3174 = vadd.f32 %v3016, %v3173
    %v3175 = vtanh.pop %v3174
    %v3176 = vsub.f32 %v3003, %v3175
    %v3177 = vmul.f32 %v3171, %v3176
    %v3178 = vadd.f32 %v3175, %v3177
    %v3179 = vsub.f32 %v3178, %v3003
    %v3180 = vmul.f32 %v1573, %v3179
    %v3181 = vadd.f32 %v3003, %v3180
    %v3182 = vld [vmem:[%s1578] sm:$0xff]
    %v3183 = vmul.f32 %v1573, %v3181
    %v3184 = vadd.f32 %v3182, %v3183
    %v3185 = vld [vmem:[#allocation5] sm:$0xff]
    %v3186 = vadd.f32 %v3185, %v3184
    %3187 = vst [vmem:[#allocation5] sm:$0xff] %v3186
    %v3188 = vld [vmem:[#allocation6] sm:$0xff]
    %v3189 = vmax.f32 %v3188, %v3184
    %3190 = vst [vmem:[#allocation6] sm:$0xff] %v3189
    %s3191 = scalar_lea.vmem [#allocation3], 48
    %v3192 = vld [vmem:[%s3191] sm:$0xff]
    %v3193 = vld [vmem:[%s3191 + $0x8] sm:$0xff]
    %v3194 = vld [vmem:[%s3191 + $0x10] sm:$0xff]
    %3195 = vmatprep.subr.mxu0 %v801
    %3196 = vmatpush1.msra.mxu0 %v800
    %3197 = vmatprep.subr.mxu0 %v804
    %3198 = vmatpush1.msra.mxu0 %v803
    %3199 = vmatprep.subr.mxu0 %v807
    %3200 = vmatpush1.msra.mxu0 %v806
    %3201 = vmatprep.subr.mxu0 %v810
    %3202 = vmatpush1.msra.mxu0 %v809
    %3203 = vmatprep.subr.mxu0 %v813
    %3204 = vmatpush1.msra.mxu0 %v812
    %3205 = vmatprep.subr.mxu0 %v816
    %3206 = vmatpush1.msra.mxu0 %v815
    %3207 = vmatprep.subr.mxu0 %v819
    %3208 = vmatpush1.msra.mxu0 %v818
    %3209 = vmatprep.subr.mxu0 %v822
    %3210 = vmatpush1.msra.mxu0 %v821
    %3211 = vmatprep.subr.mxu0 %v825
    %3212 = vmatpush1.msra.mxu0 %v824
    %3213 = vmatprep.subr.mxu0 %v828
    %3214 = vmatpush1.msra.mxu0 %v827
    %3215 = vmatprep.subr.mxu0 %v831
    %3216 = vmatpush1.msra.mxu0 %v830
    %3217 = vmatprep.subr.mxu0 %v834
    %3218 = vmatpush1.msra.mxu0 %v833
    %3219 = vmatprep.subr.mxu0 %v837
    %3220 = vmatpush1.msra.mxu0 %v836
    %3221 = vmatprep.subr.mxu0 %v840
    %3222 = vmatpush1.msra.mxu0 %v839
    %3223 = vmatprep.subr.mxu0 %v843
    %3224 = vmatpush1.msra.mxu0 %v842
    %3225 = vmatprep.subr.mxu0 %v846
    %3226 = vmatpush1.msra.mxu0 %v845
    %3227 = vmatprep.subr.mxu0 0.0
    %3228 = vmatpush1.msra.mxu0 0.0
    %3229 = vmatprep.subr.mxu0 0.0
    %3230 = vmatpush1.msra.mxu0 0.0
    %3231 = vmatprep.subr.mxu0 0.0
    %3232 = vmatpush1.msra.mxu0 0.0
    %3233 = vmatprep.subr.mxu0 0.0
    %3234 = vmatpush1.msra.mxu0 0.0
    %3235 = vmatprep.subr.mxu0 0.0
    %3236 = vmatpush1.msra.mxu0 0.0
    %3237 = vmatprep.subr.mxu0 0.0
    %3238 = vmatpush1.msra.mxu0 0.0
    %3239 = vmatprep.subr.mxu0 0.0
    %3240 = vmatpush1.msra.mxu0 0.0
    %3241 = vmatprep.subr.mxu0 0.0
    %3242 = vmatpush1.msra.mxu0 0.0
    %3243 = vmatprep.subr.mxu0 0.0
    %3244 = vmatpush1.msra.mxu0 0.0
    %3245 = vmatprep.subr.mxu0 0.0
    %3246 = vmatpush1.msra.mxu0 0.0
    %3247 = vmatprep.subr.mxu0 0.0
    %3248 = vmatpush1.msra.mxu0 0.0
    %3249 = vmatprep.subr.mxu0 0.0
    %3250 = vmatpush1.msra.mxu0 0.0
    %3251 = vmatprep.subr.mxu0 0.0
    %3252 = vmatpush1.msra.mxu0 0.0
    %3253 = vmatprep.subr.mxu0 0.0
    %3254 = vmatpush1.msra.mxu0 0.0
    %3255 = vmatprep.subr.mxu0 0.0
    %3256 = vmatpush1.msra.mxu0 0.0
    %3257 = vmatprep.subr.mxu0 0.0
    %3258 = vmatpush1.msra.mxu0 0.0
    %3259 = vmatprep.mubr.f32.mxu0 0.0
    %3260 = vmatmul.mubr.f32.gmra.mrb[0].mxu0 %v3181
    %v3261 = vpop.f32.mrb[0].mxu0
    %v3262 = vadd.f32 0.0, %v3261
    %v3263 = vpop.f32.mrb[0].mxu0
    %v3264 = vadd.f32 0.0, %v3263
    %3265 = vdwg.mxu0
    %3266 = vmatprep.subr.mxu0 0.0
    %3267 = vmatpush1.msra.mxu0 %v802
    %3268 = vmatprep.subr.mxu0 0.0
    %3269 = vmatpush1.msra.mxu0 %v805
    %3270 = vmatprep.subr.mxu0 0.0
    %3271 = vmatpush1.msra.mxu0 %v808
    %3272 = vmatprep.subr.mxu0 0.0
    %3273 = vmatpush1.msra.mxu0 %v811
    %3274 = vmatprep.subr.mxu0 0.0
    %3275 = vmatpush1.msra.mxu0 %v814
    %3276 = vmatprep.subr.mxu0 0.0
    %3277 = vmatpush1.msra.mxu0 %v817
    %3278 = vmatprep.subr.mxu0 0.0
    %3279 = vmatpush1.msra.mxu0 %v820
    %3280 = vmatprep.subr.mxu0 0.0
    %3281 = vmatpush1.msra.mxu0 %v823
    %3282 = vmatprep.subr.mxu0 0.0
    %3283 = vmatpush1.msra.mxu0 %v826
    %3284 = vmatprep.subr.mxu0 0.0
    %3285 = vmatpush1.msra.mxu0 %v829
    %3286 = vmatprep.subr.mxu0 0.0
    %3287 = vmatpush1.msra.mxu0 %v832
    %3288 = vmatprep.subr.mxu0 0.0
    %3289 = vmatpush1.msra.mxu0 %v835
    %3290 = vmatprep.subr.mxu0 0.0
    %3291 = vmatpush1.msra.mxu0 %v838
    %3292 = vmatprep.subr.mxu0 0.0
    %3293 = vmatpush1.msra.mxu0 %v841
    %3294 = vmatprep.subr.mxu0 0.0
    %3295 = vmatpush1.msra.mxu0 %v844
    %3296 = vmatprep.subr.mxu0 0.0
    %3297 = vmatpush1.msra.mxu0 %v847
    %3298 = vmatprep.subr.mxu0 0.0
    %3299 = vmatpush1.msra.mxu0 0.0
    %3300 = vmatprep.subr.mxu0 0.0
    %3301 = vmatpush1.msra.mxu0 0.0
    %3302 = vmatprep.subr.mxu0 0.0
    %3303 = vmatpush1.msra.mxu0 0.0
    %3304 = vmatprep.subr.mxu0 0.0
    %3305 = vmatpush1.msra.mxu0 0.0
    %3306 = vmatprep.subr.mxu0 0.0
    %3307 = vmatpush1.msra.mxu0 0.0
    %3308 = vmatprep.subr.mxu0 0.0
    %3309 = vmatpush1.msra.mxu0 0.0
    %3310 = vmatprep.subr.mxu0 0.0
    %3311 = vmatpush1.msra.mxu0 0.0
    %3312 = vmatprep.subr.mxu0 0.0
    %3313 = vmatpush1.msra.mxu0 0.0
    %3314 = vmatprep.subr.mxu0 0.0
    %3315 = vmatpush1.msra.mxu0 0.0
    %3316 = vmatprep.subr.mxu0 0.0
    %3317 = vmatpush1.msra.mxu0 0.0
    %3318 = vmatprep.subr.mxu0 0.0
    %3319 = vmatpush1.msra.mxu0 0.0
    %3320 = vmatprep.subr.mxu0 0.0
    %3321 = vmatpush1.msra.mxu0 0.0
    %3322 = vmatprep.subr.mxu0 0.0
    %3323 = vmatpush1.msra.mxu0 0.0
    %3324 = vmatprep.subr.mxu0 0.0
    %3325 = vmatpush1.msra.mxu0 0.0
    %3326 = vmatprep.subr.mxu0 0.0
    %3327 = vmatpush1.msra.mxu0 0.0
    %3328 = vmatprep.subr.mxu0 0.0
    %3329 = vmatpush1.msra.mxu0 0.0
    %3330 = vmatprep.mubr.f32.mxu0 0.0
    %3331 = vmatmul.mubr.f32.gmra.mrb[0].mxu0 %v3181
    %v3332 = vpop.f32.mrb[0].mxu0
    %v3333 = vadd.f32 0.0, %v3332
    %v3334 = vpop.f32.mrb[0].mxu0
    %3335 = vdwg.mxu0
    %v3336 = vadd.f32 %v3192, %v3262
    %v3337 = vadd.f32 %v3193, %v3264
    %v3338 = vxor.u32 %v3336, 2147483648
    %v3339 = vxor.u32 %v3337, 2147483648
    %v3340 = vmul.f32 %v3338, 1.442695
    %v3341 = vpow.pop %v3340
    %v3342 = vmul.f32 %v3339, 1.442695
    %v3343 = vpow.pop %v3342
    %v3344 = vadd.f32 %v3341, 1.0
    %v3345 = vadd.f32 %v3343, 1.0
    %v3346 = vrcp.pop %v3344
    %v3347 = vmul.f32 1.0, %v3346
    %v3348 = vrcp.pop %v3345
    %v3349 = vmul.f32 1.0, %v3348
    %v3350 = vadd.f32 %v3333, %v860
    %v3351 = vmul.f32 %v3347, %v3350
    %v3352 = vadd.f32 %v3194, %v3351
    %v3353 = vtanh.pop %v3352
    %v3354 = vsub.f32 %v3181, %v3353
    %v3355 = vmul.f32 %v3349, %v3354
    %v3356 = vadd.f32 %v3353, %v3355
    %v3357 = vsub.f32 %v3356, %v3181
    %v3358 = vmul.f32 %v1393, %v3357
    %v3359 = vadd.f32 %v3181, %v3358
    %v3360 = vld [vmem:[%s1398] sm:$0xff]
    %v3361 = vmul.f32 %v1393, %v3359
    %v3362 = vadd.f32 %v3360, %v3361
    %v3363 = vld [vmem:[#allocation5] sm:$0xff]
    %v3364 = vadd.f32 %v3363, %v3362
    %3365 = vst [vmem:[#allocation5] sm:$0xff] %v3364
    %v3366 = vld [vmem:[#allocation6] sm:$0xff]
    %v3367 = vmax.f32 %v3366, %v3362
    %3368 = vst [vmem:[#allocation6] sm:$0xff] %v3367
    %s3369 = scalar_lea.vmem [#allocation3], 24
    %v3370 = vld [vmem:[%s3369] sm:$0xff]
    %v3371 = vld [vmem:[%s3369 + $0x8] sm:$0xff]
    %v3372 = vld [vmem:[%s3369 + $0x10] sm:$0xff]
    %3373 = vmatprep.subr.mxu0 %v801
    %3374 = vmatpush1.msra.mxu0 %v800
    %3375 = vmatprep.subr.mxu0 %v804
    %3376 = vmatpush1.msra.mxu0 %v803
    %3377 = vmatprep.subr.mxu0 %v807
    %3378 = vmatpush1.msra.mxu0 %v806
    %3379 = vmatprep.subr.mxu0 %v810
    %3380 = vmatpush1.msra.mxu0 %v809
    %3381 = vmatprep.subr.mxu0 %v813
    %3382 = vmatpush1.msra.mxu0 %v812
    %3383 = vmatprep.subr.mxu0 %v816
    %3384 = vmatpush1.msra.mxu0 %v815
    %3385 = vmatprep.subr.mxu0 %v819
    %3386 = vmatpush1.msra.mxu0 %v818
    %3387 = vmatprep.subr.mxu0 %v822
    %3388 = vmatpush1.msra.mxu0 %v821
    %3389 = vmatprep.subr.mxu0 %v825
    %3390 = vmatpush1.msra.mxu0 %v824
    %3391 = vmatprep.subr.mxu0 %v828
    %3392 = vmatpush1.msra.mxu0 %v827
    %3393 = vmatprep.subr.mxu0 %v831
    %3394 = vmatpush1.msra.mxu0 %v830
    %3395 = vmatprep.subr.mxu0 %v834
    %3396 = vmatpush1.msra.mxu0 %v833
    %3397 = vmatprep.subr.mxu0 %v837
    %3398 = vmatpush1.msra.mxu0 %v836
    %3399 = vmatprep.subr.mxu0 %v840
    %3400 = vmatpush1.msra.mxu0 %v839
    %3401 = vmatprep.subr.mxu0 %v843
    %3402 = vmatpush1.msra.mxu0 %v842
    %3403 = vmatprep.subr.mxu0 %v846
    %3404 = vmatpush1.msra.mxu0 %v845
    %3405 = vmatprep.subr.mxu0 0.0
    %3406 = vmatpush1.msra.mxu0 0.0
    %3407 = vmatprep.subr.mxu0 0.0
    %3408 = vmatpush1.msra.mxu0 0.0
    %3409 = vmatprep.subr.mxu0 0.0
    %3410 = vmatpush1.msra.mxu0 0.0
    %3411 = vmatprep.subr.mxu0 0.0
    %3412 = vmatpush1.msra.mxu0 0.0
    %3413 = vmatprep.subr.mxu0 0.0
    %3414 = vmatpush1.msra.mxu0 0.0
    %3415 = vmatprep.subr.mxu0 0.0
    %3416 = vmatpush1.msra.mxu0 0.0
    %3417 = vmatprep.subr.mxu0 0.0
    %3418 = vmatpush1.msra.mxu0 0.0
    %3419 = vmatprep.subr.mxu0 0.0
    %3420 = vmatpush1.msra.mxu0 0.0
    %3421 = vmatprep.subr.mxu0 0.0
    %3422 = vmatpush1.msra.mxu0 0.0
    %3423 = vmatprep.subr.mxu0 0.0
    %3424 = vmatpush1.msra.mxu0 0.0
    %3425 = vmatprep.subr.mxu0 0.0
    %3426 = vmatpush1.msra.mxu0 0.0
    %3427 = vmatprep.subr.mxu0 0.0
    %3428 = vmatpush1.msra.mxu0 0.0
    %3429 = vmatprep.subr.mxu0 0.0
    %3430 = vmatpush1.msra.mxu0 0.0
    %3431 = vmatprep.subr.mxu0 0.0
    %3432 = vmatpush1.msra.mxu0 0.0
    %3433 = vmatprep.subr.mxu0 0.0
    %3434 = vmatpush1.msra.mxu0 0.0
    %3435 = vmatprep.subr.mxu0 0.0
    %3436 = vmatpush1.msra.mxu0 0.0
    %3437 = vmatprep.mubr.f32.mxu0 0.0
    %3438 = vmatmul.mubr.f32.gmra.mrb[0].mxu0 %v3359
    %v3439 = vpop.f32.mrb[0].mxu0
    %v3440 = vadd.f32 0.0, %v3439
    %v3441 = vpop.f32.mrb[0].mxu0
    %v3442 = vadd.f32 0.0, %v3441
    %3443 = vdwg.mxu0
    %3444 = vmatprep.subr.mxu0 0.0
    %3445 = vmatpush1.msra.mxu0 %v802
    %3446 = vmatprep.subr.mxu0 0.0
    %3447 = vmatpush1.msra.mxu0 %v805
    %3448 = vmatprep.subr.mxu0 0.0
    %3449 = vmatpush1.msra.mxu0 %v808
    %3450 = vmatprep.subr.mxu0 0.0
    %3451 = vmatpush1.msra.mxu0 %v811
    %3452 = vmatprep.subr.mxu0 0.0
    %3453 = vmatpush1.msra.mxu0 %v814
    %3454 = vmatprep.subr.mxu0 0.0
    %3455 = vmatpush1.msra.mxu0 %v817
    %3456 = vmatprep.subr.mxu0 0.0
    %3457 = vmatpush1.msra.mxu0 %v820
    %3458 = vmatprep.subr.mxu0 0.0
    %3459 = vmatpush1.msra.mxu0 %v823
    %3460 = vmatprep.subr.mxu0 0.0
    %3461 = vmatpush1.msra.mxu0 %v826
    %3462 = vmatprep.subr.mxu0 0.0
    %3463 = vmatpush1.msra.mxu0 %v829
    %3464 = vmatprep.subr.mxu0 0.0
    %3465 = vmatpush1.msra.mxu0 %v832
    %3466 = vmatprep.subr.mxu0 0.0
    %3467 = vmatpush1.msra.mxu0 %v835
    %3468 = vmatprep.subr.mxu0 0.0
    %3469 = vmatpush1.msra.mxu0 %v838
    %3470 = vmatprep.subr.mxu0 0.0
    %3471 = vmatpush1.msra.mxu0 %v841
    %3472 = vmatprep.subr.mxu0 0.0
    %3473 = vmatpush1.msra.mxu0 %v844
    %3474 = vmatprep.subr.mxu0 0.0
    %3475 = vmatpush1.msra.mxu0 %v847
    %3476 = vmatprep.subr.mxu0 0.0
    %3477 = vmatpush1.msra.mxu0 0.0
    %3478 = vmatprep.subr.mxu0 0.0
    %3479 = vmatpush1.msra.mxu0 0.0
    %3480 = vmatprep.subr.mxu0 0.0
    %3481 = vmatpush1.msra.mxu0 0.0
    %3482 = vmatprep.subr.mxu0 0.0
    %3483 = vmatpush1.msra.mxu0 0.0
    %3484 = vmatprep.subr.mxu0 0.0
    %3485 = vmatpush1.msra.mxu0 0.0
    %3486 = vmatprep.subr.mxu0 0.0
    %3487 = vmatpush1.msra.mxu0 0.0
    %3488 = vmatprep.subr.mxu0 0.0
    %3489 = vmatpush1.msra.mxu0 0.0
    %3490 = vmatprep.subr.mxu0 0.0
    %3491 = vmatpush1.msra.mxu0 0.0
    %3492 = vmatprep.subr.mxu0 0.0
    %3493 = vmatpush1.msra.mxu0 0.0
    %3494 = vmatprep.subr.mxu0 0.0
    %3495 = vmatpush1.msra.mxu0 0.0
    %3496 = vmatprep.subr.mxu0 0.0
    %3497 = vmatpush1.msra.mxu0 0.0
    %3498 = vmatprep.subr.mxu0 0.0
    %3499 = vmatpush1.msra.mxu0 0.0
    %3500 = vmatprep.subr.mxu0 0.0
    %3501 = vmatpush1.msra.mxu0 0.0
    %3502 = vmatprep.subr.mxu0 0.0
    %3503 = vmatpush1.msra.mxu0 0.0
    %3504 = vmatprep.subr.mxu0 0.0
    %3505 = vmatpush1.msra.mxu0 0.0
    %3506 = vmatprep.subr.mxu0 0.0
    %3507 = vmatpush1.msra.mxu0 0.0
    %3508 = vmatprep.mubr.f32.mxu0 0.0
    %3509 = vmatmul.mubr.f32.gmra.mrb[0].mxu0 %v3359
    %v3510 = vpop.f32.mrb[0].mxu0
    %v3511 = vadd.f32 0.0, %v3510
    %v3512 = vpop.f32.mrb[0].mxu0
    %3513 = vdwg.mxu0
    %v3514 = vadd.f32 %v3370, %v3440
    %v3515 = vadd.f32 %v3371, %v3442
    %v3516 = vxor.u32 %v3514, 2147483648
    %v3517 = vxor.u32 %v3515, 2147483648
    %v3518 = vmul.f32 %v3516, 1.442695
    %v3519 = vpow.pop %v3518
    %v3520 = vmul.f32 %v3517, 1.442695
    %v3521 = vpow.pop %v3520
    %v3522 = vadd.f32 %v3519, 1.0
    %v3523 = vadd.f32 %v3521, 1.0
    %v3524 = vrcp.pop %v3522
    %v3525 = vmul.f32 1.0, %v3524
    %v3526 = vrcp.pop %v3523
    %v3527 = vmul.f32 1.0, %v3526
    %v3528 = vadd.f32 %v3511, %v860
    %v3529 = vmul.f32 %v3525, %v3528
    %v3530 = vadd.f32 %v3372, %v3529
    %v3531 = vtanh.pop %v3530
    %v3532 = vsub.f32 %v3359, %v3531
    %v3533 = vmul.f32 %v3527, %v3532
    %v3534 = vadd.f32 %v3531, %v3533
    %v3535 = vsub.f32 %v3534, %v3359
    %v3536 = vmul.f32 %v1213, %v3535
    %v3537 = vadd.f32 %v3359, %v3536
    %v3538 = vld [vmem:[%s1218] sm:$0xff]
    %v3539 = vmul.f32 %v1213, %v3537
    %v3540 = vadd.f32 %v3538, %v3539
    %v3541 = vld [vmem:[#allocation5] sm:$0xff]
    %v3542 = vadd.f32 %v3541, %v3540
    %3543 = vst [vmem:[#allocation5] sm:$0xff] %v3542
    %v3544 = vld [vmem:[#allocation6] sm:$0xff]
    %v3545 = vmax.f32 %v3544, %v3540
    %3546 = vst [vmem:[#allocation6] sm:$0xff] %v3545
    %v3547 = vld [vmem:[#allocation3] sm:$0xff]
    %v3548 = vld [vmem:[#allocation3 + $0x8] sm:$0xff]
    %v3549 = vld [vmem:[#allocation3 + $0x10] sm:$0xff]
    %3550 = vmatprep.subr.mxu0 %v801
    %3551 = vmatpush1.msra.mxu0 %v800
    %3552 = vmatprep.subr.mxu0 %v804
    %3553 = vmatpush1.msra.mxu0 %v803
    %3554 = vmatprep.subr.mxu0 %v807
    %3555 = vmatpush1.msra.mxu0 %v806
    %3556 = vmatprep.subr.mxu0 %v810
    %3557 = vmatpush1.msra.mxu0 %v809
    %3558 = vmatprep.subr.mxu0 %v813
    %3559 = vmatpush1.msra.mxu0 %v812
    %3560 = vmatprep.subr.mxu0 %v816
    %3561 = vmatpush1.msra.mxu0 %v815
    %3562 = vmatprep.subr.mxu0 %v819
    %3563 = vmatpush1.msra.mxu0 %v818
    %3564 = vmatprep.subr.mxu0 %v822
    %3565 = vmatpush1.msra.mxu0 %v821
    %3566 = vmatprep.subr.mxu0 %v825
    %3567 = vmatpush1.msra.mxu0 %v824
    %3568 = vmatprep.subr.mxu0 %v828
    %3569 = vmatpush1.msra.mxu0 %v827
    %3570 = vmatprep.subr.mxu0 %v831
    %3571 = vmatpush1.msra.mxu0 %v830
    %3572 = vmatprep.subr.mxu0 %v834
    %3573 = vmatpush1.msra.mxu0 %v833
    %3574 = vmatprep.subr.mxu0 %v837
    %3575 = vmatpush1.msra.mxu0 %v836
    %3576 = vmatprep.subr.mxu0 %v840
    %3577 = vmatpush1.msra.mxu0 %v839
    %3578 = vmatprep.subr.mxu0 %v843
    %3579 = vmatpush1.msra.mxu0 %v842
    %3580 = vmatprep.subr.mxu0 %v846
    %3581 = vmatpush1.msra.mxu0 %v845
    %3582 = vmatprep.subr.mxu0 0.0
    %3583 = vmatpush1.msra.mxu0 0.0
    %3584 = vmatprep.subr.mxu0 0.0
    %3585 = vmatpush1.msra.mxu0 0.0
    %3586 = vmatprep.subr.mxu0 0.0
    %3587 = vmatpush1.msra.mxu0 0.0
    %3588 = vmatprep.subr.mxu0 0.0
    %3589 = vmatpush1.msra.mxu0 0.0
    %3590 = vmatprep.subr.mxu0 0.0
    %3591 = vmatpush1.msra.mxu0 0.0
    %3592 = vmatprep.subr.mxu0 0.0
    %3593 = vmatpush1.msra.mxu0 0.0
    %3594 = vmatprep.subr.mxu0 0.0
    %3595 = vmatpush1.msra.mxu0 0.0
    %3596 = vmatprep.subr.mxu0 0.0
    %3597 = vmatpush1.msra.mxu0 0.0
    %3598 = vmatprep.subr.mxu0 0.0
    %3599 = vmatpush1.msra.mxu0 0.0
    %3600 = vmatprep.subr.mxu0 0.0
    %3601 = vmatpush1.msra.mxu0 0.0
    %3602 = vmatprep.subr.mxu0 0.0
    %3603 = vmatpush1.msra.mxu0 0.0
    %3604 = vmatprep.subr.mxu0 0.0
    %3605 = vmatpush1.msra.mxu0 0.0
    %3606 = vmatprep.subr.mxu0 0.0
    %3607 = vmatpush1.msra.mxu0 0.0
    %3608 = vmatprep.subr.mxu0 0.0
    %3609 = vmatpush1.msra.mxu0 0.0
    %3610 = vmatprep.subr.mxu0 0.0
    %3611 = vmatpush1.msra.mxu0 0.0
    %3612 = vmatprep.subr.mxu0 0.0
    %3613 = vmatpush1.msra.mxu0 0.0
    %3614 = vmatprep.mubr.f32.mxu0 0.0
    %3615 = vmatmul.mubr.f32.gmra.mrb[0].mxu0 %v3537
    %v3616 = vpop.f32.mrb[0].mxu0
    %v3617 = vadd.f32 0.0, %v3616
    %v3618 = vpop.f32.mrb[0].mxu0
    %v3619 = vadd.f32 0.0, %v3618
    %3620 = vdwg.mxu0
    %3621 = vmatprep.subr.mxu0 0.0
    %3622 = vmatpush1.msra.mxu0 %v802
    %3623 = vmatprep.subr.mxu0 0.0
    %3624 = vmatpush1.msra.mxu0 %v805
    %3625 = vmatprep.subr.mxu0 0.0
    %3626 = vmatpush1.msra.mxu0 %v808
    %3627 = vmatprep.subr.mxu0 0.0
    %3628 = vmatpush1.msra.mxu0 %v811
    %3629 = vmatprep.subr.mxu0 0.0
    %3630 = vmatpush1.msra.mxu0 %v814
    %3631 = vmatprep.subr.mxu0 0.0
    %3632 = vmatpush1.msra.mxu0 %v817
    %3633 = vmatprep.subr.mxu0 0.0
    %3634 = vmatpush1.msra.mxu0 %v820
    %3635 = vmatprep.subr.mxu0 0.0
    %3636 = vmatpush1.msra.mxu0 %v823
    %3637 = vmatprep.subr.mxu0 0.0
    %3638 = vmatpush1.msra.mxu0 %v826
    %3639 = vmatprep.subr.mxu0 0.0
    %3640 = vmatpush1.msra.mxu0 %v829
    %3641 = vmatprep.subr.mxu0 0.0
    %3642 = vmatpush1.msra.mxu0 %v832
    %3643 = vmatprep.subr.mxu0 0.0
    %3644 = vmatpush1.msra.mxu0 %v835
    %3645 = vmatprep.subr.mxu0 0.0
    %3646 = vmatpush1.msra.mxu0 %v838
    %3647 = vmatprep.subr.mxu0 0.0
    %3648 = vmatpush1.msra.mxu0 %v841
    %3649 = vmatprep.subr.mxu0 0.0
    %3650 = vmatpush1.msra.mxu0 %v844
    %3651 = vmatprep.subr.mxu0 0.0
    %3652 = vmatpush1.msra.mxu0 %v847
    %3653 = vmatprep.subr.mxu0 0.0
    %3654 = vmatpush1.msra.mxu0 0.0
    %3655 = vmatprep.subr.mxu0 0.0
    %3656 = vmatpush1.msra.mxu0 0.0
    %3657 = vmatprep.subr.mxu0 0.0
    %3658 = vmatpush1.msra.mxu0 0.0
    %3659 = vmatprep.subr.mxu0 0.0
    %3660 = vmatpush1.msra.mxu0 0.0
    %3661 = vmatprep.subr.mxu0 0.0
    %3662 = vmatpush1.msra.mxu0 0.0
    %3663 = vmatprep.subr.mxu0 0.0
    %3664 = vmatpush1.msra.mxu0 0.0
    %3665 = vmatprep.subr.mxu0 0.0
    %3666 = vmatpush1.msra.mxu0 0.0
    %3667 = vmatprep.subr.mxu0 0.0
    %3668 = vmatpush1.msra.mxu0 0.0
    %3669 = vmatprep.subr.mxu0 0.0
    %3670 = vmatpush1.msra.mxu0 0.0
    %3671 = vmatprep.subr.mxu0 0.0
    %3672 = vmatpush1.msra.mxu0 0.0
    %3673 = vmatprep.subr.mxu0 0.0
    %3674 = vmatpush1.msra.mxu0 0.0
    %3675 = vmatprep.subr.mxu0 0.0
    %3676 = vmatpush1.msra.mxu0 0.0
    %3677 = vmatprep.subr.mxu0 0.0
    %3678 = vmatpush1.msra.mxu0 0.0
    %3679 = vmatprep.subr.mxu0 0.0
    %3680 = vmatpush1.msra.mxu0 0.0
    %3681 = vmatprep.subr.mxu0 0.0
    %3682 = vmatpush1.msra.mxu0 0.0
    %3683 = vmatprep.subr.mxu0 0.0
    %3684 = vmatpush1.msra.mxu0 0.0
    %3685 = vmatprep.mubr.f32.mxu0 0.0
    %3686 = vmatmul.mubr.f32.gmra.mrb[0].mxu0 %v3537
    %v3687 = vpop.f32.mrb[0].mxu0
    %v3688 = vadd.f32 0.0, %v3687
    %v3689 = vpop.f32.mrb[0].mxu0
    %3690 = vdwg.mxu0
    %v3691 = vadd.f32 %v3547, %v3617
    %v3692 = vadd.f32 %v3548, %v3619
    %v3693 = vxor.u32 %v3691, 2147483648
    %v3694 = vxor.u32 %v3692, 2147483648
    %v3695 = vmul.f32 %v3693, 1.442695
    %v3696 = vpow.pop %v3695
    %v3697 = vmul.f32 %v3694, 1.442695
    %v3698 = vpow.pop %v3697
    %v3699 = vadd.f32 %v3696, 1.0
    %v3700 = vadd.f32 %v3698, 1.0
    %v3701 = vrcp.pop %v3699
    %v3702 = vmul.f32 1.0, %v3701
    %v3703 = vrcp.pop %v3700
    %v3704 = vmul.f32 1.0, %v3703
    %v3705 = vadd.f32 %v3688, %v860
    %v3706 = vmul.f32 %v3702, %v3705
    %v3707 = vadd.f32 %v3549, %v3706
    %v3708 = vtanh.pop %v3707
    %v3709 = vsub.f32 %v3537, %v3708
    %v3710 = vmul.f32 %v3704, %v3709
    %v3711 = vadd.f32 %v3708, %v3710
    %v3712 = vsub.f32 %v3711, %v3537
    %v3713 = vmul.f32 %v1034, %v3712
    %v3714 = vadd.f32 %v3537, %v3713
    %v3715 = vld [vmem:[#allocation4] sm:$0xff]
    %v3716 = vmul.f32 %v1034, %v3714
    %v3717 = vadd.f32 %v3715, %v3716
    %v3718 = vld [vmem:[#allocation5] sm:$0xff]
    %v3719 = vadd.f32 %v3718, %v3717
    %3720 = vst [vmem:[#allocation5] sm:$0xff] %v3719
    %v3721 = vld [vmem:[#allocation6] sm:$0xff]
    %v3722 = vmax.f32 %v3721, %v3717
    %3723 = vst [vmem:[#allocation6] sm:$0xff] %v3722
    %v3724 = vadd.f32 %v2296, %v3714
    %v3725 = vld [vmem:[#allocation5] sm:$0xff]
    %v3726 = vld [vmem:[%s2] sm:$0xff]
    %3728 = vset.pattern.permute.xlu0 0
    %3729 = vperm.xlu0 %3728, %v3726
    %v3730 = vpop.permute.xlu0 %3729
    %v3732 = vmul.f32 %v3725, %v3730
    %v3733 = vld [vmem:[#allocation6] sm:$0xff]
    %v3734 = vld [vmem:[%s3] sm:$0xff]
    %v3735 = vld [vmem:[#allocation16] sm:$0xff]
    %v3736 = vld [vmem:[#allocation16 + $0x8] sm:$0xff]
    %v3737 = vld [vmem:[#allocation16 + $0x10] sm:$0xff]
    %v3738 = vld [vmem:[#allocation16 + $0x18] sm:$0xff]
    %v3739 = vld [vmem:[#allocation16 + $0x20] sm:$0xff]
    %v3740 = vld [vmem:[#allocation16 + $0x28] sm:$0xff]
    %v3741 = vld [vmem:[#allocation16 + $0x30] sm:$0xff]
    %v3742 = vld [vmem:[#allocation16 + $0x38] sm:$0xff]
    %v3743 = vld [vmem:[#allocation16 + $0x40] sm:$0xff]
    %v3744 = vld [vmem:[#allocation16 + $0x48] sm:$0xff]
    %v3745 = vld [vmem:[#allocation16 + $0x50] sm:$0xff]
    %v3746 = vld [vmem:[#allocation16 + $0x58] sm:$0xff]
    %v3747 = vld [vmem:[#allocation16 + $0x60] sm:$0xff]
    %v3748 = vld [vmem:[#allocation16 + $0x68] sm:$0xff]
    %v3749 = vld [vmem:[#allocation16 + $0x70] sm:$0xff]
    %v3750 = vld [vmem:[#allocation16 + $0x78] sm:$0xff]
    %v3751 = vld [vmem:[#allocation16 + $0x80] sm:$0xff]
    %v3752 = vld [vmem:[#allocation16 + $0x88] sm:$0xff]
    %v3753 = vld [vmem:[#allocation16 + $0x90] sm:$0xff]
    %v3754 = vld [vmem:[#allocation16 + $0x98] sm:$0xff]
    %v3755 = vld [vmem:[#allocation16 + $0xa0] sm:$0xff]
    %v3756 = vld [vmem:[#allocation16 + $0xa8] sm:$0xff]
    %v3757 = vld [vmem:[#allocation16 + $0xb0] sm:$0xff]
    %v3758 = vld [vmem:[#allocation16 + $0xb8] sm:$0xff]
    %v3759 = vld [vmem:[#allocation16 + $0xc0] sm:$0xff]
    %v3760 = vld [vmem:[#allocation16 + $0xc8] sm:$0xff]
    %v3761 = vld [vmem:[#allocation16 + $0xd0] sm:$0xff]
    %v3762 = vld [vmem:[#allocation16 + $0xd8] sm:$0xff]
    %v3763 = vld [vmem:[#allocation16 + $0xe0] sm:$0xff]
    %v3764 = vld [vmem:[#allocation16 + $0xe8] sm:$0xff]
    %v3765 = vld [vmem:[#allocation16 + $0xf0] sm:$0xff]
    %v3766 = vld [vmem:[#allocation16 + $0xf8] sm:$0xff]
    %v3767 = vld [vmem:[#allocation16 + $0x100] sm:$0xff]
    %v3768 = vld [vmem:[#allocation16 + $0x108] sm:$0xff]
    %v3769 = vld [vmem:[#allocation16 + $0x110] sm:$0xff]
    %v3770 = vld [vmem:[#allocation16 + $0x118] sm:$0xff]
    %v3771 = vld [vmem:[#allocation16 + $0x120] sm:$0xff]
    %v3772 = vld [vmem:[#allocation16 + $0x128] sm:$0xff]
    %v3773 = vld [vmem:[#allocation16 + $0x130] sm:$0xff]
    %v3774 = vld [vmem:[#allocation16 + $0x138] sm:$0xff]
    %v3775 = vld [vmem:[#allocation16 + $0x140] sm:$0xff]
    %v3776 = vld [vmem:[#allocation16 + $0x148] sm:$0xff]
    %v3777 = vld [vmem:[#allocation16 + $0x150] sm:$0xff]
    %v3778 = vld [vmem:[#allocation16 + $0x158] sm:$0xff]
    %v3779 = vld [vmem:[#allocation16 + $0x160] sm:$0xff]
    %v3780 = vld [vmem:[#allocation16 + $0x168] sm:$0xff]
    %v3781 = vld [vmem:[#allocation16 + $0x170] sm:$0xff]
    %v3782 = vld [vmem:[#allocation16 + $0x178] sm:$0xff]
    %v3783 = vld [vmem:[#allocation16 + $0x180] sm:$0xff]
    %v3784 = vld [vmem:[#allocation16 + $0x188] sm:$0xff]
    %v3785 = vld [vmem:[#allocation16 + $0x190] sm:$0xff]
    %v3786 = vld [vmem:[#allocation16 + $0x198] sm:$0xff]
    %v3787 = vld [vmem:[#allocation16 + $0x1a0] sm:$0xff]
    %v3788 = vld [vmem:[#allocation16 + $0x1a8] sm:$0xff]
    %v3789 = vld [vmem:[#allocation16 + $0x1b0] sm:$0xff]
    %v3790 = vld [vmem:[#allocation16 + $0x1b8] sm:$0xff]
    %v3791 = vld [vmem:[#allocation16 + $0x1c0] sm:$0xff]
    %v3792 = vld [vmem:[#allocation16 + $0x1c8] sm:$0xff]
    %v3793 = vld [vmem:[#allocation16 + $0x1d0] sm:$0xff]
    %v3794 = vld [vmem:[#allocation16 + $0x1d8] sm:$0xff]
    %v3795 = vld [vmem:[#allocation16 + $0x1e0] sm:$0xff]
    %v3796 = vld [vmem:[#allocation16 + $0x1e8] sm:$0xff]
    %v3797 = vld [vmem:[#allocation16 + $0x1f0] sm:$0xff]
    %v3798 = vld [vmem:[#allocation16 + $0x1f8] sm:$0xff]
    %v3799 = vld [vmem:[%s13] sm:$0x1]
    %v3801 = vlaneseq
    %v3802 = vshrl.u32 %v3801, 7
    %v3803 = vsub.s32 0, %v3802
    %v3804 = vrot.slane %v3799, %v3803
    %3806 = vmatprep.subr.mxu0 0.0
    %3807 = vmatpush1.msra.mxu0 %v3735
    %3808 = vmatprep.subr.mxu0 0.0
    %3809 = vmatpush1.msra.mxu0 %v3736
    %3810 = vmatprep.subr.mxu0 0.0
    %3811 = vmatpush1.msra.mxu0 %v3737
    %3812 = vmatprep.subr.mxu0 0.0
    %3813 = vmatpush1.msra.mxu0 %v3738
    %3814 = vmatprep.subr.mxu0 0.0
    %3815 = vmatpush1.msra.mxu0 %v3739
    %3816 = vmatprep.subr.mxu0 0.0
    %3817 = vmatpush1.msra.mxu0 %v3740
    %3818 = vmatprep.subr.mxu0 0.0
    %3819 = vmatpush1.msra.mxu0 %v3741
    %3820 = vmatprep.subr.mxu0 0.0
    %3821 = vmatpush1.msra.mxu0 %v3742
    %3822 = vmatprep.subr.mxu0 0.0
    %3823 = vmatpush1.msra.mxu0 %v3743
    %3824 = vmatprep.subr.mxu0 0.0
    %3825 = vmatpush1.msra.mxu0 %v3744
    %3826 = vmatprep.subr.mxu0 0.0
    %3827 = vmatpush1.msra.mxu0 %v3745
    %3828 = vmatprep.subr.mxu0 0.0
    %3829 = vmatpush1.msra.mxu0 %v3746
    %3830 = vmatprep.subr.mxu0 0.0
    %3831 = vmatpush1.msra.mxu0 %v3747
    %3832 = vmatprep.subr.mxu0 0.0
    %3833 = vmatpush1.msra.mxu0 %v3748
    %3834 = vmatprep.subr.mxu0 0.0
    %3835 = vmatpush1.msra.mxu0 %v3749
    %3836 = vmatprep.subr.mxu0 0.0
    %3837 = vmatpush1.msra.mxu0 %v3750
    %3838 = vmatprep.subr.mxu0 0.0
    %3839 = vmatpush1.msra.mxu0 %v3751
    %3840 = vmatprep.subr.mxu0 0.0
    %3841 = vmatpush1.msra.mxu0 %v3752
    %3842 = vmatprep.subr.mxu0 0.0
    %3843 = vmatpush1.msra.mxu0 %v3753
    %3844 = vmatprep.subr.mxu0 0.0
    %3845 = vmatpush1.msra.mxu0 %v3754
    %3846 = vmatprep.subr.mxu0 0.0
    %3847 = vmatpush1.msra.mxu0 %v3755
    %3848 = vmatprep.subr.mxu0 0.0
    %3849 = vmatpush1.msra.mxu0 %v3756
    %3850 = vmatprep.subr.mxu0 0.0
    %3851 = vmatpush1.msra.mxu0 %v3757
    %3852 = vmatprep.subr.mxu0 0.0
    %3853 = vmatpush1.msra.mxu0 %v3758
    %3854 = vmatprep.subr.mxu0 0.0
    %3855 = vmatpush1.msra.mxu0 %v3759
    %3856 = vmatprep.subr.mxu0 0.0
    %3857 = vmatpush1.msra.mxu0 %v3760
    %3858 = vmatprep.subr.mxu0 0.0
    %3859 = vmatpush1.msra.mxu0 %v3761
    %3860 = vmatprep.subr.mxu0 0.0
    %3861 = vmatpush1.msra.mxu0 %v3762
    %3862 = vmatprep.subr.mxu0 0.0
    %3863 = vmatpush1.msra.mxu0 %v3763
    %3864 = vmatprep.subr.mxu0 0.0
    %3865 = vmatpush1.msra.mxu0 %v3764
    %3866 = vmatprep.subr.mxu0 0.0
    %3867 = vmatpush1.msra.mxu0 %v3765
    %3868 = vmatprep.subr.mxu0 0.0
    %3869 = vmatpush1.msra.mxu0 %v3766
    %3870 = vmatprep.mubr.f32.mxu0 %v3733
    %3871 = vmatmul.mubr.f32.gmra.mrb[0].mxu0 %v3724
    %v3872 = vpop.f32.mrb[0].mxu0
    %v3873 = vadd.f32 %v3804, %v3872
    %v3874 = vpop.f32.mrb[0].mxu0
    %3875 = vdwg.mxu0
    %3876 = vmatprep.subr.mxu0 0.0
    %3877 = vmatpush1.msra.mxu0 %v3767
    %3878 = vmatprep.subr.mxu0 0.0
    %3879 = vmatpush1.msra.mxu0 %v3768
    %3880 = vmatprep.subr.mxu0 0.0
    %3881 = vmatpush1.msra.mxu0 %v3769
    %3882 = vmatprep.subr.mxu0 0.0
    %3883 = vmatpush1.msra.mxu0 %v3770
    %3884 = vmatprep.subr.mxu0 0.0
    %3885 = vmatpush1.msra.mxu0 %v3771
    %3886 = vmatprep.subr.mxu0 0.0
    %3887 = vmatpush1.msra.mxu0 %v3772
    %3888 = vmatprep.subr.mxu0 0.0
    %3889 = vmatpush1.msra.mxu0 %v3773
    %3890 = vmatprep.subr.mxu0 0.0
    %3891 = vmatpush1.msra.mxu0 %v3774
    %3892 = vmatprep.subr.mxu0 0.0
    %3893 = vmatpush1.msra.mxu0 %v3775
    %3894 = vmatprep.subr.mxu0 0.0
    %3895 = vmatpush1.msra.mxu0 %v3776
    %3896 = vmatprep.subr.mxu0 0.0
    %3897 = vmatpush1.msra.mxu0 %v3777
    %3898 = vmatprep.subr.mxu0 0.0
    %3899 = vmatpush1.msra.mxu0 %v3778
    %3900 = vmatprep.subr.mxu0 0.0
    %3901 = vmatpush1.msra.mxu0 %v3779
    %3902 = vmatprep.subr.mxu0 0.0
    %3903 = vmatpush1.msra.mxu0 %v3780
    %3904 = vmatprep.subr.mxu0 0.0
    %3905 = vmatpush1.msra.mxu0 %v3781
    %3906 = vmatprep.subr.mxu0 0.0
    %3907 = vmatpush1.msra.mxu0 %v3782
    %3908 = vmatprep.subr.mxu0 0.0
    %3909 = vmatpush1.msra.mxu0 %v3783
    %3910 = vmatprep.subr.mxu0 0.0
    %3911 = vmatpush1.msra.mxu0 %v3784
    %3912 = vmatprep.subr.mxu0 0.0
    %3913 = vmatpush1.msra.mxu0 %v3785
    %3914 = vmatprep.subr.mxu0 0.0
    %3915 = vmatpush1.msra.mxu0 %v3786
    %3916 = vmatprep.subr.mxu0 0.0
    %3917 = vmatpush1.msra.mxu0 %v3787
    %3918 = vmatprep.subr.mxu0 0.0
    %3919 = vmatpush1.msra.mxu0 %v3788
    %3920 = vmatprep.subr.mxu0 0.0
    %3921 = vmatpush1.msra.mxu0 %v3789
    %3922 = vmatprep.subr.mxu0 0.0
    %3923 = vmatpush1.msra.mxu0 %v3790
    %3924 = vmatprep.subr.mxu0 0.0
    %3925 = vmatpush1.msra.mxu0 %v3791
    %3926 = vmatprep.subr.mxu0 0.0
    %3927 = vmatpush1.msra.mxu0 %v3792
    %3928 = vmatprep.subr.mxu0 0.0
    %3929 = vmatpush1.msra.mxu0 %v3793
    %3930 = vmatprep.subr.mxu0 0.0
    %3931 = vmatpush1.msra.mxu0 %v3794
    %3932 = vmatprep.subr.mxu0 0.0
    %3933 = vmatpush1.msra.mxu0 %v3795
    %3934 = vmatprep.subr.mxu0 0.0
    %3935 = vmatpush1.msra.mxu0 %v3796
    %3936 = vmatprep.subr.mxu0 0.0
    %3937 = vmatpush1.msra.mxu0 %v3797
    %3938 = vmatprep.subr.mxu0 0.0
    %3939 = vmatpush1.msra.mxu0 %v3798
    %3940 = vmatprep.mubr.f32.mxu0 %v3734
    %3941 = vmatmul.mubr.f32.gmra.mrb[0].mxu0 %v3732
    %v3942 = vpop.f32.mrb[0].mxu0
    %v3943 = vadd.f32 %v3873, %v3942
    %v3944 = vpop.f32.mrb[0].mxu0
    %3945 = vdwg.mxu0
    %3946 = vst [vmem:[#allocation18] sm:$0xff] %v3943
    // Predicated region
    $region82: #{tpu_custom_call.1} parent=1 // pred_check
      _
    $region83: #{tpu_custom_call.1} parent=1 // pred_check_branch
      %3948 = sbr.rel (0) target = $region85
    $region84: #{tpu_custom_call.1} parent=1 // pred_region
      %s3950 = ssub.s32 128, 128
      %3951 = vsyncadd [#allocation9], %s3950
      %s3953 = sshll.u32 [#allocation18], 4
      %s3954 = int_to_ptr.vmem [resolvable:$true] %s3953
      %3956 = dma.vmem_to_hbm [thread:$0]  %s3954, 128, %s14, [#allocation9]
    $region85: #{tpu_custom_call.1} parent=1 // pred_fallthru
      _
    // Predicated region
    $region86: #{tpu_custom_call.1} parent=1 // pred_check
      _
    $region87: #{tpu_custom_call.1} parent=1 // pred_check_branch
      %3958 = sbr.rel (0) target = $region89
    $region88: #{tpu_custom_call.1} parent=1 // pred_region
      %3959 = dma.done [#allocation9], 128
    $region89: #{tpu_custom_call.1} parent=1 // pred_fallthru
      _
    %3960 = vsyncpa [#allocation8], 1
    %3961 = vsyncpa [#allocation11], 1
    %3962 = vsyncpa [#allocation14], 1
    %3963 = vsyncpa [#allocation17], 1
    %3964 = vsyncpa [#allocation9], 1

</llo_original>
